<compile_context>
chip_gen: v7x
topology: tpu7x:2x2x1
jax: 0.10.0
libtpu: 0.0.40
codegen_flags: <defaults>
</compile_context>

<pallas_src>
import jax
import jax.numpy as jnp
from jax import lax
from jax.experimental import pallas as pl
from jax.experimental.pallas import tpu as pltpu


# ----------------------------------------------------------------------------
# Fused EEGNet forward (Pallas kernel + wrapper)
# ----------------------------------------------------------------------------
def eegnet_forward(x, params):
    """x: (B, Chans, Samples) float32.  Returns ((dn1,dn2,dn3), z) like torch."""
    B, Chans, Samples = x.shape
    f32 = jnp.float32
    eps = 1e-5

    w1_4d = params["w1"]        # (F1, 1, 1, K1)
    wdw_4d = params["wdw"]      # (F1, 1, Chans, 1)
    wsep_4d = params["wsep"]    # (F2, F1, 1, K2)
    w3_4d = params["w3"]        # (F3, F2, 1, K3)
    F1, K1 = w1_4d.shape[0], w1_4d.shape[3]
    F2, K2 = wsep_4d.shape[0], wsep_4d.shape[3]
    F3, K3 = w3_4d.shape[0], w3_4d.shape[3]
    P = params["wp1"].shape[0]  # 256 projection channels

    pad1 = K1 // 2
    Spad = Samples + 2 * pad1
    T1 = Spad - K1 + 1               # conv1 output length
    T1p = T1 // 2                    # after pool1
    padL2 = (K2 - 1) // 2            # torch padding='same' (extra on the right)
    padR2 = (K2 - 1) - padL2
    T2p = T1p // 2                   # after pool2
    padL3 = padR3 = (K3 - 1) // 2    # conv3 padding=(0,1)
    T3p = T2p // 2                   # after pool3

    # ---- fold eval-mode BatchNorm into per-channel affine (outside kernel) --
    def bn_affine(i):
        g, b, m, v = params[f"g{i}"], params[f"b{i}"], params[f"m{i}"], params[f"v{i}"]
        s = g / jnp.sqrt(v + eps)
        return s, b - m * s

    s1, b1 = bn_affine(1)
    s2, b2 = bn_affine(2)
    s3, b3 = bn_affine(3)
    s4, b4 = bn_affine(4)

    wdw = wdw_4d[:, 0, :, 0]                                    # (F1, Chans)
    # depthwise(bn1(conv1)) followed by bn2 == scale12*fused_conv + shift12
    scale12 = (s1 * s2).reshape(1, F1)
    shift12 = (s2 * b1 * jnp.sum(wdw, axis=1) + b2).reshape(1, F1)
    scale3 = s3.reshape(1, F2)
    shift3 = b3.reshape(1, F2)
    scale4 = s4.reshape(1, F3)
    shift4 = b4.reshape(1, F3)

    # ---- time-major weight layouts ------------------------------------------
    wdw_t = wdw.T                                               # (Chans, F1)
    w1_t = w1_4d[:, 0, 0, :].T                                  # (K1, F1)
    wsep_t = jnp.transpose(wsep_4d[:, :, 0, :], (2, 1, 0))      # (K2, F1, F2)
    w3_t = jnp.transpose(w3_4d[:, :, 0, :], (2, 1, 0))          # (K3, F2, F3)
    wp1_t = params["wp1"].T.astype(f32)
    wp2_t = params["wp2"].T.astype(f32)
    wp3_t = params["wp3"].T.astype(f32)
    bp1 = params["bp1"].reshape(1, P)
    bp2 = params["bp2"].reshape(1, P)
    bp3 = params["bp3"].reshape(1, P)
    q_row = params["q"].reshape(1, P)

    # ---- AvgPool (1,2) + zero-padding for the next conv, as matmul matrices -
    def pool_mat(t_in):
        t_out = t_in // 2
        m = jnp.zeros((t_out, t_in), f32)
        i = jnp.arange(t_out)
        m = m.at[i, 2 * i].set(0.5)
        m = m.at[i, 2 * i + 1].set(0.5)
        return m

    p1pad = jnp.pad(pool_mat(T1), ((padL2, padR2), (0, 0)))     # (T1p+K2-1, T1)
    p2pad = jnp.pad(pool_mat(T1p), ((padL3, padR3), (0, 0)))    # (T2p+K3-1, T1p)
    p3 = pool_mat(T2p)                                          # (T3p, T2p)

    # time-major, conv1-pre-padded input: (B, Spad, Chans)
    x_t = jnp.transpose(
        jnp.pad(x.astype(f32), ((0, 0), (0, 0), (pad1, pad1))), (0, 2, 1))

    # ------------------------------------------------------------------------
    def kernel(x_ref, wdw_ref, w1_ref, s12_ref, sh12_ref, p1_ref,
               wsep_ref, s3_ref, sh3_ref, p2_ref,
               w3_ref, s4_ref, sh4_ref, p3_ref,
               wp1_ref, bp1_ref, wp2_ref, bp2_ref, wp3_ref, bp3_ref, q_ref,
               dn1o_ref, dn2o_ref, dn3o_ref, z_ref):
        def elu(v):
            return jnp.where(v > 0, v, jnp.exp(jnp.minimum(v, 0.0)) - 1.0)

        # conv1 (temporal) + bn1 + depthwise (spatial) + bn2 + ELU.
        # Channel contraction first (one MXU matmul), then per-channel taps.
        xs = x_ref[...]                                                 # (Spad, Chans)
        xc = jnp.dot(xs, wdw_ref[...], preferred_element_type=jnp.float32)  # (Spad, F1)
        w1 = w1_ref[...]                                                # (K1, F1)
        acc1 = w1[0:1, :] * xc[0:T1, :]
        for k in range(1, K1):
            acc1 = acc1 + w1[k:k + 1, :] * xc[k:k + T1, :]
        a1 = elu(acc1 * s12_ref[...] + sh12_ref[...])                   # (T1, F1)

        # pool1 (+ zero-pad rows for sep_conv) as a matmul
        xp2 = jnp.dot(p1_ref[...], a1, preferred_element_type=jnp.float32)  # (T1p+K2-1, F1)
        dn1 = xp2[padL2:padL2 + T1p, :]                                 # (T1p, F1)

        # sep_conv + bn3 + ELU
        acc2 = jnp.dot(xp2[0:T1p, :], wsep_ref[0], preferred_element_type=jnp.float32)
        for k in range(1, K2):
            acc2 = acc2 + jnp.dot(xp2[k:k + T1p, :], wsep_ref[k],
                                  preferred_element_type=jnp.float32)
        a2 = elu(acc2 * s3_ref[...] + sh3_ref[...])                     # (T1p, F2)

        # pool2 (+ zero-pad rows for conv3)
        xp3 = jnp.dot(p2_ref[...], a2, preferred_element_type=jnp.float32)  # (T2p+K3-1, F2)
        dn2 = xp3[padL3:padL3 + T2p, :]                                 # (T2p, F2)

        # conv3 + bn4 + ELU
        acc3 = jnp.dot(xp3[0:T2p, :], w3_ref[0], preferred_element_type=jnp.float32)
        for k in range(1, K3):
            acc3 = acc3 + jnp.dot(xp3[k:k + T2p, :], w3_ref[k],
                                  preferred_element_type=jnp.float32)
        a3 = elu(acc3 * s4_ref[...] + sh4_ref[...])                     # (T2p, F3)

        # pool3
        dn3 = jnp.dot(p3_ref[...], a3, preferred_element_type=jnp.float32)  # (T3p, F3)

        # 1x1 projections to 256 channels (lane-dense stores)
        d1o = jnp.dot(dn1, wp1_ref[...], preferred_element_type=jnp.float32) + bp1_ref[...]
        d2o = jnp.dot(dn2, wp2_ref[...], preferred_element_type=jnp.float32) + bp2_ref[...]
        d3o = jnp.dot(dn3, wp3_ref[...], preferred_element_type=jnp.float32) + bp3_ref[...]
        dn1o_ref[...] = d1o
        dn2o_ref[...] = d2o
        dn3o_ref[...] = d3o

        # attention pool over time (softmax along the sublane axis)
        scores = jnp.sum(d3o * q_ref[...], axis=1, keepdims=True)       # (T3p, 1)
        m = jnp.max(scores, axis=0, keepdims=True)
        e = jnp.exp(scores - m)
        wts = e / jnp.sum(e, axis=0, keepdims=True)                     # (T3p, 1)
        z_ref[...] = jnp.sum(d3o * wts, axis=0, keepdims=True)          # (1, P)

    # ------------------------------------------------------------------------
    weights = [wdw_t, w1_t, scale12, shift12, p1pad,
               wsep_t, scale3, shift3, p2pad,
               w3_t, scale4, shift4, p3,
               wp1_t, bp1, wp2_t, bp2, wp3_t, bp3, q_row]

    def w_spec(a):
        if a.ndim == 2:
            return pl.BlockSpec(a.shape, lambda b: (0, 0))
        return pl.BlockSpec(a.shape, lambda b: (0, 0, 0))

    in_specs = [pl.BlockSpec((None, Spad, Chans), lambda b: (b, 0, 0))]
    in_specs += [w_spec(a) for a in weights]

    out_specs = (
        pl.BlockSpec((None, T1p, P), lambda b: (b, 0, 0)),
        pl.BlockSpec((None, T2p, P), lambda b: (b, 0, 0)),
        pl.BlockSpec((None, T3p, P), lambda b: (b, 0, 0)),
        pl.BlockSpec((None, 1, P), lambda b: (b, 0, 0)),
    )
    out_shape = (
        jax.ShapeDtypeStruct((B, T1p, P), f32),
        jax.ShapeDtypeStruct((B, T2p, P), f32),
        jax.ShapeDtypeStruct((B, T3p, P), f32),
        jax.ShapeDtypeStruct((B, 1, P), f32),
    )

    dn1_t, dn2_t, dn3_t, z3 = pl.pallas_call(
        kernel,
        out_shape=out_shape,
        grid=(B,),
        in_specs=in_specs,
        out_specs=out_specs,
        compiler_params=pltpu.CompilerParams(dimension_semantics=("parallel",)),
    )(x_t, *weights)

    down = (jnp.transpose(dn1_t, (0, 2, 1)),
            jnp.transpose(dn2_t, (0, 2, 1)),
            jnp.transpose(dn3_t, (0, 2, 1)))
    return down, z3[:, 0, :]


# ----------------------------------------------------------------------------
# Pure-JAX reference mirroring the PyTorch forward (eval mode)
# ----------------------------------------------------------------------------
def eegnet_ref(x, params):
    eps = 1e-5
    hi = lax.Precision.HIGHEST
    dn = ("NCHW", "OIHW", "NCHW")
    w1, wdw, wsep, w3 = params["w1"], params["wdw"], params["wsep"], params["w3"]
    F1, K1 = w1.shape[0], w1.shape[3]
    K2 = wsep.shape[3]

    def bn(y, i):
        g, b, m, v = params[f"g{i}"], params[f"b{i}"], params[f"m{i}"], params[f"v{i}"]
        s = g / jnp.sqrt(v + eps)
        return (y - m[None, :, None, None]) * s[None, :, None, None] + b[None, :, None, None]

    def elu(v):
        return jnp.where(v > 0, v, jnp.expm1(v))

    def pool2(y):
        t = y.shape[-1] // 2
        return 0.5 * (y[..., 0:2 * t:2] + y[..., 1:2 * t:2])

    x4 = x[:, None, :, :].astype(jnp.float32)
    y = lax.conv_general_dilated(x4, w1, (1, 1), ((0, 0), (K1 // 2, K1 // 2)),
                                 dimension_numbers=dn, precision=hi)
    y = bn(y, 1)
    y = lax.conv_general_dilated(y, wdw, (1, 1), ((0, 0), (0, 0)),
                                 dimension_numbers=dn, feature_group_count=F1,
                                 precision=hi)
    y = elu(bn(y, 2))
    dn1 = pool2(y)
    pl2 = (K2 - 1) // 2
    y = lax.conv_general_dilated(dn1, wsep, (1, 1), ((0, 0), (pl2, K2 - 1 - pl2)),
                                 dimension_numbers=dn, precision=hi)
    y = elu(bn(y, 3))
    dn2 = pool2(y)
    y = lax.conv_general_dilated(dn2, w3, (1, 1), ((0, 0), (1, 1)),
                                 dimension_numbers=dn, precision=hi)
    y = elu(bn(y, 4))
    dn3 = pool2(y)

    d1, d2, d3 = dn1[:, :, 0, :], dn2[:, :, 0, :], dn3[:, :, 0, :]
    o1 = jnp.einsum("of,bft->bot", params["wp1"], d1, precision=hi) + params["bp1"][None, :, None]
    o2 = jnp.einsum("of,bft->bot", params["wp2"], d2, precision=hi) + params["bp2"][None, :, None]
    o3 = jnp.einsum("of,bft->bot", params["wp3"], d3, precision=hi) + params["bp3"][None, :, None]
    s = jnp.einsum("bct,c->bt", o3, params["q"], precision=hi)
    w = jax.nn.softmax(s, axis=-1)
    z = jnp.sum(o3 * w[:, None, :], axis=-1)
    return (o1, o2, o3), z


# ----------------------------------------------------------------------------
# Deterministic parameter construction
# ----------------------------------------------------------------------------
def init_params(key, Chans, kernLength, F1, F2, F3, K2=16, K3=3, P=256):
    kit = iter(jax.random.split(key, 32))

    def nrm(shape, s=0.2):
        return s * jax.random.normal(next(kit), shape, jnp.float32)

    def uni(shape, lo, hi_):
        return jax.random.uniform(next(kit), shape, jnp.float32, lo, hi_)

    p = dict(
        w1=nrm((F1, 1, 1, kernLength)),
        wdw=nrm((F1, 1, Chans, 1)),
        wsep=nrm((F2, F1, 1, K2)),
        w3=nrm((F3, F2, 1, K3)),
        wp1=nrm((P, F1)), bp1=nrm((P,), 0.1),
        wp2=nrm((P, F2)), bp2=nrm((P,), 0.1),
        wp3=nrm((P, F3)), bp3=nrm((P,), 0.1),
        q=nrm((P,), 0.5),
    )
    for i, c in ((1, F1), (2, F1), (3, F2), (4, F3)):
        p[f"g{i}"] = uni((c,), 0.9, 1.1)
        p[f"b{i}"] = nrm((c,), 0.1)
        p[f"m{i}"] = nrm((c,), 0.1)
        p[f"v{i}"] = uni((c,), 0.8, 1.2)
    # Round leaves to bf16-representable values so any bf16 MXU pass is exact
    # and kernel/reference stay within tight tolerance.
    return {k: v.astype(jnp.bfloat16).astype(jnp.float32) for k, v in p.items()}


# ----------------------------------------------------------------------------
if __name__ == "__main__":
    key = jax.random.PRNGKey(0)
    B, Chans, Samples = 2, 8, 64
    kernLength, F1, F2, F3 = 16, 8, 16, 32

    kx, kp = jax.random.split(key)
    x = jax.random.normal(kx, (B, Chans, Samples), jnp.float32)
    x = x.astype(jnp.bfloat16).astype(jnp.float32)
    params = init_params(kp, Chans, kernLength, F1, F2, F3)

    (d1, d2, d3), z = eegnet_forward(x, params)
    jax.block_until_ready((d1, d2, d3, z))

    (r1, r2, r3), rz = eegnet_ref(x, params)

    assert d1.shape == r1.shape == (B, 256, 32), (d1.shape, r1.shape)
    assert d2.shape == r2.shape == (B, 256, 16), (d2.shape, r2.shape)
    assert d3.shape == r3.shape == (B, 256, 8), (d3.shape, r3.shape)
    assert z.shape == rz.shape == (B, 256), (z.shape, rz.shape)
    for got, ref, name in ((d1, r1, "dn1_out"), (d2, r2, "dn2_out"),
                           (d3, r3, "dn3_out"), (z, rz, "z")):
        ok = jnp.allclose(got, ref, atol=5e-3, rtol=5e-3)
        assert ok, (name, float(jnp.max(jnp.abs(got - ref))))

    print("KERNEL_OK")
</pallas_src>

<mosaic_0001>
module attributes {stable_mosaic.version = 11 : i64} {
  func.func @kernel(%arg0: i32, %arg1: memref<1x80x8xf32, #tpu.memory_space<vmem>>, %arg2: memref<8x8xf32, #tpu.memory_space<vmem>>, %arg3: memref<16x8xf32, #tpu.memory_space<vmem>>, %arg4: memref<1x8xf32, #tpu.memory_space<vmem>>, %arg5: memref<1x8xf32, #tpu.memory_space<vmem>>, %arg6: memref<47x65xf32, #tpu.memory_space<vmem>>, %arg7: memref<16x8x16xf32, #tpu.memory_space<vmem>>, %arg8: memref<1x16xf32, #tpu.memory_space<vmem>>, %arg9: memref<1x16xf32, #tpu.memory_space<vmem>>, %arg10: memref<18x32xf32, #tpu.memory_space<vmem>>, %arg11: memref<3x16x32xf32, #tpu.memory_space<vmem>>, %arg12: memref<1x32xf32, #tpu.memory_space<vmem>>, %arg13: memref<1x32xf32, #tpu.memory_space<vmem>>, %arg14: memref<8x16xf32, #tpu.memory_space<vmem>>, %arg15: memref<8x256xf32, #tpu.memory_space<vmem>>, %arg16: memref<1x256xf32, #tpu.memory_space<vmem>>, %arg17: memref<16x256xf32, #tpu.memory_space<vmem>>, %arg18: memref<1x256xf32, #tpu.memory_space<vmem>>, %arg19: memref<32x256xf32, #tpu.memory_space<vmem>>, %arg20: memref<1x256xf32, #tpu.memory_space<vmem>>, %arg21: memref<1x256xf32, #tpu.memory_space<vmem>>, %arg22: memref<1x32x256xf32, #tpu.memory_space<vmem>>, %arg23: memref<1x16x256xf32, #tpu.memory_space<vmem>>, %arg24: memref<1x8x256xf32, #tpu.memory_space<vmem>>, %arg25: memref<1x1x256xf32, #tpu.memory_space<vmem>>) attributes {dimension_semantics = [#tpu.dimension_semantics<parallel>], iteration_bounds = array<i64: 2>, scalar_prefetch = 0 : i64, scratch_operands = 0 : i64, tpu.core_type = #tpu.core_type<tc>, window_params = [{transform_indices = @transform_0, window_bounds = array<i64: 1, 80, 8>}, {pipeline_mode = #tpu.pipeline_mode<synchronous>, transform_indices = @transform_1, window_bounds = array<i64: 8, 8>}, {pipeline_mode = #tpu.pipeline_mode<synchronous>, transform_indices = @transform_2, window_bounds = array<i64: 16, 8>}, {pipeline_mode = #tpu.pipeline_mode<synchronous>, transform_indices = @transform_3, window_bounds = array<i64: 1, 8>}, {pipeline_mode = #tpu.pipeline_mode<synchronous>, transform_indices = @transform_4, window_bounds = array<i64: 1, 8>}, {pipeline_mode = #tpu.pipeline_mode<synchronous>, transform_indices = @transform_5, window_bounds = array<i64: 47, 65>}, {pipeline_mode = #tpu.pipeline_mode<synchronous>, transform_indices = @transform_6, window_bounds = array<i64: 16, 8, 16>}, {pipeline_mode = #tpu.pipeline_mode<synchronous>, transform_indices = @transform_7, window_bounds = array<i64: 1, 16>}, {pipeline_mode = #tpu.pipeline_mode<synchronous>, transform_indices = @transform_8, window_bounds = array<i64: 1, 16>}, {pipeline_mode = #tpu.pipeline_mode<synchronous>, transform_indices = @transform_9, window_bounds = array<i64: 18, 32>}, {pipeline_mode = #tpu.pipeline_mode<synchronous>, transform_indices = @transform_10, window_bounds = array<i64: 3, 16, 32>}, {pipeline_mode = #tpu.pipeline_mode<synchronous>, transform_indices = @transform_11, window_bounds = array<i64: 1, 32>}, {pipeline_mode = #tpu.pipeline_mode<synchronous>, transform_indices = @transform_12, window_bounds = array<i64: 1, 32>}, {pipeline_mode = #tpu.pipeline_mode<synchronous>, transform_indices = @transform_13, window_bounds = array<i64: 8, 16>}, {pipeline_mode = #tpu.pipeline_mode<synchronous>, transform_indices = @transform_14, window_bounds = array<i64: 8, 256>}, {pipeline_mode = #tpu.pipeline_mode<synchronous>, transform_indices = @transform_15, window_bounds = array<i64: 1, 256>}, {pipeline_mode = #tpu.pipeline_mode<synchronous>, transform_indices = @transform_16, window_bounds = array<i64: 16, 256>}, {pipeline_mode = #tpu.pipeline_mode<synchronous>, transform_indices = @transform_17, window_bounds = array<i64: 1, 256>}, {pipeline_mode = #tpu.pipeline_mode<synchronous>, transform_indices = @transform_18, window_bounds = array<i64: 32, 256>}, {pipeline_mode = #tpu.pipeline_mode<synchronous>, transform_indices = @transform_19, window_bounds = array<i64: 1, 256>}, {pipeline_mode = #tpu.pipeline_mode<synchronous>, transform_indices = @transform_20, window_bounds = array<i64: 1, 256>}, {transform_indices = @transform_21, window_bounds = array<i64: 1, 32, 256>}, {transform_indices = @transform_22, window_bounds = array<i64: 1, 16, 256>}, {transform_indices = @transform_23, window_bounds = array<i64: 1, 8, 256>}, {transform_indices = @transform_24, window_bounds = array<i64: 1, 1, 256>}]} {
    %c0 = arith.constant 0 : index
    %c0_0 = arith.constant 0 : index
    %c0_1 = arith.constant 0 : index
    %0 = vector.load %arg1[%c0, %c0_0, %c0_1] : memref<1x80x8xf32, #tpu.memory_space<vmem>>, vector<1x80x8xf32>
    %1 = vector.shape_cast %0 : vector<1x80x8xf32> to vector<80x8xf32>
    %c0_2 = arith.constant 0 : index
    %c0_3 = arith.constant 0 : index
    %2 = vector.load %arg2[%c0_2, %c0_3] : memref<8x8xf32, #tpu.memory_space<vmem>>, vector<8x8xf32>
    %cst = arith.constant dense<0.000000e+00> : vector<80x8xf32>
    %3 = tpu.matmul %1, %2, %cst {dimension_numbers = #tpu.dot_dimension_numbers<[1], [0], [0], [1], [0, 0, 1, 1], [], []>} : vector<80x8xf32>, vector<8x8xf32>, vector<80x8xf32> -> vector<80x8xf32>
    %c0_4 = arith.constant 0 : index
    %c0_5 = arith.constant 0 : index
    %4 = vector.load %arg3[%c0_4, %c0_5] : memref<16x8xf32, #tpu.memory_space<vmem>>, vector<16x8xf32>
    %5 = vector.extract_strided_slice %4 {offsets = [0, 0], sizes = [1, 8], strides = [1, 1]} : vector<16x8xf32> to vector<1x8xf32>
    %6 = vector.extract_strided_slice %3 {offsets = [0, 0], sizes = [65, 8], strides = [1, 1]} : vector<80x8xf32> to vector<65x8xf32>
    %7 = vector.broadcast %5 : vector<1x8xf32> to vector<65x8xf32>
    %8 = arith.mulf %7, %6 : vector<65x8xf32>
    %9 = vector.extract_strided_slice %4 {offsets = [1, 0], sizes = [1, 8], strides = [1, 1]} : vector<16x8xf32> to vector<1x8xf32>
    %10 = vector.extract_strided_slice %3 {offsets = [1, 0], sizes = [65, 8], strides = [1, 1]} : vector<80x8xf32> to vector<65x8xf32>
    %11 = vector.broadcast %9 : vector<1x8xf32> to vector<65x8xf32>
    %12 = arith.mulf %11, %10 : vector<65x8xf32>
    %13 = arith.addf %8, %12 : vector<65x8xf32>
    %14 = vector.extract_strided_slice %4 {offsets = [2, 0], sizes = [1, 8], strides = [1, 1]} : vector<16x8xf32> to vector<1x8xf32>
    %15 = vector.extract_strided_slice %3 {offsets = [2, 0], sizes = [65, 8], strides = [1, 1]} : vector<80x8xf32> to vector<65x8xf32>
    %16 = vector.broadcast %14 : vector<1x8xf32> to vector<65x8xf32>
    %17 = arith.mulf %16, %15 : vector<65x8xf32>
    %18 = arith.addf %13, %17 : vector<65x8xf32>
    %19 = vector.extract_strided_slice %4 {offsets = [3, 0], sizes = [1, 8], strides = [1, 1]} : vector<16x8xf32> to vector<1x8xf32>
    %20 = vector.extract_strided_slice %3 {offsets = [3, 0], sizes = [65, 8], strides = [1, 1]} : vector<80x8xf32> to vector<65x8xf32>
    %21 = vector.broadcast %19 : vector<1x8xf32> to vector<65x8xf32>
    %22 = arith.mulf %21, %20 : vector<65x8xf32>
    %23 = arith.addf %18, %22 : vector<65x8xf32>
    %24 = vector.extract_strided_slice %4 {offsets = [4, 0], sizes = [1, 8], strides = [1, 1]} : vector<16x8xf32> to vector<1x8xf32>
    %25 = vector.extract_strided_slice %3 {offsets = [4, 0], sizes = [65, 8], strides = [1, 1]} : vector<80x8xf32> to vector<65x8xf32>
    %26 = vector.broadcast %24 : vector<1x8xf32> to vector<65x8xf32>
    %27 = arith.mulf %26, %25 : vector<65x8xf32>
    %28 = arith.addf %23, %27 : vector<65x8xf32>
    %29 = vector.extract_strided_slice %4 {offsets = [5, 0], sizes = [1, 8], strides = [1, 1]} : vector<16x8xf32> to vector<1x8xf32>
    %30 = vector.extract_strided_slice %3 {offsets = [5, 0], sizes = [65, 8], strides = [1, 1]} : vector<80x8xf32> to vector<65x8xf32>
    %31 = vector.broadcast %29 : vector<1x8xf32> to vector<65x8xf32>
    %32 = arith.mulf %31, %30 : vector<65x8xf32>
    %33 = arith.addf %28, %32 : vector<65x8xf32>
    %34 = vector.extract_strided_slice %4 {offsets = [6, 0], sizes = [1, 8], strides = [1, 1]} : vector<16x8xf32> to vector<1x8xf32>
    %35 = vector.extract_strided_slice %3 {offsets = [6, 0], sizes = [65, 8], strides = [1, 1]} : vector<80x8xf32> to vector<65x8xf32>
    %36 = vector.broadcast %34 : vector<1x8xf32> to vector<65x8xf32>
    %37 = arith.mulf %36, %35 : vector<65x8xf32>
    %38 = arith.addf %33, %37 : vector<65x8xf32>
    %39 = vector.extract_strided_slice %4 {offsets = [7, 0], sizes = [1, 8], strides = [1, 1]} : vector<16x8xf32> to vector<1x8xf32>
    %40 = vector.extract_strided_slice %3 {offsets = [7, 0], sizes = [65, 8], strides = [1, 1]} : vector<80x8xf32> to vector<65x8xf32>
    %41 = vector.broadcast %39 : vector<1x8xf32> to vector<65x8xf32>
    %42 = arith.mulf %41, %40 : vector<65x8xf32>
    %43 = arith.addf %38, %42 : vector<65x8xf32>
    %44 = vector.extract_strided_slice %4 {offsets = [8, 0], sizes = [1, 8], strides = [1, 1]} : vector<16x8xf32> to vector<1x8xf32>
    %45 = vector.extract_strided_slice %3 {offsets = [8, 0], sizes = [65, 8], strides = [1, 1]} : vector<80x8xf32> to vector<65x8xf32>
    %46 = vector.broadcast %44 : vector<1x8xf32> to vector<65x8xf32>
    %47 = arith.mulf %46, %45 : vector<65x8xf32>
    %48 = arith.addf %43, %47 : vector<65x8xf32>
    %49 = vector.extract_strided_slice %4 {offsets = [9, 0], sizes = [1, 8], strides = [1, 1]} : vector<16x8xf32> to vector<1x8xf32>
    %50 = vector.extract_strided_slice %3 {offsets = [9, 0], sizes = [65, 8], strides = [1, 1]} : vector<80x8xf32> to vector<65x8xf32>
    %51 = vector.broadcast %49 : vector<1x8xf32> to vector<65x8xf32>
    %52 = arith.mulf %51, %50 : vector<65x8xf32>
    %53 = arith.addf %48, %52 : vector<65x8xf32>
    %54 = vector.extract_strided_slice %4 {offsets = [10, 0], sizes = [1, 8], strides = [1, 1]} : vector<16x8xf32> to vector<1x8xf32>
    %55 = vector.extract_strided_slice %3 {offsets = [10, 0], sizes = [65, 8], strides = [1, 1]} : vector<80x8xf32> to vector<65x8xf32>
    %56 = vector.broadcast %54 : vector<1x8xf32> to vector<65x8xf32>
    %57 = arith.mulf %56, %55 : vector<65x8xf32>
    %58 = arith.addf %53, %57 : vector<65x8xf32>
    %59 = vector.extract_strided_slice %4 {offsets = [11, 0], sizes = [1, 8], strides = [1, 1]} : vector<16x8xf32> to vector<1x8xf32>
    %60 = vector.extract_strided_slice %3 {offsets = [11, 0], sizes = [65, 8], strides = [1, 1]} : vector<80x8xf32> to vector<65x8xf32>
    %61 = vector.broadcast %59 : vector<1x8xf32> to vector<65x8xf32>
    %62 = arith.mulf %61, %60 : vector<65x8xf32>
    %63 = arith.addf %58, %62 : vector<65x8xf32>
    %64 = vector.extract_strided_slice %4 {offsets = [12, 0], sizes = [1, 8], strides = [1, 1]} : vector<16x8xf32> to vector<1x8xf32>
    %65 = vector.extract_strided_slice %3 {offsets = [12, 0], sizes = [65, 8], strides = [1, 1]} : vector<80x8xf32> to vector<65x8xf32>
    %66 = vector.broadcast %64 : vector<1x8xf32> to vector<65x8xf32>
    %67 = arith.mulf %66, %65 : vector<65x8xf32>
    %68 = arith.addf %63, %67 : vector<65x8xf32>
    %69 = vector.extract_strided_slice %4 {offsets = [13, 0], sizes = [1, 8], strides = [1, 1]} : vector<16x8xf32> to vector<1x8xf32>
    %70 = vector.extract_strided_slice %3 {offsets = [13, 0], sizes = [65, 8], strides = [1, 1]} : vector<80x8xf32> to vector<65x8xf32>
    %71 = vector.broadcast %69 : vector<1x8xf32> to vector<65x8xf32>
    %72 = arith.mulf %71, %70 : vector<65x8xf32>
    %73 = arith.addf %68, %72 : vector<65x8xf32>
    %74 = vector.extract_strided_slice %4 {offsets = [14, 0], sizes = [1, 8], strides = [1, 1]} : vector<16x8xf32> to vector<1x8xf32>
    %75 = vector.extract_strided_slice %3 {offsets = [14, 0], sizes = [65, 8], strides = [1, 1]} : vector<80x8xf32> to vector<65x8xf32>
    %76 = vector.broadcast %74 : vector<1x8xf32> to vector<65x8xf32>
    %77 = arith.mulf %76, %75 : vector<65x8xf32>
    %78 = arith.addf %73, %77 : vector<65x8xf32>
    %79 = vector.extract_strided_slice %4 {offsets = [15, 0], sizes = [1, 8], strides = [1, 1]} : vector<16x8xf32> to vector<1x8xf32>
    %80 = vector.extract_strided_slice %3 {offsets = [15, 0], sizes = [65, 8], strides = [1, 1]} : vector<80x8xf32> to vector<65x8xf32>
    %81 = vector.broadcast %79 : vector<1x8xf32> to vector<65x8xf32>
    %82 = arith.mulf %81, %80 : vector<65x8xf32>
    %83 = arith.addf %78, %82 : vector<65x8xf32>
    %c0_6 = arith.constant 0 : index
    %c0_7 = arith.constant 0 : index
    %84 = vector.load %arg4[%c0_6, %c0_7] : memref<1x8xf32, #tpu.memory_space<vmem>>, vector<1x8xf32>
    %85 = vector.broadcast %84 : vector<1x8xf32> to vector<65x8xf32>
    %86 = arith.mulf %83, %85 : vector<65x8xf32>
    %c0_8 = arith.constant 0 : index
    %c0_9 = arith.constant 0 : index
    %87 = vector.load %arg5[%c0_8, %c0_9] : memref<1x8xf32, #tpu.memory_space<vmem>>, vector<1x8xf32>
    %88 = vector.broadcast %87 : vector<1x8xf32> to vector<65x8xf32>
    %89 = arith.addf %86, %88 : vector<65x8xf32>
    %cst_10 = arith.constant 0.000000e+00 : f32
    %90 = vector.broadcast %cst_10 : f32 to vector<65x8xf32>
    %91 = arith.cmpf ogt, %89, %90 : vector<65x8xf32>
    %cst_11 = arith.constant 0.000000e+00 : f32
    %92 = vector.broadcast %cst_11 : f32 to vector<65x8xf32>
    %93 = arith.minimumf %89, %92 : vector<65x8xf32>
    %94 = math.exp %93 : vector<65x8xf32>
    %cst_12 = arith.constant 1.000000e+00 : f32
    %95 = vector.broadcast %cst_12 : f32 to vector<65x8xf32>
    %96 = arith.subf %94, %95 : vector<65x8xf32>
    %97 = arith.select %91, %89, %96 : vector<65x8xi1>, vector<65x8xf32>
    %c0_13 = arith.constant 0 : index
    %c0_14 = arith.constant 0 : index
    %98 = vector.load %arg6[%c0_13, %c0_14] : memref<47x65xf32, #tpu.memory_space<vmem>>, vector<47x65xf32>
    %cst_15 = arith.constant dense<0.000000e+00> : vector<47x8xf32>
    %99 = tpu.matmul %98, %97, %cst_15 {dimension_numbers = #tpu.dot_dimension_numbers<[1], [0], [0], [1], [0, 0, 1, 1], [], []>} : vector<47x65xf32>, vector<65x8xf32>, vector<47x8xf32> -> vector<47x8xf32>
    %100 = vector.extract_strided_slice %99 {offsets = [7, 0], sizes = [32, 8], strides = [1, 1]} : vector<47x8xf32> to vector<32x8xf32>
    %101 = vector.extract_strided_slice %99 {offsets = [0, 0], sizes = [32, 8], strides = [1, 1]} : vector<47x8xf32> to vector<32x8xf32>
    %c0_16 = arith.constant 0 : index
    %c0_17 = arith.constant 0 : index
    %c0_18 = arith.constant 0 : index
    %102 = vector.load %arg7[%c0_16, %c0_17, %c0_18] : memref<16x8x16xf32, #tpu.memory_space<vmem>>, vector<1x8x16xf32>
    %103 = vector.shape_cast %102 : vector<1x8x16xf32> to vector<8x16xf32>
    %cst_19 = arith.constant dense<0.000000e+00> : vector<32x16xf32>
    %104 = tpu.matmul %101, %103, %cst_19 {dimension_numbers = #tpu.dot_dimension_numbers<[1], [0], [0], [1], [0, 0, 1, 1], [], []>} : vector<32x8xf32>, vector<8x16xf32>, vector<32x16xf32> -> vector<32x16xf32>
    %105 = vector.extract_strided_slice %99 {offsets = [1, 0], sizes = [32, 8], strides = [1, 1]} : vector<47x8xf32> to vector<32x8xf32>
    %c1 = arith.constant 1 : index
    %c0_20 = arith.constant 0 : index
    %c0_21 = arith.constant 0 : index
    %106 = vector.load %arg7[%c1, %c0_20, %c0_21] : memref<16x8x16xf32, #tpu.memory_space<vmem>>, vector<1x8x16xf32>
    %107 = vector.shape_cast %106 : vector<1x8x16xf32> to vector<8x16xf32>
    %cst_22 = arith.constant dense<0.000000e+00> : vector<32x16xf32>
    %108 = tpu.matmul %105, %107, %cst_22 {dimension_numbers = #tpu.dot_dimension_numbers<[1], [0], [0], [1], [0, 0, 1, 1], [], []>} : vector<32x8xf32>, vector<8x16xf32>, vector<32x16xf32> -> vector<32x16xf32>
    %109 = arith.addf %104, %108 : vector<32x16xf32>
    %110 = vector.extract_strided_slice %99 {offsets = [2, 0], sizes = [32, 8], strides = [1, 1]} : vector<47x8xf32> to vector<32x8xf32>
    %c2 = arith.constant 2 : index
    %c0_23 = arith.constant 0 : index
    %c0_24 = arith.constant 0 : index
    %111 = vector.load %arg7[%c2, %c0_23, %c0_24] : memref<16x8x16xf32, #tpu.memory_space<vmem>>, vector<1x8x16xf32>
    %112 = vector.shape_cast %111 : vector<1x8x16xf32> to vector<8x16xf32>
    %cst_25 = arith.constant dense<0.000000e+00> : vector<32x16xf32>
    %113 = tpu.matmul %110, %112, %cst_25 {dimension_numbers = #tpu.dot_dimension_numbers<[1], [0], [0], [1], [0, 0, 1, 1], [], []>} : vector<32x8xf32>, vector<8x16xf32>, vector<32x16xf32> -> vector<32x16xf32>
    %114 = arith.addf %109, %113 : vector<32x16xf32>
    %115 = vector.extract_strided_slice %99 {offsets = [3, 0], sizes = [32, 8], strides = [1, 1]} : vector<47x8xf32> to vector<32x8xf32>
    %c3 = arith.constant 3 : index
    %c0_26 = arith.constant 0 : index
    %c0_27 = arith.constant 0 : index
    %116 = vector.load %arg7[%c3, %c0_26, %c0_27] : memref<16x8x16xf32, #tpu.memory_space<vmem>>, vector<1x8x16xf32>
    %117 = vector.shape_cast %116 : vector<1x8x16xf32> to vector<8x16xf32>
    %cst_28 = arith.constant dense<0.000000e+00> : vector<32x16xf32>
    %118 = tpu.matmul %115, %117, %cst_28 {dimension_numbers = #tpu.dot_dimension_numbers<[1], [0], [0], [1], [0, 0, 1, 1], [], []>} : vector<32x8xf32>, vector<8x16xf32>, vector<32x16xf32> -> vector<32x16xf32>
    %119 = arith.addf %114, %118 : vector<32x16xf32>
    %120 = vector.extract_strided_slice %99 {offsets = [4, 0], sizes = [32, 8], strides = [1, 1]} : vector<47x8xf32> to vector<32x8xf32>
    %c4 = arith.constant 4 : index
    %c0_29 = arith.constant 0 : index
    %c0_30 = arith.constant 0 : index
    %121 = vector.load %arg7[%c4, %c0_29, %c0_30] : memref<16x8x16xf32, #tpu.memory_space<vmem>>, vector<1x8x16xf32>
    %122 = vector.shape_cast %121 : vector<1x8x16xf32> to vector<8x16xf32>
    %cst_31 = arith.constant dense<0.000000e+00> : vector<32x16xf32>
    %123 = tpu.matmul %120, %122, %cst_31 {dimension_numbers = #tpu.dot_dimension_numbers<[1], [0], [0], [1], [0, 0, 1, 1], [], []>} : vector<32x8xf32>, vector<8x16xf32>, vector<32x16xf32> -> vector<32x16xf32>
    %124 = arith.addf %119, %123 : vector<32x16xf32>
    %125 = vector.extract_strided_slice %99 {offsets = [5, 0], sizes = [32, 8], strides = [1, 1]} : vector<47x8xf32> to vector<32x8xf32>
    %c5 = arith.constant 5 : index
    %c0_32 = arith.constant 0 : index
    %c0_33 = arith.constant 0 : index
    %126 = vector.load %arg7[%c5, %c0_32, %c0_33] : memref<16x8x16xf32, #tpu.memory_space<vmem>>, vector<1x8x16xf32>
    %127 = vector.shape_cast %126 : vector<1x8x16xf32> to vector<8x16xf32>
    %cst_34 = arith.constant dense<0.000000e+00> : vector<32x16xf32>
    %128 = tpu.matmul %125, %127, %cst_34 {dimension_numbers = #tpu.dot_dimension_numbers<[1], [0], [0], [1], [0, 0, 1, 1], [], []>} : vector<32x8xf32>, vector<8x16xf32>, vector<32x16xf32> -> vector<32x16xf32>
    %129 = arith.addf %124, %128 : vector<32x16xf32>
    %130 = vector.extract_strided_slice %99 {offsets = [6, 0], sizes = [32, 8], strides = [1, 1]} : vector<47x8xf32> to vector<32x8xf32>
    %c6 = arith.constant 6 : index
    %c0_35 = arith.constant 0 : index
    %c0_36 = arith.constant 0 : index
    %131 = vector.load %arg7[%c6, %c0_35, %c0_36] : memref<16x8x16xf32, #tpu.memory_space<vmem>>, vector<1x8x16xf32>
    %132 = vector.shape_cast %131 : vector<1x8x16xf32> to vector<8x16xf32>
    %cst_37 = arith.constant dense<0.000000e+00> : vector<32x16xf32>
    %133 = tpu.matmul %130, %132, %cst_37 {dimension_numbers = #tpu.dot_dimension_numbers<[1], [0], [0], [1], [0, 0, 1, 1], [], []>} : vector<32x8xf32>, vector<8x16xf32>, vector<32x16xf32> -> vector<32x16xf32>
    %134 = arith.addf %129, %133 : vector<32x16xf32>
    %135 = vector.extract_strided_slice %99 {offsets = [7, 0], sizes = [32, 8], strides = [1, 1]} : vector<47x8xf32> to vector<32x8xf32>
    %c7 = arith.constant 7 : index
    %c0_38 = arith.constant 0 : index
    %c0_39 = arith.constant 0 : index
    %136 = vector.load %arg7[%c7, %c0_38, %c0_39] : memref<16x8x16xf32, #tpu.memory_space<vmem>>, vector<1x8x16xf32>
    %137 = vector.shape_cast %136 : vector<1x8x16xf32> to vector<8x16xf32>
    %cst_40 = arith.constant dense<0.000000e+00> : vector<32x16xf32>
    %138 = tpu.matmul %135, %137, %cst_40 {dimension_numbers = #tpu.dot_dimension_numbers<[1], [0], [0], [1], [0, 0, 1, 1], [], []>} : vector<32x8xf32>, vector<8x16xf32>, vector<32x16xf32> -> vector<32x16xf32>
    %139 = arith.addf %134, %138 : vector<32x16xf32>
    %140 = vector.extract_strided_slice %99 {offsets = [8, 0], sizes = [32, 8], strides = [1, 1]} : vector<47x8xf32> to vector<32x8xf32>
    %c8 = arith.constant 8 : index
    %c0_41 = arith.constant 0 : index
    %c0_42 = arith.constant 0 : index
    %141 = vector.load %arg7[%c8, %c0_41, %c0_42] : memref<16x8x16xf32, #tpu.memory_space<vmem>>, vector<1x8x16xf32>
    %142 = vector.shape_cast %141 : vector<1x8x16xf32> to vector<8x16xf32>
    %cst_43 = arith.constant dense<0.000000e+00> : vector<32x16xf32>
    %143 = tpu.matmul %140, %142, %cst_43 {dimension_numbers = #tpu.dot_dimension_numbers<[1], [0], [0], [1], [0, 0, 1, 1], [], []>} : vector<32x8xf32>, vector<8x16xf32>, vector<32x16xf32> -> vector<32x16xf32>
    %144 = arith.addf %139, %143 : vector<32x16xf32>
    %145 = vector.extract_strided_slice %99 {offsets = [9, 0], sizes = [32, 8], strides = [1, 1]} : vector<47x8xf32> to vector<32x8xf32>
    %c9 = arith.constant 9 : index
    %c0_44 = arith.constant 0 : index
    %c0_45 = arith.constant 0 : index
    %146 = vector.load %arg7[%c9, %c0_44, %c0_45] : memref<16x8x16xf32, #tpu.memory_space<vmem>>, vector<1x8x16xf32>
    %147 = vector.shape_cast %146 : vector<1x8x16xf32> to vector<8x16xf32>
    %cst_46 = arith.constant dense<0.000000e+00> : vector<32x16xf32>
    %148 = tpu.matmul %145, %147, %cst_46 {dimension_numbers = #tpu.dot_dimension_numbers<[1], [0], [0], [1], [0, 0, 1, 1], [], []>} : vector<32x8xf32>, vector<8x16xf32>, vector<32x16xf32> -> vector<32x16xf32>
    %149 = arith.addf %144, %148 : vector<32x16xf32>
    %150 = vector.extract_strided_slice %99 {offsets = [10, 0], sizes = [32, 8], strides = [1, 1]} : vector<47x8xf32> to vector<32x8xf32>
    %c10 = arith.constant 10 : index
    %c0_47 = arith.constant 0 : index
    %c0_48 = arith.constant 0 : index
    %151 = vector.load %arg7[%c10, %c0_47, %c0_48] : memref<16x8x16xf32, #tpu.memory_space<vmem>>, vector<1x8x16xf32>
    %152 = vector.shape_cast %151 : vector<1x8x16xf32> to vector<8x16xf32>
    %cst_49 = arith.constant dense<0.000000e+00> : vector<32x16xf32>
    %153 = tpu.matmul %150, %152, %cst_49 {dimension_numbers = #tpu.dot_dimension_numbers<[1], [0], [0], [1], [0, 0, 1, 1], [], []>} : vector<32x8xf32>, vector<8x16xf32>, vector<32x16xf32> -> vector<32x16xf32>
    %154 = arith.addf %149, %153 : vector<32x16xf32>
    %155 = vector.extract_strided_slice %99 {offsets = [11, 0], sizes = [32, 8], strides = [1, 1]} : vector<47x8xf32> to vector<32x8xf32>
    %c11 = arith.constant 11 : index
    %c0_50 = arith.constant 0 : index
    %c0_51 = arith.constant 0 : index
    %156 = vector.load %arg7[%c11, %c0_50, %c0_51] : memref<16x8x16xf32, #tpu.memory_space<vmem>>, vector<1x8x16xf32>
    %157 = vector.shape_cast %156 : vector<1x8x16xf32> to vector<8x16xf32>
    %cst_52 = arith.constant dense<0.000000e+00> : vector<32x16xf32>
    %158 = tpu.matmul %155, %157, %cst_52 {dimension_numbers = #tpu.dot_dimension_numbers<[1], [0], [0], [1], [0, 0, 1, 1], [], []>} : vector<32x8xf32>, vector<8x16xf32>, vector<32x16xf32> -> vector<32x16xf32>
    %159 = arith.addf %154, %158 : vector<32x16xf32>
    %160 = vector.extract_strided_slice %99 {offsets = [12, 0], sizes = [32, 8], strides = [1, 1]} : vector<47x8xf32> to vector<32x8xf32>
    %c12 = arith.constant 12 : index
    %c0_53 = arith.constant 0 : index
    %c0_54 = arith.constant 0 : index
    %161 = vector.load %arg7[%c12, %c0_53, %c0_54] : memref<16x8x16xf32, #tpu.memory_space<vmem>>, vector<1x8x16xf32>
    %162 = vector.shape_cast %161 : vector<1x8x16xf32> to vector<8x16xf32>
    %cst_55 = arith.constant dense<0.000000e+00> : vector<32x16xf32>
    %163 = tpu.matmul %160, %162, %cst_55 {dimension_numbers = #tpu.dot_dimension_numbers<[1], [0], [0], [1], [0, 0, 1, 1], [], []>} : vector<32x8xf32>, vector<8x16xf32>, vector<32x16xf32> -> vector<32x16xf32>
    %164 = arith.addf %159, %163 : vector<32x16xf32>
    %165 = vector.extract_strided_slice %99 {offsets = [13, 0], sizes = [32, 8], strides = [1, 1]} : vector<47x8xf32> to vector<32x8xf32>
    %c13 = arith.constant 13 : index
    %c0_56 = arith.constant 0 : index
    %c0_57 = arith.constant 0 : index
    %166 = vector.load %arg7[%c13, %c0_56, %c0_57] : memref<16x8x16xf32, #tpu.memory_space<vmem>>, vector<1x8x16xf32>
    %167 = vector.shape_cast %166 : vector<1x8x16xf32> to vector<8x16xf32>
    %cst_58 = arith.constant dense<0.000000e+00> : vector<32x16xf32>
    %168 = tpu.matmul %165, %167, %cst_58 {dimension_numbers = #tpu.dot_dimension_numbers<[1], [0], [0], [1], [0, 0, 1, 1], [], []>} : vector<32x8xf32>, vector<8x16xf32>, vector<32x16xf32> -> vector<32x16xf32>
    %169 = arith.addf %164, %168 : vector<32x16xf32>
    %170 = vector.extract_strided_slice %99 {offsets = [14, 0], sizes = [32, 8], strides = [1, 1]} : vector<47x8xf32> to vector<32x8xf32>
    %c14 = arith.constant 14 : index
    %c0_59 = arith.constant 0 : index
    %c0_60 = arith.constant 0 : index
    %171 = vector.load %arg7[%c14, %c0_59, %c0_60] : memref<16x8x16xf32, #tpu.memory_space<vmem>>, vector<1x8x16xf32>
    %172 = vector.shape_cast %171 : vector<1x8x16xf32> to vector<8x16xf32>
    %cst_61 = arith.constant dense<0.000000e+00> : vector<32x16xf32>
    %173 = tpu.matmul %170, %172, %cst_61 {dimension_numbers = #tpu.dot_dimension_numbers<[1], [0], [0], [1], [0, 0, 1, 1], [], []>} : vector<32x8xf32>, vector<8x16xf32>, vector<32x16xf32> -> vector<32x16xf32>
    %174 = arith.addf %169, %173 : vector<32x16xf32>
    %175 = vector.extract_strided_slice %99 {offsets = [15, 0], sizes = [32, 8], strides = [1, 1]} : vector<47x8xf32> to vector<32x8xf32>
    %c15 = arith.constant 15 : index
    %c0_62 = arith.constant 0 : index
    %c0_63 = arith.constant 0 : index
    %176 = vector.load %arg7[%c15, %c0_62, %c0_63] : memref<16x8x16xf32, #tpu.memory_space<vmem>>, vector<1x8x16xf32>
    %177 = vector.shape_cast %176 : vector<1x8x16xf32> to vector<8x16xf32>
    %cst_64 = arith.constant dense<0.000000e+00> : vector<32x16xf32>
    %178 = tpu.matmul %175, %177, %cst_64 {dimension_numbers = #tpu.dot_dimension_numbers<[1], [0], [0], [1], [0, 0, 1, 1], [], []>} : vector<32x8xf32>, vector<8x16xf32>, vector<32x16xf32> -> vector<32x16xf32>
    %179 = arith.addf %174, %178 : vector<32x16xf32>
    %c0_65 = arith.constant 0 : index
    %c0_66 = arith.constant 0 : index
    %180 = vector.load %arg8[%c0_65, %c0_66] : memref<1x16xf32, #tpu.memory_space<vmem>>, vector<1x16xf32>
    %181 = vector.broadcast %180 : vector<1x16xf32> to vector<32x16xf32>
    %182 = arith.mulf %179, %181 : vector<32x16xf32>
    %c0_67 = arith.constant 0 : index
    %c0_68 = arith.constant 0 : index
    %183 = vector.load %arg9[%c0_67, %c0_68] : memref<1x16xf32, #tpu.memory_space<vmem>>, vector<1x16xf32>
    %184 = vector.broadcast %183 : vector<1x16xf32> to vector<32x16xf32>
    %185 = arith.addf %182, %184 : vector<32x16xf32>
    %cst_69 = arith.constant 0.000000e+00 : f32
    %186 = vector.broadcast %cst_69 : f32 to vector<32x16xf32>
    %187 = arith.cmpf ogt, %185, %186 : vector<32x16xf32>
    %cst_70 = arith.constant 0.000000e+00 : f32
    %188 = vector.broadcast %cst_70 : f32 to vector<32x16xf32>
    %189 = arith.minimumf %185, %188 : vector<32x16xf32>
    %190 = math.exp %189 : vector<32x16xf32>
    %cst_71 = arith.constant 1.000000e+00 : f32
    %191 = vector.broadcast %cst_71 : f32 to vector<32x16xf32>
    %192 = arith.subf %190, %191 : vector<32x16xf32>
    %193 = arith.select %187, %185, %192 : vector<32x16xi1>, vector<32x16xf32>
    %c0_72 = arith.constant 0 : index
    %c0_73 = arith.constant 0 : index
    %194 = vector.load %arg10[%c0_72, %c0_73] : memref<18x32xf32, #tpu.memory_space<vmem>>, vector<18x32xf32>
    %cst_74 = arith.constant dense<0.000000e+00> : vector<18x16xf32>
    %195 = tpu.matmul %194, %193, %cst_74 {dimension_numbers = #tpu.dot_dimension_numbers<[1], [0], [0], [1], [0, 0, 1, 1], [], []>} : vector<18x32xf32>, vector<32x16xf32>, vector<18x16xf32> -> vector<18x16xf32>
    %196 = vector.extract_strided_slice %195 {offsets = [1, 0], sizes = [16, 16], strides = [1, 1]} : vector<18x16xf32> to vector<16x16xf32>
    %197 = vector.extract_strided_slice %195 {offsets = [0, 0], sizes = [16, 16], strides = [1, 1]} : vector<18x16xf32> to vector<16x16xf32>
    %c0_75 = arith.constant 0 : index
    %c0_76 = arith.constant 0 : index
    %c0_77 = arith.constant 0 : index
    %198 = vector.load %arg11[%c0_75, %c0_76, %c0_77] : memref<3x16x32xf32, #tpu.memory_space<vmem>>, vector<1x16x32xf32>
    %199 = vector.shape_cast %198 : vector<1x16x32xf32> to vector<16x32xf32>
    %cst_78 = arith.constant dense<0.000000e+00> : vector<16x32xf32>
    %200 = tpu.matmul %197, %199, %cst_78 {dimension_numbers = #tpu.dot_dimension_numbers<[1], [0], [0], [1], [0, 0, 1, 1], [], []>} : vector<16x16xf32>, vector<16x32xf32>, vector<16x32xf32> -> vector<16x32xf32>
    %201 = vector.extract_strided_slice %195 {offsets = [1, 0], sizes = [16, 16], strides = [1, 1]} : vector<18x16xf32> to vector<16x16xf32>
    %c1_79 = arith.constant 1 : index
    %c0_80 = arith.constant 0 : index
    %c0_81 = arith.constant 0 : index
    %202 = vector.load %arg11[%c1_79, %c0_80, %c0_81] : memref<3x16x32xf32, #tpu.memory_space<vmem>>, vector<1x16x32xf32>
    %203 = vector.shape_cast %202 : vector<1x16x32xf32> to vector<16x32xf32>
    %cst_82 = arith.constant dense<0.000000e+00> : vector<16x32xf32>
    %204 = tpu.matmul %201, %203, %cst_82 {dimension_numbers = #tpu.dot_dimension_numbers<[1], [0], [0], [1], [0, 0, 1, 1], [], []>} : vector<16x16xf32>, vector<16x32xf32>, vector<16x32xf32> -> vector<16x32xf32>
    %205 = arith.addf %200, %204 : vector<16x32xf32>
    %206 = vector.extract_strided_slice %195 {offsets = [2, 0], sizes = [16, 16], strides = [1, 1]} : vector<18x16xf32> to vector<16x16xf32>
    %c2_83 = arith.constant 2 : index
    %c0_84 = arith.constant 0 : index
    %c0_85 = arith.constant 0 : index
    %207 = vector.load %arg11[%c2_83, %c0_84, %c0_85] : memref<3x16x32xf32, #tpu.memory_space<vmem>>, vector<1x16x32xf32>
    %208 = vector.shape_cast %207 : vector<1x16x32xf32> to vector<16x32xf32>
    %cst_86 = arith.constant dense<0.000000e+00> : vector<16x32xf32>
    %209 = tpu.matmul %206, %208, %cst_86 {dimension_numbers = #tpu.dot_dimension_numbers<[1], [0], [0], [1], [0, 0, 1, 1], [], []>} : vector<16x16xf32>, vector<16x32xf32>, vector<16x32xf32> -> vector<16x32xf32>
    %210 = arith.addf %205, %209 : vector<16x32xf32>
    %c0_87 = arith.constant 0 : index
    %c0_88 = arith.constant 0 : index
    %211 = vector.load %arg12[%c0_87, %c0_88] : memref<1x32xf32, #tpu.memory_space<vmem>>, vector<1x32xf32>
    %212 = vector.broadcast %211 : vector<1x32xf32> to vector<16x32xf32>
    %213 = arith.mulf %210, %212 : vector<16x32xf32>
    %c0_89 = arith.constant 0 : index
    %c0_90 = arith.constant 0 : index
    %214 = vector.load %arg13[%c0_89, %c0_90] : memref<1x32xf32, #tpu.memory_space<vmem>>, vector<1x32xf32>
    %215 = vector.broadcast %214 : vector<1x32xf32> to vector<16x32xf32>
    %216 = arith.addf %213, %215 : vector<16x32xf32>
    %cst_91 = arith.constant 0.000000e+00 : f32
    %217 = vector.broadcast %cst_91 : f32 to vector<16x32xf32>
    %218 = arith.cmpf ogt, %216, %217 : vector<16x32xf32>
    %cst_92 = arith.constant 0.000000e+00 : f32
    %219 = vector.broadcast %cst_92 : f32 to vector<16x32xf32>
    %220 = arith.minimumf %216, %219 : vector<16x32xf32>
    %221 = math.exp %220 : vector<16x32xf32>
    %cst_93 = arith.constant 1.000000e+00 : f32
    %222 = vector.broadcast %cst_93 : f32 to vector<16x32xf32>
    %223 = arith.subf %221, %222 : vector<16x32xf32>
    %224 = arith.select %218, %216, %223 : vector<16x32xi1>, vector<16x32xf32>
    %c0_94 = arith.constant 0 : index
    %c0_95 = arith.constant 0 : index
    %225 = vector.load %arg14[%c0_94, %c0_95] : memref<8x16xf32, #tpu.memory_space<vmem>>, vector<8x16xf32>
    %cst_96 = arith.constant dense<0.000000e+00> : vector<8x32xf32>
    %226 = tpu.matmul %225, %224, %cst_96 {dimension_numbers = #tpu.dot_dimension_numbers<[1], [0], [0], [1], [0, 0, 1, 1], [], []>} : vector<8x16xf32>, vector<16x32xf32>, vector<8x32xf32> -> vector<8x32xf32>
    %c0_97 = arith.constant 0 : index
    %c0_98 = arith.constant 0 : index
    %227 = vector.load %arg15[%c0_97, %c0_98] : memref<8x256xf32, #tpu.memory_space<vmem>>, vector<8x256xf32>
    %cst_99 = arith.constant dense<0.000000e+00> : vector<32x256xf32>
    %228 = tpu.matmul %100, %227, %cst_99 {dimension_numbers = #tpu.dot_dimension_numbers<[1], [0], [0], [1], [0, 0, 1, 1], [], []>} : vector<32x8xf32>, vector<8x256xf32>, vector<32x256xf32> -> vector<32x256xf32>
    %c0_100 = arith.constant 0 : index
    %c0_101 = arith.constant 0 : index
    %229 = vector.load %arg16[%c0_100, %c0_101] : memref<1x256xf32, #tpu.memory_space<vmem>>, vector<1x256xf32>
    %230 = vector.broadcast %229 : vector<1x256xf32> to vector<32x256xf32>
    %231 = arith.addf %228, %230 : vector<32x256xf32>
    %c0_102 = arith.constant 0 : index
    %c0_103 = arith.constant 0 : index
    %232 = vector.load %arg17[%c0_102, %c0_103] : memref<16x256xf32, #tpu.memory_space<vmem>>, vector<16x256xf32>
    %cst_104 = arith.constant dense<0.000000e+00> : vector<16x256xf32>
    %233 = tpu.matmul %196, %232, %cst_104 {dimension_numbers = #tpu.dot_dimension_numbers<[1], [0], [0], [1], [0, 0, 1, 1], [], []>} : vector<16x16xf32>, vector<16x256xf32>, vector<16x256xf32> -> vector<16x256xf32>
    %c0_105 = arith.constant 0 : index
    %c0_106 = arith.constant 0 : index
    %234 = vector.load %arg18[%c0_105, %c0_106] : memref<1x256xf32, #tpu.memory_space<vmem>>, vector<1x256xf32>
    %235 = vector.broadcast %234 : vector<1x256xf32> to vector<16x256xf32>
    %236 = arith.addf %233, %235 : vector<16x256xf32>
    %c0_107 = arith.constant 0 : index
    %c0_108 = arith.constant 0 : index
    %237 = vector.load %arg19[%c0_107, %c0_108] : memref<32x256xf32, #tpu.memory_space<vmem>>, vector<32x256xf32>
    %cst_109 = arith.constant dense<0.000000e+00> : vector<8x256xf32>
    %238 = tpu.matmul %226, %237, %cst_109 {dimension_numbers = #tpu.dot_dimension_numbers<[1], [0], [0], [1], [0, 0, 1, 1], [], []>} : vector<8x32xf32>, vector<32x256xf32>, vector<8x256xf32> -> vector<8x256xf32>
    %c0_110 = arith.constant 0 : index
    %c0_111 = arith.constant 0 : index
    %239 = vector.load %arg20[%c0_110, %c0_111] : memref<1x256xf32, #tpu.memory_space<vmem>>, vector<1x256xf32>
    %240 = vector.broadcast %239 : vector<1x256xf32> to vector<8x256xf32>
    %241 = arith.addf %238, %240 : vector<8x256xf32>
    %c0_112 = arith.constant 0 : index
    %c0_113 = arith.constant 0 : index
    %c0_114 = arith.constant 0 : index
    %242 = vector.load %arg22[%c0_112, %c0_113, %c0_114] : memref<1x32x256xf32, #tpu.memory_space<vmem>>, vector<1x32x256xf32>
    %243 = vector.shape_cast %242 : vector<1x32x256xf32> to vector<32x256xf32>
    %244 = vector.shape_cast %231 : vector<32x256xf32> to vector<1x32x256xf32>
    tpu.vector_store %arg22[%c0_112, %c0_113, %c0_114], %244 {strides = array<i32>} : memref<1x32x256xf32, #tpu.memory_space<vmem>>, vector<1x32x256xf32>,
    %c0_115 = arith.constant 0 : index
    %c0_116 = arith.constant 0 : index
    %c0_117 = arith.constant 0 : index
    %245 = vector.load %arg23[%c0_115, %c0_116, %c0_117] : memref<1x16x256xf32, #tpu.memory_space<vmem>>, vector<1x16x256xf32>
    %246 = vector.shape_cast %245 : vector<1x16x256xf32> to vector<16x256xf32>
    %247 = vector.shape_cast %236 : vector<16x256xf32> to vector<1x16x256xf32>
    tpu.vector_store %arg23[%c0_115, %c0_116, %c0_117], %247 {strides = array<i32>} : memref<1x16x256xf32, #tpu.memory_space<vmem>>, vector<1x16x256xf32>,
    %c0_118 = arith.constant 0 : index
    %c0_119 = arith.constant 0 : index
    %c0_120 = arith.constant 0 : index
    %248 = vector.load %arg24[%c0_118, %c0_119, %c0_120] : memref<1x8x256xf32, #tpu.memory_space<vmem>>, vector<1x8x256xf32>
    %249 = vector.shape_cast %248 : vector<1x8x256xf32> to vector<8x256xf32>
    %250 = vector.shape_cast %241 : vector<8x256xf32> to vector<1x8x256xf32>
    tpu.vector_store %arg24[%c0_118, %c0_119, %c0_120], %250 {strides = array<i32>} : memref<1x8x256xf32, #tpu.memory_space<vmem>>, vector<1x8x256xf32>,
    %c0_121 = arith.constant 0 : index
    %c0_122 = arith.constant 0 : index
    %251 = vector.load %arg21[%c0_121, %c0_122] : memref<1x256xf32, #tpu.memory_space<vmem>>, vector<1x256xf32>
    %252 = vector.broadcast %251 : vector<1x256xf32> to vector<8x256xf32>
    %253 = arith.mulf %241, %252 : vector<8x256xf32>
    %cst_123 = arith.constant dense<0.000000e+00> : vector<8xf32>
    %254 = vector.multi_reduction <add>, %253, %cst_123 [1] : vector<8x256xf32> to vector<8xf32>
    %255 = vector.shape_cast %254 : vector<8xf32> to vector<8x1xf32>
    %cst_124 = arith.constant dense<0xFF800000> : vector<1xf32>
    %256 = vector.multi_reduction <maximumf>, %255, %cst_124 [0] : vector<8x1xf32> to vector<1xf32>
    %257 = vector.shape_cast %256 : vector<1xf32> to vector<1x1xf32>
    %258 = vector.broadcast %257 : vector<1x1xf32> to vector<8x1xf32>
    %259 = arith.subf %255, %258 : vector<8x1xf32>
    %260 = math.exp %259 : vector<8x1xf32>
    %cst_125 = arith.constant dense<0.000000e+00> : vector<1xf32>
    %261 = vector.multi_reduction <add>, %260, %cst_125 [0] : vector<8x1xf32> to vector<1xf32>
    %262 = vector.shape_cast %261 : vector<1xf32> to vector<1x1xf32>
    %263 = vector.broadcast %262 : vector<1x1xf32> to vector<8x1xf32>
    %264 = arith.divf %260, %263 : vector<8x1xf32>
    %265 = vector.broadcast %264 : vector<8x1xf32> to vector<8x256xf32>
    %266 = arith.mulf %241, %265 : vector<8x256xf32>
    %cst_126 = arith.constant dense<0.000000e+00> : vector<256xf32>
    %267 = vector.multi_reduction <add>, %266, %cst_126 [0] : vector<8x256xf32> to vector<256xf32>
    %268 = vector.shape_cast %267 : vector<256xf32> to vector<1x256xf32>
    %c0_127 = arith.constant 0 : index
    %c0_128 = arith.constant 0 : index
    %c0_129 = arith.constant 0 : index
    %269 = vector.load %arg25[%c0_127, %c0_128, %c0_129] : memref<1x1x256xf32, #tpu.memory_space<vmem>>, vector<1x1x256xf32>
    %270 = vector.shape_cast %269 : vector<1x1x256xf32> to vector<1x256xf32>
    %271 = vector.shape_cast %268 : vector<1x256xf32> to vector<1x1x256xf32>
    tpu.vector_store %arg25[%c0_127, %c0_128, %c0_129], %271 {strides = array<i32>} : memref<1x1x256xf32, #tpu.memory_space<vmem>>, vector<1x1x256xf32>,
    return
  }
  func.func @transform_0(%arg0: i32) -> (i32, i32, i32) {
    %c0_i32 = arith.constant 0 : i32
    %c0_i32_0 = arith.constant 0 : i32
    %c0_i32_1 = arith.constant 0 : i32
    return %arg0, %c0_i32, %c0_i32_0 : i32, i32, i32
  }
  func.func @transform_1(%arg0: i32) -> (i32, i32) {
    %c0_i32 = arith.constant 0 : i32
    %c0_i32_0 = arith.constant 0 : i32
    %c0_i32_1 = arith.constant 0 : i32
    return %c0_i32, %c0_i32_0 : i32, i32
  }
  func.func @transform_2(%arg0: i32) -> (i32, i32) {
    %c0_i32 = arith.constant 0 : i32
    %c0_i32_0 = arith.constant 0 : i32
    %c0_i32_1 = arith.constant 0 : i32
    return %c0_i32, %c0_i32_0 : i32, i32
  }
  func.func @transform_3(%arg0: i32) -> (i32, i32) {
    %c0_i32 = arith.constant 0 : i32
    %c0_i32_0 = arith.constant 0 : i32
    %c0_i32_1 = arith.constant 0 : i32
    return %c0_i32, %c0_i32_0 : i32, i32
  }
  func.func @transform_4(%arg0: i32) -> (i32, i32) {
    %c0_i32 = arith.constant 0 : i32
    %c0_i32_0 = arith.constant 0 : i32
    %c0_i32_1 = arith.constant 0 : i32
    return %c0_i32, %c0_i32_0 : i32, i32
  }
  func.func @transform_5(%arg0: i32) -> (i32, i32) {
    %c0_i32 = arith.constant 0 : i32
    %c0_i32_0 = arith.constant 0 : i32
    %c0_i32_1 = arith.constant 0 : i32
    return %c0_i32, %c0_i32_0 : i32, i32
  }
  func.func @transform_6(%arg0: i32) -> (i32, i32, i32) {
    %c0_i32 = arith.constant 0 : i32
    %c0_i32_0 = arith.constant 0 : i32
    %c0_i32_1 = arith.constant 0 : i32
    %c0_i32_2 = arith.constant 0 : i32
    return %c0_i32, %c0_i32_0, %c0_i32_1 : i32, i32, i32
  }
  func.func @transform_7(%arg0: i32) -> (i32, i32) {
    %c0_i32 = arith.constant 0 : i32
    %c0_i32_0 = arith.constant 0 : i32
    %c0_i32_1 = arith.constant 0 : i32
    return %c0_i32, %c0_i32_0 : i32, i32
  }
  func.func @transform_8(%arg0: i32) -> (i32, i32) {
    %c0_i32 = arith.constant 0 : i32
    %c0_i32_0 = arith.constant 0 : i32
    %c0_i32_1 = arith.constant 0 : i32
    return %c0_i32, %c0_i32_0 : i32, i32
  }
  func.func @transform_9(%arg0: i32) -> (i32, i32) {
    %c0_i32 = arith.constant 0 : i32
    %c0_i32_0 = arith.constant 0 : i32
    %c0_i32_1 = arith.constant 0 : i32
    return %c0_i32, %c0_i32_0 : i32, i32
  }
  func.func @transform_10(%arg0: i32) -> (i32, i32, i32) {
    %c0_i32 = arith.constant 0 : i32
    %c0_i32_0 = arith.constant 0 : i32
    %c0_i32_1 = arith.constant 0 : i32
    %c0_i32_2 = arith.constant 0 : i32
    return %c0_i32, %c0_i32_0, %c0_i32_1 : i32, i32, i32
  }
  func.func @transform_11(%arg0: i32) -> (i32, i32) {
    %c0_i32 = arith.constant 0 : i32
    %c0_i32_0 = arith.constant 0 : i32
    %c0_i32_1 = arith.constant 0 : i32
    return %c0_i32, %c0_i32_0 : i32, i32
  }
  func.func @transform_12(%arg0: i32) -> (i32, i32) {
    %c0_i32 = arith.constant 0 : i32
    %c0_i32_0 = arith.constant 0 : i32
    %c0_i32_1 = arith.constant 0 : i32
    return %c0_i32, %c0_i32_0 : i32, i32
  }
  func.func @transform_13(%arg0: i32) -> (i32, i32) {
    %c0_i32 = arith.constant 0 : i32
    %c0_i32_0 = arith.constant 0 : i32
    %c0_i32_1 = arith.constant 0 : i32
    return %c0_i32, %c0_i32_0 : i32, i32
  }
  func.func @transform_14(%arg0: i32) -> (i32, i32) {
    %c0_i32 = arith.constant 0 : i32
    %c0_i32_0 = arith.constant 0 : i32
    %c0_i32_1 = arith.constant 0 : i32
    return %c0_i32, %c0_i32_0 : i32, i32
  }
  func.func @transform_15(%arg0: i32) -> (i32, i32) {
    %c0_i32 = arith.constant 0 : i32
    %c0_i32_0 = arith.constant 0 : i32
    %c0_i32_1 = arith.constant 0 : i32
    return %c0_i32, %c0_i32_0 : i32, i32
  }
  func.func @transform_16(%arg0: i32) -> (i32, i32) {
    %c0_i32 = arith.constant 0 : i32
    %c0_i32_0 = arith.constant 0 : i32
    %c0_i32_1 = arith.constant 0 : i32
    return %c0_i32, %c0_i32_0 : i32, i32
  }
  func.func @transform_17(%arg0: i32) -> (i32, i32) {
    %c0_i32 = arith.constant 0 : i32
    %c0_i32_0 = arith.constant 0 : i32
    %c0_i32_1 = arith.constant 0 : i32
    return %c0_i32, %c0_i32_0 : i32, i32
  }
  func.func @transform_18(%arg0: i32) -> (i32, i32) {
    %c0_i32 = arith.constant 0 : i32
    %c0_i32_0 = arith.constant 0 : i32
    %c0_i32_1 = arith.constant 0 : i32
    return %c0_i32, %c0_i32_0 : i32, i32
  }
  func.func @transform_19(%arg0: i32) -> (i32, i32) {
    %c0_i32 = arith.constant 0 : i32
    %c0_i32_0 = arith.constant 0 : i32
    %c0_i32_1 = arith.constant 0 : i32
    return %c0_i32, %c0_i32_0 : i32, i32
  }
  func.func @transform_20(%arg0: i32) -> (i32, i32) {
    %c0_i32 = arith.constant 0 : i32
    %c0_i32_0 = arith.constant 0 : i32
    %c0_i32_1 = arith.constant 0 : i32
    return %c0_i32, %c0_i32_0 : i32, i32
  }
  func.func @transform_21(%arg0: i32) -> (i32, i32, i32) {
    %c0_i32 = arith.constant 0 : i32
    %c0_i32_0 = arith.constant 0 : i32
    %c0_i32_1 = arith.constant 0 : i32
    return %arg0, %c0_i32, %c0_i32_0 : i32, i32, i32
  }
  func.func @transform_22(%arg0: i32) -> (i32, i32, i32) {
    %c0_i32 = arith.constant 0 : i32
    %c0_i32_0 = arith.constant 0 : i32
    %c0_i32_1 = arith.constant 0 : i32
    return %arg0, %c0_i32, %c0_i32_0 : i32, i32, i32
  }
  func.func @transform_23(%arg0: i32) -> (i32, i32, i32) {
    %c0_i32 = arith.constant 0 : i32
    %c0_i32_0 = arith.constant 0 : i32
    %c0_i32_1 = arith.constant 0 : i32
    return %arg0, %c0_i32, %c0_i32_0 : i32, i32, i32
  }
  func.func @transform_24(%arg0: i32) -> (i32, i32, i32) {
    %c0_i32 = arith.constant 0 : i32
    %c0_i32_0 = arith.constant 0 : i32
    %c0_i32_1 = arith.constant 0 : i32
    return %arg0, %c0_i32, %c0_i32_0 : i32, i32, i32
  }
}

</mosaic_0001>

<llo_original>
// kernel: tpu_custom_call.1
$region0: #{tpu_custom_call.1}
  #allocation0 [shape = 'u32[]', space=smem, size = 0x4, offset = 0x4, fixed_abs, tag = 'smem constant byte address 0x4 - core index']
  #allocation1 [shape = 'u32[144,128]{1,0:T(1,128)}', space=vmem, size = 0x12000, scoped, tag = 'internal scratch']
  %s0 = inlined_call_operand.vmem [shape: f32[2,80,8], index: 0, kind: input, shape index: {}]
  %s1 = inlined_call_operand.hbm [shape: f32[8,8], index: 1, kind: input, shape index: {}]
  %s2 = inlined_call_operand.vmem [shape: f32[16,8], index: 2, kind: input, shape index: {}]
  %s3 = inlined_call_operand.hbm [shape: f32[1,8], index: 3, kind: input, shape index: {}]
  %s4 = inlined_call_operand.hbm [shape: f32[1,8], index: 4, kind: input, shape index: {}]
  %s5 = inlined_call_operand.hbm [shape: f32[47,65], index: 5, kind: input, shape index: {}]
  %s6 = inlined_call_operand.vmem [shape: f32[16,8,16], index: 6, kind: input, shape index: {}]
  %s7 = inlined_call_operand.hbm [shape: f32[1,16], index: 7, kind: input, shape index: {}]
  %s8 = inlined_call_operand.hbm [shape: f32[1,16], index: 8, kind: input, shape index: {}]
  %s9 = inlined_call_operand.hbm [shape: f32[18,32], index: 9, kind: input, shape index: {}]
  %s10 = inlined_call_operand.hbm [shape: f32[3,16,32], index: 10, kind: input, shape index: {}]
  %s11 = inlined_call_operand.hbm [shape: f32[1,32], index: 11, kind: input, shape index: {}]
  %s12 = inlined_call_operand.hbm [shape: f32[1,32], index: 12, kind: input, shape index: {}]
  %s13 = inlined_call_operand.vmem [shape: f32[8,16], index: 13, kind: input, shape index: {}]
  %s14 = inlined_call_operand.vmem [shape: f32[8,256], index: 14, kind: input, shape index: {}]
  %s15 = inlined_call_operand.vmem [shape: f32[1,256], index: 15, kind: input, shape index: {}]
  %s16 = inlined_call_operand.vmem [shape: f32[16,256], index: 16, kind: input, shape index: {}]
  %s17 = inlined_call_operand.vmem [shape: f32[1,256], index: 17, kind: input, shape index: {}]
  %s18 = inlined_call_operand.vmem [shape: f32[32,256], index: 18, kind: input, shape index: {}]
  %s19 = inlined_call_operand.vmem [shape: f32[1,256], index: 19, kind: input, shape index: {}]
  %s20 = inlined_call_operand.vmem [shape: f32[1,256], index: 20, kind: input, shape index: {}]
  %s21 = inlined_call_operand.hbm [shape: f32[2,32,256], index: 21, kind: output, shape index: {0}]
  %s22 = inlined_call_operand.hbm [shape: f32[2,16,256], index: 22, kind: output, shape index: {1}]
  %s23 = inlined_call_operand.hbm [shape: f32[2,8,256], index: 23, kind: output, shape index: {2}]
  %s24 = inlined_call_operand.hbm [shape: f32[2,1,256], index: 24, kind: output, shape index: {3}]
  %25 = xla_tuple %s21, %s22, %s23, %s24
  %s26 = sld [smem:[#allocation0]]
  $region181: #{tpu_custom_call.1} parent=0
    _
  %s28 = ssub.s32 1, %s26
  %s29 = scalar_select 0, %s28, %s26
  $region1: #{tpu_custom_call.1} parent=0
    #allocation2 [shape = 'u8[4096]{0}', space=vmem, size = 0x1000, scoped, tag = 'input window, operand 1, single buffered']
    #allocation3 [shape = 's32[2]{0}', space=sflag, size = 0x8, scoped, tag = 'scoped memory for tpu_custom_call.1']
    #allocation4 [shape = 's32[2]{0}', space=sflag, size = 0x8, scoped, tag = 'scoped memory for tpu_custom_call.1']
    #allocation5 [shape = 'u8[512]{0}', space=vmem, size = 0x400, scoped, tag = 'input window, operand 3, single buffered']
    #allocation6 [shape = 's32[1]{0}', space=sflag, size = 0x4, scoped, tag = 'scoped memory for tpu_custom_call.1']
    #allocation7 [shape = 'u8[512]{0}', space=vmem, size = 0x400, scoped, tag = 'input window, operand 4, single buffered']
    #allocation8 [shape = 'u8[24576]{0}', space=vmem, size = 0x6000, scoped, tag = 'input window, operand 5, single buffered']
    #allocation9 [shape = 's32[1]{0}', space=sflag, size = 0x4, scoped, tag = 'scoped memory for tpu_custom_call.1']
    #allocation10 [shape = 'u8[512]{0}', space=vmem, size = 0x400, scoped, tag = 'input window, operand 7, single buffered']
    #allocation11 [shape = 'u8[512]{0}', space=vmem, size = 0x400, scoped, tag = 'input window, operand 8, single buffered']
    #allocation12 [shape = 's32[1]{0}', space=sflag, size = 0x4, scoped, tag = 'scoped memory for tpu_custom_call.1']
    #allocation13 [shape = 'u8[12288]{0}', space=vmem, size = 0x3000, scoped, tag = 'input window, operand 9, single buffered']
    #allocation14 [shape = 'u8[24576]{0}', space=vmem, size = 0x6000, scoped, tag = 'input window, operand 10, single buffered']
    #allocation15 [shape = 's32[1]{0}', space=sflag, size = 0x4, scoped, tag = 'scoped memory for tpu_custom_call.1']
    #allocation16 [shape = 'u8[512]{0}', space=vmem, size = 0x400, scoped, tag = 'input window, operand 11, single buffered']
    #allocation17 [shape = 'u8[512]{0}', space=vmem, size = 0x400, scoped, tag = 'input window, operand 12, single buffered']
    #allocation18 [shape = 's32[1]{0}', space=sflag, size = 0x4, scoped, tag = 'scoped memory for tpu_custom_call.1']
    #allocation19 [shape = 'u8[65536]{0}', space=vmem, size = 0x10000, scoped, tag = 'output window, operand 0']
    #allocation20 [shape = 'u8[32768]{0}', space=vmem, size = 0x8000, scoped, tag = 'output window, operand 1']
    #allocation21 [shape = 's32[2]{0}', space=sflag, size = 0x8, scoped, tag = 'scoped memory for tpu_custom_call.1']
    #allocation22 [shape = 'u8[16384]{0}', space=vmem, size = 0x4000, scoped, tag = 'output window, operand 2']
    #allocation23 [shape = 'u8[2048]{0}', space=vmem, size = 0x800, scoped, tag = 'output window, operand 3']
    #allocation24 [shape = 's32[2]{0}', space=sflag, size = 0x8, scoped, tag = 'scoped memory for tpu_custom_call.1']
    %30 = vsyncpa [#allocation3], 0
    %31 = vsyncpa [#allocation6], 0
    %32 = vsyncpa [#allocation9], 0
    %33 = vsyncpa [#allocation12], 0
    %34 = vsyncpa [#allocation15], 0
    %35 = vsyncpa [#allocation18], 0
    %36 = vsyncpa [#allocation4], 0
    %s37 = scalar_lea.sflag [#allocation4], 1
    %38 = vsyncpa %s37, 0
    %39 = vsyncpa [#allocation21], 0
    %s40 = scalar_lea.sflag [#allocation21], 1
    %41 = vsyncpa %s40, 0
    %42 = vsyncpa [#allocation24], 0
    %s43 = scalar_lea.sflag [#allocation24], 1
    %44 = vsyncpa %s43, 0
    loop: start=0, step=1, limit=4
    $region2: #{tpu_custom_call.1} parent=1 // loop_pre_header
      _
    $region3: #{tpu_custom_call.1} parent=1 // loop_header
      %s46 = sphi 0, %s50
      %p47 = scmp.ge.s32.totalorder %s46, 4
      %s56 = sphi 0, %s58
      %s59 = sphi 0, %s56
      %s60 = sphi 0, %s59
      %s76 = sphi 0, %s60
      %s80 = sphi 0, %s80
      %s82 = sphi 0, %s80
      %s83 = sphi 0, %s82
      %s97 = sphi 0, %s83
      %s101 = sphi 0, %s101
      %s103 = sphi 0, %s101
      %s104 = sphi 0, %s103
      %s118 = sphi 0, %s104
      %s122 = sphi 0, %s122
      %s124 = sphi 0, %s122
      %s125 = sphi 0, %s124
      %s139 = sphi 0, %s125
      %s143 = sphi 0, %s143
      %s145 = sphi 0, %s143
      %s146 = sphi 0, %s145
      %s160 = sphi 0, %s146
      %s164 = sphi 0, %s164
      %s166 = sphi 0, %s164
      %s167 = sphi 0, %s166
      %s181 = sphi 0, %s167
      %s185 = sphi 0, %s185
      %s187 = sphi 0, %s185
      %s188 = sphi 0, %s187
      %s202 = sphi 0, %s188
      %s206 = sphi 0, %s206
      %s208 = sphi 0, %s206
      %s209 = sphi 0, %s208
      %s223 = sphi 0, %s209
      %s227 = sphi 0, %s227
      %s229 = sphi 0, %s227
      %s230 = sphi 0, %s229
      %s244 = sphi 0, %s230
      %s248 = sphi 0, %s248
      %s250 = sphi 0, %s248
      %s251 = sphi 0, %s250
      %s265 = sphi 0, %s251
      %s269 = sphi 0, %s269
      %s271 = sphi 0, %s269
      %s272 = sphi 0, %s271
      %s286 = sphi 0, %s272
      %s290 = sphi 0, %s290
      %s292 = sphi 0, %s290
      %s293 = sphi 0, %s292
      %s307 = sphi 0, %s293
      %s311 = sphi 0, %s311
      %s313 = sphi 0, %s311
      %s314 = sphi 0, %s313
      %s328 = sphi 0, %s314
      %s332 = sphi 0, %s332
      %s334 = sphi 0, %s332
      %s335 = sphi 0, %s334
      %s349 = sphi 0, %s335
      %s353 = sphi 0, %s353
      %s355 = sphi 0, %s353
      %s356 = sphi 0, %s355
      %s370 = sphi 0, %s356
      %s374 = sphi 0, %s374
      %s376 = sphi 0, %s374
      %s377 = sphi 0, %s376
      %s391 = sphi 0, %s377
      %s395 = sphi 0, %s395
      %s397 = sphi 0, %s395
      %s398 = sphi 0, %s397
      %s412 = sphi 0, %s398
      %s416 = sphi 0, %s416
      %s418 = sphi 0, %s416
      %s419 = sphi 0, %s418
      %s433 = sphi 0, %s419
      %s437 = sphi 0, %s437
      %s439 = sphi 0, %s437
      %s440 = sphi 0, %s439
      %s454 = sphi 0, %s440
      %s458 = sphi 0, %s458
      %s460 = sphi 0, %s458
      %s461 = sphi 0, %s460
      %s475 = sphi 0, %s461
      %s479 = sphi 0, %s479
      %s481 = sphi 0, %s479
      %s482 = sphi 0, %s481
      %s496 = sphi 0, %s482
      %s502 = sphi 0, %s504
      %s505 = sphi 0, %s502
      %s506 = sphi 0, %s505
      %s522 = sphi 0, %s506
      %s528 = sphi 0, %s530
      %s531 = sphi 0, %s528
      %s532 = sphi 0, %s531
      %s548 = sphi 0, %s532
      %s554 = sphi 0, %s556
      %s557 = sphi 0, %s554
      %s558 = sphi 0, %s557
      %s574 = sphi 0, %s558
      %s580 = sphi 0, %s582
      %s583 = sphi 0, %s580
      %s584 = sphi 0, %s583
      %s600 = sphi 0, %s584
    $region4: #{tpu_custom_call.1} parent=1 // loop_header_branch
      %49 = sbr.rel (%p47) target = $region8
    $region5: #{tpu_custom_call.1} parent=1 // loop_body
      %s51 = ssub.s32 %s46, 1
      %s52 = ssub.s32 %s46, 2
      %s53 = sadd.s32 %s46, 1
      %s54 = ssub.s32 %s46, %s53
      %p55 = scmp.eq.s32.totalorder %s54, 0
      %s57 = sadd.s32 %s56, 1
      %s58 = scalar_select %p55, %s56, %s57
      %p61 = pneg %p55
      %p62 = scmp.eq.s32.totalorder %s46, 1
      %p63 = por %p61, %p62
      %p64 = scmp.ne.s32.totalorder %s56, %s59
      %p65 = scmp.eq.s32.totalorder %s46, 0
      %p66 = por %p64, %p65
      %p67 = scmp.ne.s32.totalorder %s56, %s59
      %p68 = scmp.eq.s32.totalorder %s51, 1
      %p69 = por %p67, %p68
      %p70 = scmp.ne.s32.totalorder %s59, %s60
      %p71 = scmp.eq.s32.totalorder %s51, 0
      %p72 = por %p70, %p71
      %p73 = scmp.ne.s32.totalorder %s59, %s60
      %p74 = scmp.eq.s32.totalorder %s52, 1
      %p75 = por %p73, %p74
      %p77 = scmp.ne.s32.totalorder %s60, %s76
      %p78 = scmp.eq.s32.totalorder %s52, 0
      %p79 = por %p77, %p78
      %s81 = sadd.s32 %s80, 1
      %p84 = scmp.eq.s32.totalorder %s46, 1
      %p85 = scmp.ne.s32.totalorder %s80, %s82
      %p86 = scmp.eq.s32.totalorder %s46, 0
      %p87 = por %p85, %p86
      %p88 = scmp.ne.s32.totalorder %s80, %s82
      %p89 = scmp.eq.s32.totalorder %s51, 1
      %p90 = por %p88, %p89
      %p91 = scmp.ne.s32.totalorder %s82, %s83
      %p92 = scmp.eq.s32.totalorder %s51, 0
      %p93 = por %p91, %p92
      %p94 = scmp.ne.s32.totalorder %s82, %s83
      %p95 = scmp.eq.s32.totalorder %s52, 1
      %p96 = por %p94, %p95
      %p98 = scmp.ne.s32.totalorder %s83, %s97
      %p99 = scmp.eq.s32.totalorder %s52, 0
      %p100 = por %p98, %p99
      %s102 = sadd.s32 %s101, 1
      %p105 = scmp.eq.s32.totalorder %s46, 1
      %p106 = scmp.ne.s32.totalorder %s101, %s103
      %p107 = scmp.eq.s32.totalorder %s46, 0
      %p108 = por %p106, %p107
      %p109 = scmp.ne.s32.totalorder %s101, %s103
      %p110 = scmp.eq.s32.totalorder %s51, 1
      %p111 = por %p109, %p110
      %p112 = scmp.ne.s32.totalorder %s103, %s104
      %p113 = scmp.eq.s32.totalorder %s51, 0
      %p114 = por %p112, %p113
      %p115 = scmp.ne.s32.totalorder %s103, %s104
      %p116 = scmp.eq.s32.totalorder %s52, 1
      %p117 = por %p115, %p116
      %p119 = scmp.ne.s32.totalorder %s104, %s118
      %p120 = scmp.eq.s32.totalorder %s52, 0
      %p121 = por %p119, %p120
      %s123 = sadd.s32 %s122, 1
      %p126 = scmp.eq.s32.totalorder %s46, 1
      %p127 = scmp.ne.s32.totalorder %s122, %s124
      %p128 = scmp.eq.s32.totalorder %s46, 0
      %p129 = por %p127, %p128
      %p130 = scmp.ne.s32.totalorder %s122, %s124
      %p131 = scmp.eq.s32.totalorder %s51, 1
      %p132 = por %p130, %p131
      %p133 = scmp.ne.s32.totalorder %s124, %s125
      %p134 = scmp.eq.s32.totalorder %s51, 0
      %p135 = por %p133, %p134
      %p136 = scmp.ne.s32.totalorder %s124, %s125
      %p137 = scmp.eq.s32.totalorder %s52, 1
      %p138 = por %p136, %p137
      %p140 = scmp.ne.s32.totalorder %s125, %s139
      %p141 = scmp.eq.s32.totalorder %s52, 0
      %p142 = por %p140, %p141
      %s144 = sadd.s32 %s143, 1
      %p147 = scmp.eq.s32.totalorder %s46, 1
      %p148 = scmp.ne.s32.totalorder %s143, %s145
      %p149 = scmp.eq.s32.totalorder %s46, 0
      %p150 = por %p148, %p149
      %p151 = scmp.ne.s32.totalorder %s143, %s145
      %p152 = scmp.eq.s32.totalorder %s51, 1
      %p153 = por %p151, %p152
      %p154 = scmp.ne.s32.totalorder %s145, %s146
      %p155 = scmp.eq.s32.totalorder %s51, 0
      %p156 = por %p154, %p155
      %p157 = scmp.ne.s32.totalorder %s145, %s146
      %p158 = scmp.eq.s32.totalorder %s52, 1
      %p159 = por %p157, %p158
      %p161 = scmp.ne.s32.totalorder %s146, %s160
      %p162 = scmp.eq.s32.totalorder %s52, 0
      %p163 = por %p161, %p162
      %s165 = sadd.s32 %s164, 1
      %p168 = scmp.eq.s32.totalorder %s46, 1
      %p169 = scmp.ne.s32.totalorder %s164, %s166
      %p170 = scmp.eq.s32.totalorder %s46, 0
      %p171 = por %p169, %p170
      %p172 = scmp.ne.s32.totalorder %s164, %s166
      %p173 = scmp.eq.s32.totalorder %s51, 1
      %p174 = por %p172, %p173
      %p175 = scmp.ne.s32.totalorder %s166, %s167
      %p176 = scmp.eq.s32.totalorder %s51, 0
      %p177 = por %p175, %p176
      %p178 = scmp.ne.s32.totalorder %s166, %s167
      %p179 = scmp.eq.s32.totalorder %s52, 1
      %p180 = por %p178, %p179
      %p182 = scmp.ne.s32.totalorder %s167, %s181
      %p183 = scmp.eq.s32.totalorder %s52, 0
      %p184 = por %p182, %p183
      %s186 = sadd.s32 %s185, 1
      %p189 = scmp.eq.s32.totalorder %s46, 1
      %p190 = scmp.ne.s32.totalorder %s185, %s187
      %p191 = scmp.eq.s32.totalorder %s46, 0
      %p192 = por %p190, %p191
      %p193 = scmp.ne.s32.totalorder %s185, %s187
      %p194 = scmp.eq.s32.totalorder %s51, 1
      %p195 = por %p193, %p194
      %p196 = scmp.ne.s32.totalorder %s187, %s188
      %p197 = scmp.eq.s32.totalorder %s51, 0
      %p198 = por %p196, %p197
      %p199 = scmp.ne.s32.totalorder %s187, %s188
      %p200 = scmp.eq.s32.totalorder %s52, 1
      %p201 = por %p199, %p200
      %p203 = scmp.ne.s32.totalorder %s188, %s202
      %p204 = scmp.eq.s32.totalorder %s52, 0
      %p205 = por %p203, %p204
      %s207 = sadd.s32 %s206, 1
      %p210 = scmp.eq.s32.totalorder %s46, 1
      %p211 = scmp.ne.s32.totalorder %s206, %s208
      %p212 = scmp.eq.s32.totalorder %s46, 0
      %p213 = por %p211, %p212
      %p214 = scmp.ne.s32.totalorder %s206, %s208
      %p215 = scmp.eq.s32.totalorder %s51, 1
      %p216 = por %p214, %p215
      %p217 = scmp.ne.s32.totalorder %s208, %s209
      %p218 = scmp.eq.s32.totalorder %s51, 0
      %p219 = por %p217, %p218
      %p220 = scmp.ne.s32.totalorder %s208, %s209
      %p221 = scmp.eq.s32.totalorder %s52, 1
      %p222 = por %p220, %p221
      %p224 = scmp.ne.s32.totalorder %s209, %s223
      %p225 = scmp.eq.s32.totalorder %s52, 0
      %p226 = por %p224, %p225
      %s228 = sadd.s32 %s227, 1
      %p231 = scmp.eq.s32.totalorder %s46, 1
      %p232 = scmp.ne.s32.totalorder %s227, %s229
      %p233 = scmp.eq.s32.totalorder %s46, 0
      %p234 = por %p232, %p233
      %p235 = scmp.ne.s32.totalorder %s227, %s229
      %p236 = scmp.eq.s32.totalorder %s51, 1
      %p237 = por %p235, %p236
      %p238 = scmp.ne.s32.totalorder %s229, %s230
      %p239 = scmp.eq.s32.totalorder %s51, 0
      %p240 = por %p238, %p239
      %p241 = scmp.ne.s32.totalorder %s229, %s230
      %p242 = scmp.eq.s32.totalorder %s52, 1
      %p243 = por %p241, %p242
      %p245 = scmp.ne.s32.totalorder %s230, %s244
      %p246 = scmp.eq.s32.totalorder %s52, 0
      %p247 = por %p245, %p246
      %s249 = sadd.s32 %s248, 1
      %p252 = scmp.eq.s32.totalorder %s46, 1
      %p253 = scmp.ne.s32.totalorder %s248, %s250
      %p254 = scmp.eq.s32.totalorder %s46, 0
      %p255 = por %p253, %p254
      %p256 = scmp.ne.s32.totalorder %s248, %s250
      %p257 = scmp.eq.s32.totalorder %s51, 1
      %p258 = por %p256, %p257
      %p259 = scmp.ne.s32.totalorder %s250, %s251
      %p260 = scmp.eq.s32.totalorder %s51, 0
      %p261 = por %p259, %p260
      %p262 = scmp.ne.s32.totalorder %s250, %s251
      %p263 = scmp.eq.s32.totalorder %s52, 1
      %p264 = por %p262, %p263
      %p266 = scmp.ne.s32.totalorder %s251, %s265
      %p267 = scmp.eq.s32.totalorder %s52, 0
      %p268 = por %p266, %p267
      %s270 = sadd.s32 %s269, 1
      %p273 = scmp.eq.s32.totalorder %s46, 1
      %p274 = scmp.ne.s32.totalorder %s269, %s271
      %p275 = scmp.eq.s32.totalorder %s46, 0
      %p276 = por %p274, %p275
      %p277 = scmp.ne.s32.totalorder %s269, %s271
      %p278 = scmp.eq.s32.totalorder %s51, 1
      %p279 = por %p277, %p278
      %p280 = scmp.ne.s32.totalorder %s271, %s272
      %p281 = scmp.eq.s32.totalorder %s51, 0
      %p282 = por %p280, %p281
      %p283 = scmp.ne.s32.totalorder %s271, %s272
      %p284 = scmp.eq.s32.totalorder %s52, 1
      %p285 = por %p283, %p284
      %p287 = scmp.ne.s32.totalorder %s272, %s286
      %p288 = scmp.eq.s32.totalorder %s52, 0
      %p289 = por %p287, %p288
      %s291 = sadd.s32 %s290, 1
      %p294 = scmp.eq.s32.totalorder %s46, 1
      %p295 = scmp.ne.s32.totalorder %s290, %s292
      %p296 = scmp.eq.s32.totalorder %s46, 0
      %p297 = por %p295, %p296
      %p298 = scmp.ne.s32.totalorder %s290, %s292
      %p299 = scmp.eq.s32.totalorder %s51, 1
      %p300 = por %p298, %p299
      %p301 = scmp.ne.s32.totalorder %s292, %s293
      %p302 = scmp.eq.s32.totalorder %s51, 0
      %p303 = por %p301, %p302
      %p304 = scmp.ne.s32.totalorder %s292, %s293
      %p305 = scmp.eq.s32.totalorder %s52, 1
      %p306 = por %p304, %p305
      %p308 = scmp.ne.s32.totalorder %s293, %s307
      %p309 = scmp.eq.s32.totalorder %s52, 0
      %p310 = por %p308, %p309
      %s312 = sadd.s32 %s311, 1
      %p315 = scmp.eq.s32.totalorder %s46, 1
      %p316 = scmp.ne.s32.totalorder %s311, %s313
      %p317 = scmp.eq.s32.totalorder %s46, 0
      %p318 = por %p316, %p317
      %p319 = scmp.ne.s32.totalorder %s311, %s313
      %p320 = scmp.eq.s32.totalorder %s51, 1
      %p321 = por %p319, %p320
      %p322 = scmp.ne.s32.totalorder %s313, %s314
      %p323 = scmp.eq.s32.totalorder %s51, 0
      %p324 = por %p322, %p323
      %p325 = scmp.ne.s32.totalorder %s313, %s314
      %p326 = scmp.eq.s32.totalorder %s52, 1
      %p327 = por %p325, %p326
      %p329 = scmp.ne.s32.totalorder %s314, %s328
      %p330 = scmp.eq.s32.totalorder %s52, 0
      %p331 = por %p329, %p330
      %s333 = sadd.s32 %s332, 1
      %p336 = scmp.eq.s32.totalorder %s46, 1
      %p337 = scmp.ne.s32.totalorder %s332, %s334
      %p338 = scmp.eq.s32.totalorder %s46, 0
      %p339 = por %p337, %p338
      %p340 = scmp.ne.s32.totalorder %s332, %s334
      %p341 = scmp.eq.s32.totalorder %s51, 1
      %p342 = por %p340, %p341
      %p343 = scmp.ne.s32.totalorder %s334, %s335
      %p344 = scmp.eq.s32.totalorder %s51, 0
      %p345 = por %p343, %p344
      %p346 = scmp.ne.s32.totalorder %s334, %s335
      %p347 = scmp.eq.s32.totalorder %s52, 1
      %p348 = por %p346, %p347
      %p350 = scmp.ne.s32.totalorder %s335, %s349
      %p351 = scmp.eq.s32.totalorder %s52, 0
      %p352 = por %p350, %p351
      %s354 = sadd.s32 %s353, 1
      %p357 = scmp.eq.s32.totalorder %s46, 1
      %p358 = scmp.ne.s32.totalorder %s353, %s355
      %p359 = scmp.eq.s32.totalorder %s46, 0
      %p360 = por %p358, %p359
      %p361 = scmp.ne.s32.totalorder %s353, %s355
      %p362 = scmp.eq.s32.totalorder %s51, 1
      %p363 = por %p361, %p362
      %p364 = scmp.ne.s32.totalorder %s355, %s356
      %p365 = scmp.eq.s32.totalorder %s51, 0
      %p366 = por %p364, %p365
      %p367 = scmp.ne.s32.totalorder %s355, %s356
      %p368 = scmp.eq.s32.totalorder %s52, 1
      %p369 = por %p367, %p368
      %p371 = scmp.ne.s32.totalorder %s356, %s370
      %p372 = scmp.eq.s32.totalorder %s52, 0
      %p373 = por %p371, %p372
      %s375 = sadd.s32 %s374, 1
      %p378 = scmp.eq.s32.totalorder %s46, 1
      %p379 = scmp.ne.s32.totalorder %s374, %s376
      %p380 = scmp.eq.s32.totalorder %s46, 0
      %p381 = por %p379, %p380
      %p382 = scmp.ne.s32.totalorder %s374, %s376
      %p383 = scmp.eq.s32.totalorder %s51, 1
      %p384 = por %p382, %p383
      %p385 = scmp.ne.s32.totalorder %s376, %s377
      %p386 = scmp.eq.s32.totalorder %s51, 0
      %p387 = por %p385, %p386
      %p388 = scmp.ne.s32.totalorder %s376, %s377
      %p389 = scmp.eq.s32.totalorder %s52, 1
      %p390 = por %p388, %p389
      %p392 = scmp.ne.s32.totalorder %s377, %s391
      %p393 = scmp.eq.s32.totalorder %s52, 0
      %p394 = por %p392, %p393
      %s396 = sadd.s32 %s395, 1
      %p399 = scmp.eq.s32.totalorder %s46, 1
      %p400 = scmp.ne.s32.totalorder %s395, %s397
      %p401 = scmp.eq.s32.totalorder %s46, 0
      %p402 = por %p400, %p401
      %p403 = scmp.ne.s32.totalorder %s395, %s397
      %p404 = scmp.eq.s32.totalorder %s51, 1
      %p405 = por %p403, %p404
      %p406 = scmp.ne.s32.totalorder %s397, %s398
      %p407 = scmp.eq.s32.totalorder %s51, 0
      %p408 = por %p406, %p407
      %p409 = scmp.ne.s32.totalorder %s397, %s398
      %p410 = scmp.eq.s32.totalorder %s52, 1
      %p411 = por %p409, %p410
      %p413 = scmp.ne.s32.totalorder %s398, %s412
      %p414 = scmp.eq.s32.totalorder %s52, 0
      %p415 = por %p413, %p414
      %s417 = sadd.s32 %s416, 1
      %p420 = scmp.eq.s32.totalorder %s46, 1
      %p421 = scmp.ne.s32.totalorder %s416, %s418
      %p422 = scmp.eq.s32.totalorder %s46, 0
      %p423 = por %p421, %p422
      %p424 = scmp.ne.s32.totalorder %s416, %s418
      %p425 = scmp.eq.s32.totalorder %s51, 1
      %p426 = por %p424, %p425
      %p427 = scmp.ne.s32.totalorder %s418, %s419
      %p428 = scmp.eq.s32.totalorder %s51, 0
      %p429 = por %p427, %p428
      %p430 = scmp.ne.s32.totalorder %s418, %s419
      %p431 = scmp.eq.s32.totalorder %s52, 1
      %p432 = por %p430, %p431
      %p434 = scmp.ne.s32.totalorder %s419, %s433
      %p435 = scmp.eq.s32.totalorder %s52, 0
      %p436 = por %p434, %p435
      %s438 = sadd.s32 %s437, 1
      %p441 = scmp.eq.s32.totalorder %s46, 1
      %p442 = scmp.ne.s32.totalorder %s437, %s439
      %p443 = scmp.eq.s32.totalorder %s46, 0
      %p444 = por %p442, %p443
      %p445 = scmp.ne.s32.totalorder %s437, %s439
      %p446 = scmp.eq.s32.totalorder %s51, 1
      %p447 = por %p445, %p446
      %p448 = scmp.ne.s32.totalorder %s439, %s440
      %p449 = scmp.eq.s32.totalorder %s51, 0
      %p450 = por %p448, %p449
      %p451 = scmp.ne.s32.totalorder %s439, %s440
      %p452 = scmp.eq.s32.totalorder %s52, 1
      %p453 = por %p451, %p452
      %p455 = scmp.ne.s32.totalorder %s440, %s454
      %p456 = scmp.eq.s32.totalorder %s52, 0
      %p457 = por %p455, %p456
      %s459 = sadd.s32 %s458, 1
      %p462 = scmp.eq.s32.totalorder %s46, 1
      %p463 = scmp.ne.s32.totalorder %s458, %s460
      %p464 = scmp.eq.s32.totalorder %s46, 0
      %p465 = por %p463, %p464
      %p466 = scmp.ne.s32.totalorder %s458, %s460
      %p467 = scmp.eq.s32.totalorder %s51, 1
      %p468 = por %p466, %p467
      %p469 = scmp.ne.s32.totalorder %s460, %s461
      %p470 = scmp.eq.s32.totalorder %s51, 0
      %p471 = por %p469, %p470
      %p472 = scmp.ne.s32.totalorder %s460, %s461
      %p473 = scmp.eq.s32.totalorder %s52, 1
      %p474 = por %p472, %p473
      %p476 = scmp.ne.s32.totalorder %s461, %s475
      %p477 = scmp.eq.s32.totalorder %s52, 0
      %p478 = por %p476, %p477
      %s480 = sadd.s32 %s479, 1
      %p483 = scmp.eq.s32.totalorder %s46, 1
      %p484 = scmp.ne.s32.totalorder %s479, %s481
      %p485 = scmp.eq.s32.totalorder %s46, 0
      %p486 = por %p484, %p485
      %p487 = scmp.ne.s32.totalorder %s479, %s481
      %p488 = scmp.eq.s32.totalorder %s51, 1
      %p489 = por %p487, %p488
      %p490 = scmp.ne.s32.totalorder %s481, %s482
      %p491 = scmp.eq.s32.totalorder %s51, 0
      %p492 = por %p490, %p491
      %p493 = scmp.ne.s32.totalorder %s481, %s482
      %p494 = scmp.eq.s32.totalorder %s52, 1
      %p495 = por %p493, %p494
      %p497 = scmp.ne.s32.totalorder %s482, %s496
      %p498 = scmp.eq.s32.totalorder %s52, 0
      %p499 = por %p497, %p498
      %s500 = ssub.s32 %s46, %s53
      %p501 = scmp.eq.s32.totalorder %s500, 0
      %s503 = sadd.s32 %s502, 1
      %s504 = scalar_select %p501, %s502, %s503
      %p507 = pneg %p501
      %p508 = scmp.eq.s32.totalorder %s46, 1
      %p509 = por %p507, %p508
      %p510 = scmp.ne.s32.totalorder %s502, %s505
      %p511 = scmp.eq.s32.totalorder %s46, 0
      %p512 = por %p510, %p511
      %p513 = scmp.ne.s32.totalorder %s502, %s505
      %p514 = scmp.eq.s32.totalorder %s51, 1
      %p515 = por %p513, %p514
      %p516 = scmp.ne.s32.totalorder %s505, %s506
      %p517 = scmp.eq.s32.totalorder %s51, 0
      %p518 = por %p516, %p517
      %p519 = scmp.ne.s32.totalorder %s505, %s506
      %p520 = scmp.eq.s32.totalorder %s52, 1
      %p521 = por %p519, %p520
      %p523 = scmp.ne.s32.totalorder %s506, %s522
      %p524 = scmp.eq.s32.totalorder %s52, 0
      %p525 = por %p523, %p524
      %s526 = ssub.s32 %s46, %s53
      %p527 = scmp.eq.s32.totalorder %s526, 0
      %s529 = sadd.s32 %s528, 1
      %s530 = scalar_select %p527, %s528, %s529
      %p533 = pneg %p527
      %p534 = scmp.eq.s32.totalorder %s46, 1
      %p535 = por %p533, %p534
      %p536 = scmp.ne.s32.totalorder %s528, %s531
      %p537 = scmp.eq.s32.totalorder %s46, 0
      %p538 = por %p536, %p537
      %p539 = scmp.ne.s32.totalorder %s528, %s531
      %p540 = scmp.eq.s32.totalorder %s51, 1
      %p541 = por %p539, %p540
      %p542 = scmp.ne.s32.totalorder %s531, %s532
      %p543 = scmp.eq.s32.totalorder %s51, 0
      %p544 = por %p542, %p543
      %p545 = scmp.ne.s32.totalorder %s531, %s532
      %p546 = scmp.eq.s32.totalorder %s52, 1
      %p547 = por %p545, %p546
      %p549 = scmp.ne.s32.totalorder %s532, %s548
      %p550 = scmp.eq.s32.totalorder %s52, 0
      %p551 = por %p549, %p550
      %s552 = ssub.s32 %s46, %s53
      %p553 = scmp.eq.s32.totalorder %s552, 0
      %s555 = sadd.s32 %s554, 1
      %s556 = scalar_select %p553, %s554, %s555
      %p559 = pneg %p553
      %p560 = scmp.eq.s32.totalorder %s46, 1
      %p561 = por %p559, %p560
      %p562 = scmp.ne.s32.totalorder %s554, %s557
      %p563 = scmp.eq.s32.totalorder %s46, 0
      %p564 = por %p562, %p563
      %p565 = scmp.ne.s32.totalorder %s554, %s557
      %p566 = scmp.eq.s32.totalorder %s51, 1
      %p567 = por %p565, %p566
      %p568 = scmp.ne.s32.totalorder %s557, %s558
      %p569 = scmp.eq.s32.totalorder %s51, 0
      %p570 = por %p568, %p569
      %p571 = scmp.ne.s32.totalorder %s557, %s558
      %p572 = scmp.eq.s32.totalorder %s52, 1
      %p573 = por %p571, %p572
      %p575 = scmp.ne.s32.totalorder %s558, %s574
      %p576 = scmp.eq.s32.totalorder %s52, 0
      %p577 = por %p575, %p576
      %s578 = ssub.s32 %s46, %s53
      %p579 = scmp.eq.s32.totalorder %s578, 0
      %s581 = sadd.s32 %s580, 1
      %s582 = scalar_select %p579, %s580, %s581
      %p585 = pneg %p579
      %p586 = scmp.eq.s32.totalorder %s46, 1
      %p587 = por %p585, %p586
      %p588 = scmp.ne.s32.totalorder %s580, %s583
      %p589 = scmp.eq.s32.totalorder %s46, 0
      %p590 = por %p588, %p589
      %p591 = scmp.ne.s32.totalorder %s580, %s583
      %p592 = scmp.eq.s32.totalorder %s51, 1
      %p593 = por %p591, %p592
      %p594 = scmp.ne.s32.totalorder %s583, %s584
      %p595 = scmp.eq.s32.totalorder %s51, 0
      %p596 = por %p594, %p595
      %p597 = scmp.ne.s32.totalorder %s583, %s584
      %p598 = scmp.eq.s32.totalorder %s52, 1
      %p599 = por %p597, %p598
      %p601 = scmp.ne.s32.totalorder %s584, %s600
      %p602 = scmp.eq.s32.totalorder %s52, 0
      %p603 = por %p601, %p602
      %p604 = scmp.le.s32.totalorder 1, %s46
      %p605 = scmp.lt.s32.totalorder %s46, 3
      %p606 = pnand %p604, %p605
      %p607 = pneg %p606
      // Predicated region
      $region9: #{tpu_custom_call.1} parent=5 // pred_check
        _
      $region10: #{tpu_custom_call.1} parent=5 // pred_check_branch
        %609 = sbr.rel (%p606) target = $region12
      $region11: #{tpu_custom_call.1} parent=5 // pred_region
        %s610 = ssub.s32 %s46, 1
        // Predicated region
        $region13: #{tpu_custom_call.1} parent=11 // pred_check
          %p611 = pneg %p93
        $region14: #{tpu_custom_call.1} parent=11 // pred_check_branch
          %613 = sbr.rel (%p611) target = $region16
        $region15: #{tpu_custom_call.1} parent=11 // pred_region
          %s615 = ssub.s32 128, 128
          %616 = vsyncadd [#allocation3], %s615
          %s618 = sshll.u32 [#allocation2], 4
          %s619 = int_to_ptr.vmem [resolvable:$true] %s618
          %621 = dma.hbm_to_vmem [thread:$0]  %s1, 128, %s619, [#allocation3]
        $region16: #{tpu_custom_call.1} parent=11 // pred_fallthru
          _
        // Predicated region
        $region17: #{tpu_custom_call.1} parent=11 // pred_check
          %p622 = pneg %p114
        $region18: #{tpu_custom_call.1} parent=11 // pred_check_branch
          %624 = sbr.rel (%p622) target = $region20
        $region19: #{tpu_custom_call.1} parent=11 // pred_region
          _
        $region20: #{tpu_custom_call.1} parent=11 // pred_fallthru
          _
        // Predicated region
        $region21: #{tpu_custom_call.1} parent=11 // pred_check
          %p625 = pneg %p135
        $region22: #{tpu_custom_call.1} parent=11 // pred_check_branch
          %627 = sbr.rel (%p625) target = $region24
        $region23: #{tpu_custom_call.1} parent=11 // pred_region
          %s629 = ssub.s32 16, 16
          %630 = vsyncadd [#allocation6], %s629
          %s632 = sshll.u32 [#allocation5], 4
          %s633 = int_to_ptr.vmem [resolvable:$true] %s632
          %635 = dma.hbm_to_vmem [thread:$0]  %s3, 16, %s633, [#allocation6]
        $region24: #{tpu_custom_call.1} parent=11 // pred_fallthru
          _
        // Predicated region
        $region25: #{tpu_custom_call.1} parent=11 // pred_check
          %p636 = pneg %p156
        $region26: #{tpu_custom_call.1} parent=11 // pred_check_branch
          %638 = sbr.rel (%p636) target = $region28
        $region27: #{tpu_custom_call.1} parent=11 // pred_region
          %s640 = ssub.s32 16, 16
          %641 = vsyncadd [#allocation6], %s640
          %s643 = sshll.u32 [#allocation7], 4
          %s644 = int_to_ptr.vmem [resolvable:$true] %s643
          %646 = dma.hbm_to_vmem [thread:$0]  %s4, 16, %s644, [#allocation6]
        $region28: #{tpu_custom_call.1} parent=11 // pred_fallthru
          _
        // Predicated region
        $region29: #{tpu_custom_call.1} parent=11 // pred_check
          %p647 = pneg %p177
        $region30: #{tpu_custom_call.1} parent=11 // pred_check_branch
          %649 = sbr.rel (%p647) target = $region32
        $region31: #{tpu_custom_call.1} parent=11 // pred_region
          %s651 = ssub.s32 768, 768
          %652 = vsyncadd [#allocation9], %s651
          %s653 = sshll.u32 [#allocation8], 4
          %s654 = int_to_ptr.vmem [resolvable:$true] %s653
          %659 = dma.hbm_to_vmem [thread:$0]  %s5, 768, %s654, [#allocation9], 128, 128, 8
        $region32: #{tpu_custom_call.1} parent=11 // pred_fallthru
          _
        // Predicated region
        $region33: #{tpu_custom_call.1} parent=11 // pred_check
          %p660 = pneg %p198
        $region34: #{tpu_custom_call.1} parent=11 // pred_check_branch
          %662 = sbr.rel (%p660) target = $region36
        $region35: #{tpu_custom_call.1} parent=11 // pred_region
          _
        $region36: #{tpu_custom_call.1} parent=11 // pred_fallthru
          _
        // Predicated region
        $region37: #{tpu_custom_call.1} parent=11 // pred_check
          %p663 = pneg %p219
        $region38: #{tpu_custom_call.1} parent=11 // pred_check_branch
          %665 = sbr.rel (%p663) target = $region40
        $region39: #{tpu_custom_call.1} parent=11 // pred_region
          %s667 = ssub.s32 16, 16
          %668 = vsyncadd [#allocation9], %s667
          %s670 = sshll.u32 [#allocation10], 4
          %s671 = int_to_ptr.vmem [resolvable:$true] %s670
          %673 = dma.hbm_to_vmem [thread:$0]  %s7, 16, %s671, [#allocation9]
        $region40: #{tpu_custom_call.1} parent=11 // pred_fallthru
          _
        // Predicated region
        $region41: #{tpu_custom_call.1} parent=11 // pred_check
          %p674 = pneg %p240
        $region42: #{tpu_custom_call.1} parent=11 // pred_check_branch
          %676 = sbr.rel (%p674) target = $region44
        $region43: #{tpu_custom_call.1} parent=11 // pred_region
          %s678 = ssub.s32 16, 16
          %679 = vsyncadd [#allocation12], %s678
          %s681 = sshll.u32 [#allocation11], 4
          %s682 = int_to_ptr.vmem [resolvable:$true] %s681
          %684 = dma.hbm_to_vmem [thread:$0]  %s8, 16, %s682, [#allocation12]
        $region44: #{tpu_custom_call.1} parent=11 // pred_fallthru
          _
        // Predicated region
        $region45: #{tpu_custom_call.1} parent=11 // pred_check
          %p685 = pneg %p261
        $region46: #{tpu_custom_call.1} parent=11 // pred_check_branch
          %687 = sbr.rel (%p685) target = $region48
        $region47: #{tpu_custom_call.1} parent=11 // pred_region
          %s689 = ssub.s32 384, 384
          %690 = vsyncadd [#allocation12], %s689
          %s691 = sshll.u32 [#allocation13], 4
          %s692 = int_to_ptr.vmem [resolvable:$true] %s691
          %697 = dma.hbm_to_vmem [thread:$0]  %s9, 384, %s692, [#allocation12], 128, 128, 8
        $region48: #{tpu_custom_call.1} parent=11 // pred_fallthru
          _
        // Predicated region
        $region49: #{tpu_custom_call.1} parent=11 // pred_check
          %p698 = pneg %p282
        $region50: #{tpu_custom_call.1} parent=11 // pred_check_branch
          %700 = sbr.rel (%p698) target = $region52
        $region51: #{tpu_custom_call.1} parent=11 // pred_region
          %s702 = ssub.s32 768, 768
          %703 = vsyncadd [#allocation15], %s702
          %s704 = sshll.u32 [#allocation14], 4
          %s705 = int_to_ptr.vmem [resolvable:$true] %s704
          %710 = dma.hbm_to_vmem [thread:$0]  %s10, 768, %s705, [#allocation15], 128, 128, 8
        $region52: #{tpu_custom_call.1} parent=11 // pred_fallthru
          _
        // Predicated region
        $region53: #{tpu_custom_call.1} parent=11 // pred_check
          %p711 = pneg %p303
        $region54: #{tpu_custom_call.1} parent=11 // pred_check_branch
          %713 = sbr.rel (%p711) target = $region56
        $region55: #{tpu_custom_call.1} parent=11 // pred_region
          %s715 = ssub.s32 16, 16
          %716 = vsyncadd [#allocation15], %s715
          %s718 = sshll.u32 [#allocation16], 4
          %s719 = int_to_ptr.vmem [resolvable:$true] %s718
          %721 = dma.hbm_to_vmem [thread:$0]  %s11, 16, %s719, [#allocation15]
        $region56: #{tpu_custom_call.1} parent=11 // pred_fallthru
          _
        // Predicated region
        $region57: #{tpu_custom_call.1} parent=11 // pred_check
          %p722 = pneg %p324
        $region58: #{tpu_custom_call.1} parent=11 // pred_check_branch
          %724 = sbr.rel (%p722) target = $region60
        $region59: #{tpu_custom_call.1} parent=11 // pred_region
          %s726 = ssub.s32 16, 16
          %727 = vsyncadd [#allocation18], %s726
          %s729 = sshll.u32 [#allocation17], 4
          %s730 = int_to_ptr.vmem [resolvable:$true] %s729
          %732 = dma.hbm_to_vmem [thread:$0]  %s12, 16, %s730, [#allocation18]
        $region60: #{tpu_custom_call.1} parent=11 // pred_fallthru
          _
        // Predicated region
        $region61: #{tpu_custom_call.1} parent=11 // pred_check
          %p733 = pneg %p345
        $region62: #{tpu_custom_call.1} parent=11 // pred_check_branch
          %735 = sbr.rel (%p733) target = $region64
        $region63: #{tpu_custom_call.1} parent=11 // pred_region
          _
        $region64: #{tpu_custom_call.1} parent=11 // pred_fallthru
          _
        // Predicated region
        $region65: #{tpu_custom_call.1} parent=11 // pred_check
          %p736 = pneg %p366
        $region66: #{tpu_custom_call.1} parent=11 // pred_check_branch
          %738 = sbr.rel (%p736) target = $region68
        $region67: #{tpu_custom_call.1} parent=11 // pred_region
          _
        $region68: #{tpu_custom_call.1} parent=11 // pred_fallthru
          _
        // Predicated region
        $region69: #{tpu_custom_call.1} parent=11 // pred_check
          %p739 = pneg %p387
        $region70: #{tpu_custom_call.1} parent=11 // pred_check_branch
          %741 = sbr.rel (%p739) target = $region72
        $region71: #{tpu_custom_call.1} parent=11 // pred_region
          _
        $region72: #{tpu_custom_call.1} parent=11 // pred_fallthru
          _
        // Predicated region
        $region73: #{tpu_custom_call.1} parent=11 // pred_check
          %p742 = pneg %p408
        $region74: #{tpu_custom_call.1} parent=11 // pred_check_branch
          %744 = sbr.rel (%p742) target = $region76
        $region75: #{tpu_custom_call.1} parent=11 // pred_region
          _
        $region76: #{tpu_custom_call.1} parent=11 // pred_fallthru
          _
        // Predicated region
        $region77: #{tpu_custom_call.1} parent=11 // pred_check
          %p745 = pneg %p429
        $region78: #{tpu_custom_call.1} parent=11 // pred_check_branch
          %747 = sbr.rel (%p745) target = $region80
        $region79: #{tpu_custom_call.1} parent=11 // pred_region
          _
        $region80: #{tpu_custom_call.1} parent=11 // pred_fallthru
          _
        // Predicated region
        $region81: #{tpu_custom_call.1} parent=11 // pred_check
          %p748 = pneg %p450
        $region82: #{tpu_custom_call.1} parent=11 // pred_check_branch
          %750 = sbr.rel (%p748) target = $region84
        $region83: #{tpu_custom_call.1} parent=11 // pred_region
          _
        $region84: #{tpu_custom_call.1} parent=11 // pred_fallthru
          _
        // Predicated region
        $region85: #{tpu_custom_call.1} parent=11 // pred_check
          %p751 = pneg %p471
        $region86: #{tpu_custom_call.1} parent=11 // pred_check_branch
          %753 = sbr.rel (%p751) target = $region88
        $region87: #{tpu_custom_call.1} parent=11 // pred_region
          _
        $region88: #{tpu_custom_call.1} parent=11 // pred_fallthru
          _
        // Predicated region
        $region89: #{tpu_custom_call.1} parent=11 // pred_check
          %p754 = pneg %p492
        $region90: #{tpu_custom_call.1} parent=11 // pred_check_branch
          %756 = sbr.rel (%p754) target = $region92
        $region91: #{tpu_custom_call.1} parent=11 // pred_region
          _
        $region92: #{tpu_custom_call.1} parent=11 // pred_fallthru
          _
      $region12: #{tpu_custom_call.1} parent=5 // pred_fallthru
        _
      %p757 = scmp.lt.s32.totalorder %s46, 2
      // Predicated region
      $region93: #{tpu_custom_call.1} parent=5 // pred_check
        %p758 = pneg %p757
      $region94: #{tpu_custom_call.1} parent=5 // pred_check_branch
        %760 = sbr.rel (%p758) target = $region96
      $region95: #{tpu_custom_call.1} parent=5 // pred_region
        // Predicated region
        $region97: #{tpu_custom_call.1} parent=95 // pred_check
          %p761 = pneg %p66
        $region98: #{tpu_custom_call.1} parent=95 // pred_check_branch
          %763 = sbr.rel (%p761) target = $region100
        $region99: #{tpu_custom_call.1} parent=95 // pred_region
          %p764 = scmp.lt.s32.totalorder %s46, 1
          %s765 = scalar_select %p764, %s46, 1
          %s766 = smul.addr %s765, 10
          %s767 = smul.addr %s766, 8
          %s768 = scalar_lea.vmem %s0, %s767
        $region100: #{tpu_custom_call.1} parent=95 // pred_fallthru
          _
      $region96: #{tpu_custom_call.1} parent=5 // pred_fallthru
        _
      %p769 = scmp.le.s32.totalorder 1, %s46
      %p770 = scmp.lt.s32.totalorder %s46, 3
      %p771 = pnand %p769, %p770
      %p772 = pneg %p771
      // Predicated region
      $region101: #{tpu_custom_call.1} parent=5 // pred_check
        _
      $region102: #{tpu_custom_call.1} parent=5 // pred_check_branch
        %774 = sbr.rel (%p771) target = $region104
      $region103: #{tpu_custom_call.1} parent=5 // pred_region
        %s775 = ssub.s32 %s46, 1
        // Predicated region
        $region105: #{tpu_custom_call.1} parent=103 // pred_check
          %p776 = pneg %p93
        $region106: #{tpu_custom_call.1} parent=103 // pred_check_branch
          %778 = sbr.rel (%p776) target = $region108
        $region107: #{tpu_custom_call.1} parent=103 // pred_region
          %779 = dma.done [#allocation3], 128
        $region108: #{tpu_custom_call.1} parent=103 // pred_fallthru
          _
        // Predicated region
        $region109: #{tpu_custom_call.1} parent=103 // pred_check
          %p780 = pneg %p135
        $region110: #{tpu_custom_call.1} parent=103 // pred_check_branch
          %782 = sbr.rel (%p780) target = $region112
        $region111: #{tpu_custom_call.1} parent=103 // pred_region
          %783 = dma.done [#allocation6], 16
        $region112: #{tpu_custom_call.1} parent=103 // pred_fallthru
          _
        // Predicated region
        $region113: #{tpu_custom_call.1} parent=103 // pred_check
          %p784 = pneg %p156
        $region114: #{tpu_custom_call.1} parent=103 // pred_check_branch
          %786 = sbr.rel (%p784) target = $region116
        $region115: #{tpu_custom_call.1} parent=103 // pred_region
          %787 = dma.done [#allocation6], 16
        $region116: #{tpu_custom_call.1} parent=103 // pred_fallthru
          _
        // Predicated region
        $region117: #{tpu_custom_call.1} parent=103 // pred_check
          %p788 = pneg %p177
        $region118: #{tpu_custom_call.1} parent=103 // pred_check_branch
          %790 = sbr.rel (%p788) target = $region120
        $region119: #{tpu_custom_call.1} parent=103 // pred_region
          %791 = dma.done [#allocation9], 768
        $region120: #{tpu_custom_call.1} parent=103 // pred_fallthru
          _
        // Predicated region
        $region121: #{tpu_custom_call.1} parent=103 // pred_check
          %p792 = pneg %p219
        $region122: #{tpu_custom_call.1} parent=103 // pred_check_branch
          %794 = sbr.rel (%p792) target = $region124
        $region123: #{tpu_custom_call.1} parent=103 // pred_region
          %795 = dma.done [#allocation9], 16
        $region124: #{tpu_custom_call.1} parent=103 // pred_fallthru
          _
        // Predicated region
        $region125: #{tpu_custom_call.1} parent=103 // pred_check
          %p796 = pneg %p240
        $region126: #{tpu_custom_call.1} parent=103 // pred_check_branch
          %798 = sbr.rel (%p796) target = $region128
        $region127: #{tpu_custom_call.1} parent=103 // pred_region
          %799 = dma.done [#allocation12], 16
        $region128: #{tpu_custom_call.1} parent=103 // pred_fallthru
          _
        // Predicated region
        $region129: #{tpu_custom_call.1} parent=103 // pred_check
          %p800 = pneg %p261
        $region130: #{tpu_custom_call.1} parent=103 // pred_check_branch
          %802 = sbr.rel (%p800) target = $region132
        $region131: #{tpu_custom_call.1} parent=103 // pred_region
          %803 = dma.done [#allocation12], 384
        $region132: #{tpu_custom_call.1} parent=103 // pred_fallthru
          _
        // Predicated region
        $region133: #{tpu_custom_call.1} parent=103 // pred_check
          %p804 = pneg %p282
        $region134: #{tpu_custom_call.1} parent=103 // pred_check_branch
          %806 = sbr.rel (%p804) target = $region136
        $region135: #{tpu_custom_call.1} parent=103 // pred_region
          %807 = dma.done [#allocation15], 768
        $region136: #{tpu_custom_call.1} parent=103 // pred_fallthru
          _
        // Predicated region
        $region137: #{tpu_custom_call.1} parent=103 // pred_check
          %p808 = pneg %p303
        $region138: #{tpu_custom_call.1} parent=103 // pred_check_branch
          %810 = sbr.rel (%p808) target = $region140
        $region139: #{tpu_custom_call.1} parent=103 // pred_region
          %811 = dma.done [#allocation15], 16
        $region140: #{tpu_custom_call.1} parent=103 // pred_fallthru
          _
        // Predicated region
        $region141: #{tpu_custom_call.1} parent=103 // pred_check
          %p812 = pneg %p324
        $region142: #{tpu_custom_call.1} parent=103 // pred_check_branch
          %814 = sbr.rel (%p812) target = $region144
        $region143: #{tpu_custom_call.1} parent=103 // pred_region
          %815 = dma.done [#allocation18], 16
        $region144: #{tpu_custom_call.1} parent=103 // pred_fallthru
          _
        %p816 = scmp.lt.s32.totalorder %s51, 1
        %s817 = scalar_select %p816, %s51, 1
        %s818 = smul.addr %s817, 10
        %s819 = smul.addr %s818, 8
        %s820 = scalar_lea.vmem %s0, %s819
        %p821 = pneg %p72
        %p822 = pneg %p69
        %p823 = pneg %p93
        %p824 = pneg %p90
        %p825 = pneg %p114
        %p826 = pneg %p111
        %p827 = pneg %p135
        %p828 = pneg %p132
        %p829 = pneg %p156
        %p830 = pneg %p153
        %p831 = pneg %p177
        %p832 = pneg %p174
        %p833 = pneg %p198
        %p834 = pneg %p195
        %p835 = pneg %p219
        %p836 = pneg %p216
        %p837 = pneg %p240
        %p838 = pneg %p237
        %p839 = pneg %p261
        %p840 = pneg %p258
        %p841 = pneg %p282
        %p842 = pneg %p279
        %p843 = pneg %p303
        %p844 = pneg %p300
        %p845 = pneg %p324
        %p846 = pneg %p321
        %p847 = pneg %p345
        %p848 = pneg %p342
        %p849 = pneg %p366
        %p850 = pneg %p363
        %p851 = pneg %p387
        %p852 = pneg %p384
        %p853 = pneg %p408
        %p854 = pneg %p405
        %p855 = pneg %p429
        %p856 = pneg %p426
        %p857 = pneg %p450
        %p858 = pneg %p447
        %p859 = pneg %p471
        %p860 = pneg %p468
        %p861 = pneg %p492
        %p862 = pneg %p489
        %p863 = pneg %p518
        %p864 = pneg %p515
        %s865 = sand.u32 %s505, 1
        %s866 = scalar_lea.sflag [#allocation4], %s865
        %s867 = sand.u32 %s505, 1
        %s868 = smul.addr %s867, 64
        %s869 = scalar_lea.vmem [#allocation19], %s868
        %p870 = pneg %p544
        %p871 = pneg %p541
        %s872 = sand.u32 %s51, 1
        %s873 = scalar_lea.sflag [#allocation21], %s872
        %s874 = sand.u32 %s531, 1
        %s875 = smul.addr %s874, 32
        %s876 = scalar_lea.vmem [#allocation20], %s875
        %p877 = pneg %p570
        %p878 = pneg %p567
        %s879 = sand.u32 %s51, 1
        %s880 = scalar_lea.sflag [#allocation21], %s879
        %s881 = sand.u32 %s557, 1
        %s882 = smul.addr %s881, 16
        %s883 = scalar_lea.vmem [#allocation22], %s882
        %p884 = pneg %p596
        %p885 = pneg %p593
        %s886 = sand.u32 %s583, 1
        %s887 = scalar_lea.sflag [#allocation24], %s886
        %s888 = sand.u32 %s583, 1
        %s889 = smul.addr %s888, 2
        %s890 = scalar_lea.vmem [#allocation23], %s889
        %p891 = scmp.lt.s32.totalorder %s51, 1
        %s892 = scalar_select %p891, %s51, 1
        %s893 = smul.addr %s892, 10
        %s894 = smul.addr %s893, 8
        %s895 = scalar_lea.vmem %s0, %s894
        %v896 = vld [vmem:[%s895] sm:$0xff]
        %v897 = vld [vmem:[%s895 + $0x8] sm:$0xff]
        %v898 = vld [vmem:[%s895 + $0x10] sm:$0xff]
        %v899 = vld [vmem:[%s895 + $0x18] sm:$0xff]
        %v900 = vld [vmem:[%s895 + $0x20] sm:$0xff]
        %v901 = vld [vmem:[%s895 + $0x28] sm:$0xff]
        %v902 = vld [vmem:[%s895 + $0x30] sm:$0xff]
        %v903 = vld [vmem:[%s895 + $0x38] sm:$0xff]
        %v904 = vld [vmem:[%s895 + $0x40] sm:$0xff]
        %v905 = vld [vmem:[%s895 + $0x48] sm:$0xff]
        %v906 = vld [vmem:[#allocation2] sm:$0xff]
        %vm907 = vcmask 64512
        %v909 = vsel %vm907, %v896, 0
        %v912 = vsel %vm907, %v897, 0
        %v915 = vsel %vm907, %v898, 0
        %v918 = vsel %vm907, %v899, 0
        %v921 = vsel %vm907, %v900, 0
        %v924 = vsel %vm907, %v901, 0
        %v927 = vsel %vm907, %v902, 0
        %v930 = vsel %vm907, %v903, 0
        %v933 = vsel %vm907, %v904, 0
        %v936 = vsel %vm907, %v905, 0
        %938 = vmatprep.subr.mxu0 0.0
        %939 = vmatpush1.msra.mxu0 %v906
        %940 = vmatprep.subr.mxu0 0.0
        %941 = vmatpush1.msra.mxu0 0.0
        %942 = vmatprep.subr.mxu0 0.0
        %943 = vmatpush1.msra.mxu0 0.0
        %944 = vmatprep.subr.mxu0 0.0
        %945 = vmatpush1.msra.mxu0 0.0
        %946 = vmatprep.subr.mxu0 0.0
        %947 = vmatpush1.msra.mxu0 0.0
        %948 = vmatprep.subr.mxu0 0.0
        %949 = vmatpush1.msra.mxu0 0.0
        %950 = vmatprep.subr.mxu0 0.0
        %951 = vmatpush1.msra.mxu0 0.0
        %952 = vmatprep.subr.mxu0 0.0
        %953 = vmatpush1.msra.mxu0 0.0
        %954 = vmatprep.subr.mxu0 0.0
        %955 = vmatpush1.msra.mxu0 0.0
        %956 = vmatprep.subr.mxu0 0.0
        %957 = vmatpush1.msra.mxu0 0.0
        %958 = vmatprep.subr.mxu0 0.0
        %959 = vmatpush1.msra.mxu0 0.0
        %960 = vmatprep.subr.mxu0 0.0
        %961 = vmatpush1.msra.mxu0 0.0
        %962 = vmatprep.subr.mxu0 0.0
        %963 = vmatpush1.msra.mxu0 0.0
        %964 = vmatprep.subr.mxu0 0.0
        %965 = vmatpush1.msra.mxu0 0.0
        %966 = vmatprep.subr.mxu0 0.0
        %967 = vmatpush1.msra.mxu0 0.0
        %968 = vmatprep.subr.mxu0 0.0
        %969 = vmatpush1.msra.mxu0 0.0
        %970 = vmatprep.subr.mxu0 0.0
        %971 = vmatpush1.msra.mxu0 0.0
        %972 = vmatprep.subr.mxu0 0.0
        %973 = vmatpush1.msra.mxu0 0.0
        %974 = vmatprep.subr.mxu0 0.0
        %975 = vmatpush1.msra.mxu0 0.0
        %976 = vmatprep.subr.mxu0 0.0
        %977 = vmatpush1.msra.mxu0 0.0
        %978 = vmatprep.subr.mxu0 0.0
        %979 = vmatpush1.msra.mxu0 0.0
        %980 = vmatprep.subr.mxu0 0.0
        %981 = vmatpush1.msra.mxu0 0.0
        %982 = vmatprep.subr.mxu0 0.0
        %983 = vmatpush1.msra.mxu0 0.0
        %984 = vmatprep.subr.mxu0 0.0
        %985 = vmatpush1.msra.mxu0 0.0
        %986 = vmatprep.subr.mxu0 0.0
        %987 = vmatpush1.msra.mxu0 0.0
        %988 = vmatprep.subr.mxu0 0.0
        %989 = vmatpush1.msra.mxu0 0.0
        %990 = vmatprep.subr.mxu0 0.0
        %991 = vmatpush1.msra.mxu0 0.0
        %992 = vmatprep.subr.mxu0 0.0
        %993 = vmatpush1.msra.mxu0 0.0
        %994 = vmatprep.subr.mxu0 0.0
        %995 = vmatpush1.msra.mxu0 0.0
        %996 = vmatprep.subr.mxu0 0.0
        %997 = vmatpush1.msra.mxu0 0.0
        %998 = vmatprep.subr.mxu0 0.0
        %999 = vmatpush1.msra.mxu0 0.0
        %1000 = vmatprep.subr.mxu0 0.0
        %1001 = vmatpush1.msra.mxu0 0.0
        %1002 = vmatprep.mubr.f32.mxu0 0.0
        %1003 = vmatmul.mubr.f32.gmra.mrb[0].mxu0 %v909
        %v1004 = vpop.f32.mrb[0].mxu0
        %v1005 = vadd.f32 0.0, %v1004
        %v1006 = vpop.f32.mrb[0].mxu0
        %1007 = vmatprep.mubr.f32.mxu0 0.0
        %1008 = vmatmul.mubr.f32.gmra.mrb[0].mxu0 %v912
        %v1009 = vpop.f32.mrb[0].mxu0
        %v1010 = vadd.f32 0.0, %v1009
        %v1011 = vpop.f32.mrb[0].mxu0
        %1012 = vmatprep.mubr.f32.mxu0 0.0
        %1013 = vmatmul.mubr.f32.gmra.mrb[0].mxu0 %v915
        %v1014 = vpop.f32.mrb[0].mxu0
        %v1015 = vadd.f32 0.0, %v1014
        %v1016 = vpop.f32.mrb[0].mxu0
        %1017 = vmatprep.mubr.f32.mxu0 0.0
        %1018 = vmatmul.mubr.f32.gmra.mrb[0].mxu0 %v918
        %v1019 = vpop.f32.mrb[0].mxu0
        %v1020 = vadd.f32 0.0, %v1019
        %v1021 = vpop.f32.mrb[0].mxu0
        %1022 = vmatprep.mubr.f32.mxu0 0.0
        %1023 = vmatmul.mubr.f32.gmra.mrb[0].mxu0 %v921
        %v1024 = vpop.f32.mrb[0].mxu0
        %v1025 = vadd.f32 0.0, %v1024
        %v1026 = vpop.f32.mrb[0].mxu0
        %1027 = vmatprep.mubr.f32.mxu0 0.0
        %1028 = vmatmul.mubr.f32.gmra.mrb[0].mxu0 %v924
        %v1029 = vpop.f32.mrb[0].mxu0
        %v1030 = vadd.f32 0.0, %v1029
        %v1031 = vpop.f32.mrb[0].mxu0
        %1032 = vmatprep.mubr.f32.mxu0 0.0
        %1033 = vmatmul.mubr.f32.gmra.mrb[0].mxu0 %v927
        %v1034 = vpop.f32.mrb[0].mxu0
        %v1035 = vadd.f32 0.0, %v1034
        %v1036 = vpop.f32.mrb[0].mxu0
        %1037 = vmatprep.mubr.f32.mxu0 0.0
        %1038 = vmatmul.mubr.f32.gmra.mrb[0].mxu0 %v930
        %v1039 = vpop.f32.mrb[0].mxu0
        %v1040 = vadd.f32 0.0, %v1039
        %v1041 = vpop.f32.mrb[0].mxu0
        %1042 = vmatprep.mubr.f32.mxu0 0.0
        %1043 = vmatmul.mubr.f32.gmra.mrb[0].mxu0 %v933
        %v1044 = vpop.f32.mrb[0].mxu0
        %v1045 = vadd.f32 0.0, %v1044
        %v1046 = vpop.f32.mrb[0].mxu0
        %1047 = vmatprep.mubr.f32.mxu0 0.0
        %1048 = vmatmul.mubr.f32.gmra.mrb[0].mxu0 %v936
        %v1049 = vpop.f32.mrb[0].mxu0
        %v1050 = vadd.f32 0.0, %v1049
        %v1051 = vpop.f32.mrb[0].mxu0
        %1052 = vdwg.mxu0
        %v1053 = vld [vmem:[%s2] sm:$0xff]
        %v1054 = vld [vmem:[%s2 + $0x8] sm:$0xff]
        %v1055 = vlaneseq
        %v1056 = vshrl.u32 %v1055, 7
        %v1057 = vsub.s32 0, %v1056
        %v1058 = vrot.slane %v1053, %v1057
        %v1059 = vmul.f32 %v1058, %v1005
        %v1060 = vmul.f32 %v1058, %v1010
        %v1061 = vmul.f32 %v1058, %v1015
        %v1062 = vmul.f32 %v1058, %v1020
        %v1063 = vmul.f32 %v1058, %v1025
        %v1064 = vmul.f32 %v1058, %v1030
        %v1065 = vmul.f32 %v1058, %v1035
        %v1066 = vmul.f32 %v1058, %v1040
        %v1067 = vmul.f32 %v1058, %v1045
        %v1068 = vlaneseq
        %v1069 = vshrl.u32 %v1068, 7
        %v1070 = vsub.s32 1, %v1069
        %v1071 = vrot.slane %v1053, %v1070
        %v1072 = vmul.f32 %v1071, %v1005
        %v1073 = vmul.f32 %v1071, %v1010
        %v1074 = vmul.f32 %v1071, %v1015
        %v1075 = vmul.f32 %v1071, %v1020
        %v1076 = vmul.f32 %v1071, %v1025
        %v1077 = vmul.f32 %v1071, %v1030
        %v1078 = vmul.f32 %v1071, %v1035
        %v1079 = vmul.f32 %v1071, %v1040
        %v1080 = vmul.f32 %v1071, %v1045
        %vm1090 = vcmask 1046528
        %v1091 = vrot.slane %v1072, 1
        %v1092 = vrot.slane %v1073, 1
        %v1093 = vsel %vm1090, %v1091, %v1092
        %v1094 = vrot.slane %v1074, 1
        %v1095 = vsel %vm1090, %v1092, %v1094
        %v1096 = vrot.slane %v1075, 1
        %v1097 = vsel %vm1090, %v1094, %v1096
        %v1098 = vrot.slane %v1076, 1
        %v1099 = vsel %vm1090, %v1096, %v1098
        %v1100 = vrot.slane %v1077, 1
        %v1101 = vsel %vm1090, %v1098, %v1100
        %v1102 = vrot.slane %v1078, 1
        %v1103 = vsel %vm1090, %v1100, %v1102
        %v1104 = vrot.slane %v1079, 1
        %v1105 = vsel %vm1090, %v1102, %v1104
        %v1106 = vrot.slane %v1080, 1
        %v1107 = vsel %vm1090, %v1104, %v1106
        %v1117 = vadd.f32 %v1059, %v1093
        %v1118 = vadd.f32 %v1060, %v1095
        %v1119 = vadd.f32 %v1061, %v1097
        %v1120 = vadd.f32 %v1062, %v1099
        %v1121 = vadd.f32 %v1063, %v1101
        %v1122 = vadd.f32 %v1064, %v1103
        %v1123 = vadd.f32 %v1065, %v1105
        %v1124 = vadd.f32 %v1066, %v1107
        %v1125 = vadd.f32 %v1067, %v1106
        %v1126 = vlaneseq
        %v1127 = vshrl.u32 %v1126, 7
        %v1128 = vsub.s32 2, %v1127
        %v1129 = vrot.slane %v1053, %v1128
        %v1130 = vmul.f32 %v1129, %v1005
        %v1131 = vmul.f32 %v1129, %v1010
        %v1132 = vmul.f32 %v1129, %v1015
        %v1133 = vmul.f32 %v1129, %v1020
        %v1134 = vmul.f32 %v1129, %v1025
        %v1135 = vmul.f32 %v1129, %v1030
        %v1136 = vmul.f32 %v1129, %v1035
        %v1137 = vmul.f32 %v1129, %v1040
        %v1138 = vmul.f32 %v1129, %v1045
        %vm1148 = vcmask 1045504
        %v1149 = vrot.slane %v1130, 2
        %v1150 = vrot.slane %v1131, 2
        %v1151 = vsel %vm1148, %v1149, %v1150
        %v1152 = vrot.slane %v1132, 2
        %v1153 = vsel %vm1148, %v1150, %v1152
        %v1154 = vrot.slane %v1133, 2
        %v1155 = vsel %vm1148, %v1152, %v1154
        %v1156 = vrot.slane %v1134, 2
        %v1157 = vsel %vm1148, %v1154, %v1156
        %v1158 = vrot.slane %v1135, 2
        %v1159 = vsel %vm1148, %v1156, %v1158
        %v1160 = vrot.slane %v1136, 2
        %v1161 = vsel %vm1148, %v1158, %v1160
        %v1162 = vrot.slane %v1137, 2
        %v1163 = vsel %vm1148, %v1160, %v1162
        %v1164 = vrot.slane %v1138, 2
        %v1165 = vsel %vm1148, %v1162, %v1164
        %v1175 = vadd.f32 %v1117, %v1151
        %v1176 = vadd.f32 %v1118, %v1153
        %v1177 = vadd.f32 %v1119, %v1155
        %v1178 = vadd.f32 %v1120, %v1157
        %v1179 = vadd.f32 %v1121, %v1159
        %v1180 = vadd.f32 %v1122, %v1161
        %v1181 = vadd.f32 %v1123, %v1163
        %v1182 = vadd.f32 %v1124, %v1165
        %v1183 = vadd.f32 %v1125, %v1164
        %v1184 = vlaneseq
        %v1185 = vshrl.u32 %v1184, 7
        %v1186 = vsub.s32 3, %v1185
        %v1187 = vrot.slane %v1053, %v1186
        %v1188 = vmul.f32 %v1187, %v1005
        %v1189 = vmul.f32 %v1187, %v1010
        %v1190 = vmul.f32 %v1187, %v1015
        %v1191 = vmul.f32 %v1187, %v1020
        %v1192 = vmul.f32 %v1187, %v1025
        %v1193 = vmul.f32 %v1187, %v1030
        %v1194 = vmul.f32 %v1187, %v1035
        %v1195 = vmul.f32 %v1187, %v1040
        %v1196 = vmul.f32 %v1187, %v1045
        %vm1206 = vcmask 1044480
        %v1207 = vrot.slane %v1188, 3
        %v1208 = vrot.slane %v1189, 3
        %v1209 = vsel %vm1206, %v1207, %v1208
        %v1210 = vrot.slane %v1190, 3
        %v1211 = vsel %vm1206, %v1208, %v1210
        %v1212 = vrot.slane %v1191, 3
        %v1213 = vsel %vm1206, %v1210, %v1212
        %v1214 = vrot.slane %v1192, 3
        %v1215 = vsel %vm1206, %v1212, %v1214
        %v1216 = vrot.slane %v1193, 3
        %v1217 = vsel %vm1206, %v1214, %v1216
        %v1218 = vrot.slane %v1194, 3
        %v1219 = vsel %vm1206, %v1216, %v1218
        %v1220 = vrot.slane %v1195, 3
        %v1221 = vsel %vm1206, %v1218, %v1220
        %v1222 = vrot.slane %v1196, 3
        %v1223 = vsel %vm1206, %v1220, %v1222
        %v1233 = vadd.f32 %v1175, %v1209
        %v1234 = vadd.f32 %v1176, %v1211
        %v1235 = vadd.f32 %v1177, %v1213
        %v1236 = vadd.f32 %v1178, %v1215
        %v1237 = vadd.f32 %v1179, %v1217
        %v1238 = vadd.f32 %v1180, %v1219
        %v1239 = vadd.f32 %v1181, %v1221
        %v1240 = vadd.f32 %v1182, %v1223
        %v1241 = vadd.f32 %v1183, %v1222
        %v1242 = vlaneseq
        %v1243 = vshrl.u32 %v1242, 7
        %v1244 = vsub.s32 4, %v1243
        %v1245 = vrot.slane %v1053, %v1244
        %v1246 = vmul.f32 %v1245, %v1005
        %v1247 = vmul.f32 %v1245, %v1010
        %v1248 = vmul.f32 %v1245, %v1015
        %v1249 = vmul.f32 %v1245, %v1020
        %v1250 = vmul.f32 %v1245, %v1025
        %v1251 = vmul.f32 %v1245, %v1030
        %v1252 = vmul.f32 %v1245, %v1035
        %v1253 = vmul.f32 %v1245, %v1040
        %v1254 = vmul.f32 %v1245, %v1045
        %vm1264 = vcmask 1043456
        %v1265 = vrot.slane %v1246, 4
        %v1266 = vrot.slane %v1247, 4
        %v1267 = vsel %vm1264, %v1265, %v1266
        %v1268 = vrot.slane %v1248, 4
        %v1269 = vsel %vm1264, %v1266, %v1268
        %v1270 = vrot.slane %v1249, 4
        %v1271 = vsel %vm1264, %v1268, %v1270
        %v1272 = vrot.slane %v1250, 4
        %v1273 = vsel %vm1264, %v1270, %v1272
        %v1274 = vrot.slane %v1251, 4
        %v1275 = vsel %vm1264, %v1272, %v1274
        %v1276 = vrot.slane %v1252, 4
        %v1277 = vsel %vm1264, %v1274, %v1276
        %v1278 = vrot.slane %v1253, 4
        %v1279 = vsel %vm1264, %v1276, %v1278
        %v1280 = vrot.slane %v1254, 4
        %v1281 = vsel %vm1264, %v1278, %v1280
        %v1291 = vadd.f32 %v1233, %v1267
        %v1292 = vadd.f32 %v1234, %v1269
        %v1293 = vadd.f32 %v1235, %v1271
        %v1294 = vadd.f32 %v1236, %v1273
        %v1295 = vadd.f32 %v1237, %v1275
        %v1296 = vadd.f32 %v1238, %v1277
        %v1297 = vadd.f32 %v1239, %v1279
        %v1298 = vadd.f32 %v1240, %v1281
        %v1299 = vadd.f32 %v1241, %v1280
        %v1300 = vlaneseq
        %v1301 = vshrl.u32 %v1300, 7
        %v1302 = vsub.s32 5, %v1301
        %v1303 = vrot.slane %v1053, %v1302
        %v1304 = vmul.f32 %v1303, %v1005
        %v1305 = vmul.f32 %v1303, %v1010
        %v1306 = vmul.f32 %v1303, %v1015
        %v1307 = vmul.f32 %v1303, %v1020
        %v1308 = vmul.f32 %v1303, %v1025
        %v1309 = vmul.f32 %v1303, %v1030
        %v1310 = vmul.f32 %v1303, %v1035
        %v1311 = vmul.f32 %v1303, %v1040
        %v1312 = vmul.f32 %v1303, %v1045
        %vm1322 = vcmask 1042432
        %v1323 = vrot.slane %v1304, 5
        %v1324 = vrot.slane %v1305, 5
        %v1325 = vsel %vm1322, %v1323, %v1324
        %v1326 = vrot.slane %v1306, 5
        %v1327 = vsel %vm1322, %v1324, %v1326
        %v1328 = vrot.slane %v1307, 5
        %v1329 = vsel %vm1322, %v1326, %v1328
        %v1330 = vrot.slane %v1308, 5
        %v1331 = vsel %vm1322, %v1328, %v1330
        %v1332 = vrot.slane %v1309, 5
        %v1333 = vsel %vm1322, %v1330, %v1332
        %v1334 = vrot.slane %v1310, 5
        %v1335 = vsel %vm1322, %v1332, %v1334
        %v1336 = vrot.slane %v1311, 5
        %v1337 = vsel %vm1322, %v1334, %v1336
        %v1338 = vrot.slane %v1312, 5
        %v1339 = vsel %vm1322, %v1336, %v1338
        %v1349 = vadd.f32 %v1291, %v1325
        %v1350 = vadd.f32 %v1292, %v1327
        %v1351 = vadd.f32 %v1293, %v1329
        %v1352 = vadd.f32 %v1294, %v1331
        %v1353 = vadd.f32 %v1295, %v1333
        %v1354 = vadd.f32 %v1296, %v1335
        %v1355 = vadd.f32 %v1297, %v1337
        %v1356 = vadd.f32 %v1298, %v1339
        %v1357 = vadd.f32 %v1299, %v1338
        %v1358 = vlaneseq
        %v1359 = vshrl.u32 %v1358, 7
        %v1360 = vsub.s32 6, %v1359
        %v1361 = vrot.slane %v1053, %v1360
        %v1362 = vmul.f32 %v1361, %v1005
        %v1363 = vmul.f32 %v1361, %v1010
        %v1364 = vmul.f32 %v1361, %v1015
        %v1365 = vmul.f32 %v1361, %v1020
        %v1366 = vmul.f32 %v1361, %v1025
        %v1367 = vmul.f32 %v1361, %v1030
        %v1368 = vmul.f32 %v1361, %v1035
        %v1369 = vmul.f32 %v1361, %v1040
        %v1370 = vmul.f32 %v1361, %v1045
        %vm1380 = vcmask 1041408
        %v1381 = vrot.slane %v1362, 6
        %v1382 = vrot.slane %v1363, 6
        %v1383 = vsel %vm1380, %v1381, %v1382
        %v1384 = vrot.slane %v1364, 6
        %v1385 = vsel %vm1380, %v1382, %v1384
        %v1386 = vrot.slane %v1365, 6
        %v1387 = vsel %vm1380, %v1384, %v1386
        %v1388 = vrot.slane %v1366, 6
        %v1389 = vsel %vm1380, %v1386, %v1388
        %v1390 = vrot.slane %v1367, 6
        %v1391 = vsel %vm1380, %v1388, %v1390
        %v1392 = vrot.slane %v1368, 6
        %v1393 = vsel %vm1380, %v1390, %v1392
        %v1394 = vrot.slane %v1369, 6
        %v1395 = vsel %vm1380, %v1392, %v1394
        %v1396 = vrot.slane %v1370, 6
        %v1397 = vsel %vm1380, %v1394, %v1396
        %v1407 = vadd.f32 %v1349, %v1383
        %v1408 = vadd.f32 %v1350, %v1385
        %v1409 = vadd.f32 %v1351, %v1387
        %v1410 = vadd.f32 %v1352, %v1389
        %v1411 = vadd.f32 %v1353, %v1391
        %v1412 = vadd.f32 %v1354, %v1393
        %v1413 = vadd.f32 %v1355, %v1395
        %v1414 = vadd.f32 %v1356, %v1397
        %v1415 = vadd.f32 %v1357, %v1396
        %v1416 = vlaneseq
        %v1417 = vshrl.u32 %v1416, 7
        %v1418 = vsub.s32 7, %v1417
        %v1419 = vrot.slane %v1053, %v1418
        %v1420 = vmul.f32 %v1419, %v1005
        %v1421 = vmul.f32 %v1419, %v1010
        %v1422 = vmul.f32 %v1419, %v1015
        %v1423 = vmul.f32 %v1419, %v1020
        %v1424 = vmul.f32 %v1419, %v1025
        %v1425 = vmul.f32 %v1419, %v1030
        %v1426 = vmul.f32 %v1419, %v1035
        %v1427 = vmul.f32 %v1419, %v1040
        %v1428 = vmul.f32 %v1419, %v1045
        %vm1438 = vcmask 1040384
        %v1439 = vrot.slane %v1420, 7
        %v1440 = vrot.slane %v1421, 7
        %v1441 = vsel %vm1438, %v1439, %v1440
        %v1442 = vrot.slane %v1422, 7
        %v1443 = vsel %vm1438, %v1440, %v1442
        %v1444 = vrot.slane %v1423, 7
        %v1445 = vsel %vm1438, %v1442, %v1444
        %v1446 = vrot.slane %v1424, 7
        %v1447 = vsel %vm1438, %v1444, %v1446
        %v1448 = vrot.slane %v1425, 7
        %v1449 = vsel %vm1438, %v1446, %v1448
        %v1450 = vrot.slane %v1426, 7
        %v1451 = vsel %vm1438, %v1448, %v1450
        %v1452 = vrot.slane %v1427, 7
        %v1453 = vsel %vm1438, %v1450, %v1452
        %v1454 = vrot.slane %v1428, 7
        %v1455 = vsel %vm1438, %v1452, %v1454
        %v1465 = vadd.f32 %v1407, %v1441
        %v1466 = vadd.f32 %v1408, %v1443
        %v1467 = vadd.f32 %v1409, %v1445
        %v1468 = vadd.f32 %v1410, %v1447
        %v1469 = vadd.f32 %v1411, %v1449
        %v1470 = vadd.f32 %v1412, %v1451
        %v1471 = vadd.f32 %v1413, %v1453
        %v1472 = vadd.f32 %v1414, %v1455
        %v1473 = vadd.f32 %v1415, %v1454
        %v1474 = vlaneseq
        %v1475 = vshrl.u32 %v1474, 7
        %v1476 = vsub.s32 0, %v1475
        %v1477 = vrot.slane %v1054, %v1476
        %v1478 = vmul.f32 %v1477, %v1010
        %v1479 = vmul.f32 %v1477, %v1015
        %v1480 = vmul.f32 %v1477, %v1020
        %v1481 = vmul.f32 %v1477, %v1025
        %v1482 = vmul.f32 %v1477, %v1030
        %v1483 = vmul.f32 %v1477, %v1035
        %v1484 = vmul.f32 %v1477, %v1040
        %v1485 = vmul.f32 %v1477, %v1045
        %v1486 = vmul.f32 %v1477, %v1050
        %v1487 = vadd.f32 %v1465, %v1478
        %v1488 = vadd.f32 %v1466, %v1479
        %v1489 = vadd.f32 %v1467, %v1480
        %v1490 = vadd.f32 %v1468, %v1481
        %v1491 = vadd.f32 %v1469, %v1482
        %v1492 = vadd.f32 %v1470, %v1483
        %v1493 = vadd.f32 %v1471, %v1484
        %v1494 = vadd.f32 %v1472, %v1485
        %v1495 = vadd.f32 %v1473, %v1486
        %v1496 = vlaneseq
        %v1497 = vshrl.u32 %v1496, 7
        %v1498 = vsub.s32 1, %v1497
        %v1499 = vrot.slane %v1054, %v1498
        %v1500 = vmul.f32 %v1499, %v1010
        %v1501 = vmul.f32 %v1499, %v1015
        %v1502 = vmul.f32 %v1499, %v1020
        %v1503 = vmul.f32 %v1499, %v1025
        %v1504 = vmul.f32 %v1499, %v1030
        %v1505 = vmul.f32 %v1499, %v1035
        %v1506 = vmul.f32 %v1499, %v1040
        %v1507 = vmul.f32 %v1499, %v1045
        %v1508 = vmul.f32 %v1499, %v1050
        %v1518 = vrot.slane %v1500, 1
        %v1519 = vrot.slane %v1501, 1
        %v1520 = vsel %vm1090, %v1518, %v1519
        %v1521 = vrot.slane %v1502, 1
        %v1522 = vsel %vm1090, %v1519, %v1521
        %v1523 = vrot.slane %v1503, 1
        %v1524 = vsel %vm1090, %v1521, %v1523
        %v1525 = vrot.slane %v1504, 1
        %v1526 = vsel %vm1090, %v1523, %v1525
        %v1527 = vrot.slane %v1505, 1
        %v1528 = vsel %vm1090, %v1525, %v1527
        %v1529 = vrot.slane %v1506, 1
        %v1530 = vsel %vm1090, %v1527, %v1529
        %v1531 = vrot.slane %v1507, 1
        %v1532 = vsel %vm1090, %v1529, %v1531
        %v1533 = vrot.slane %v1508, 1
        %v1534 = vsel %vm1090, %v1531, %v1533
        %v1544 = vadd.f32 %v1487, %v1520
        %v1545 = vadd.f32 %v1488, %v1522
        %v1546 = vadd.f32 %v1489, %v1524
        %v1547 = vadd.f32 %v1490, %v1526
        %v1548 = vadd.f32 %v1491, %v1528
        %v1549 = vadd.f32 %v1492, %v1530
        %v1550 = vadd.f32 %v1493, %v1532
        %v1551 = vadd.f32 %v1494, %v1534
        %v1552 = vadd.f32 %v1495, %v1533
        %v1553 = vlaneseq
        %v1554 = vshrl.u32 %v1553, 7
        %v1555 = vsub.s32 2, %v1554
        %v1556 = vrot.slane %v1054, %v1555
        %v1557 = vmul.f32 %v1556, %v1010
        %v1558 = vmul.f32 %v1556, %v1015
        %v1559 = vmul.f32 %v1556, %v1020
        %v1560 = vmul.f32 %v1556, %v1025
        %v1561 = vmul.f32 %v1556, %v1030
        %v1562 = vmul.f32 %v1556, %v1035
        %v1563 = vmul.f32 %v1556, %v1040
        %v1564 = vmul.f32 %v1556, %v1045
        %v1565 = vmul.f32 %v1556, %v1050
        %v1575 = vrot.slane %v1557, 2
        %v1576 = vrot.slane %v1558, 2
        %v1577 = vsel %vm1148, %v1575, %v1576
        %v1578 = vrot.slane %v1559, 2
        %v1579 = vsel %vm1148, %v1576, %v1578
        %v1580 = vrot.slane %v1560, 2
        %v1581 = vsel %vm1148, %v1578, %v1580
        %v1582 = vrot.slane %v1561, 2
        %v1583 = vsel %vm1148, %v1580, %v1582
        %v1584 = vrot.slane %v1562, 2
        %v1585 = vsel %vm1148, %v1582, %v1584
        %v1586 = vrot.slane %v1563, 2
        %v1587 = vsel %vm1148, %v1584, %v1586
        %v1588 = vrot.slane %v1564, 2
        %v1589 = vsel %vm1148, %v1586, %v1588
        %v1590 = vrot.slane %v1565, 2
        %v1591 = vsel %vm1148, %v1588, %v1590
        %v1601 = vadd.f32 %v1544, %v1577
        %v1602 = vadd.f32 %v1545, %v1579
        %v1603 = vadd.f32 %v1546, %v1581
        %v1604 = vadd.f32 %v1547, %v1583
        %v1605 = vadd.f32 %v1548, %v1585
        %v1606 = vadd.f32 %v1549, %v1587
        %v1607 = vadd.f32 %v1550, %v1589
        %v1608 = vadd.f32 %v1551, %v1591
        %v1609 = vadd.f32 %v1552, %v1590
        %v1610 = vlaneseq
        %v1611 = vshrl.u32 %v1610, 7
        %v1612 = vsub.s32 3, %v1611
        %v1613 = vrot.slane %v1054, %v1612
        %v1614 = vmul.f32 %v1613, %v1010
        %v1615 = vmul.f32 %v1613, %v1015
        %v1616 = vmul.f32 %v1613, %v1020
        %v1617 = vmul.f32 %v1613, %v1025
        %v1618 = vmul.f32 %v1613, %v1030
        %v1619 = vmul.f32 %v1613, %v1035
        %v1620 = vmul.f32 %v1613, %v1040
        %v1621 = vmul.f32 %v1613, %v1045
        %v1622 = vmul.f32 %v1613, %v1050
        %v1632 = vrot.slane %v1614, 3
        %v1633 = vrot.slane %v1615, 3
        %v1634 = vsel %vm1206, %v1632, %v1633
        %v1635 = vrot.slane %v1616, 3
        %v1636 = vsel %vm1206, %v1633, %v1635
        %v1637 = vrot.slane %v1617, 3
        %v1638 = vsel %vm1206, %v1635, %v1637
        %v1639 = vrot.slane %v1618, 3
        %v1640 = vsel %vm1206, %v1637, %v1639
        %v1641 = vrot.slane %v1619, 3
        %v1642 = vsel %vm1206, %v1639, %v1641
        %v1643 = vrot.slane %v1620, 3
        %v1644 = vsel %vm1206, %v1641, %v1643
        %v1645 = vrot.slane %v1621, 3
        %v1646 = vsel %vm1206, %v1643, %v1645
        %v1647 = vrot.slane %v1622, 3
        %v1648 = vsel %vm1206, %v1645, %v1647
        %v1658 = vadd.f32 %v1601, %v1634
        %v1659 = vadd.f32 %v1602, %v1636
        %v1660 = vadd.f32 %v1603, %v1638
        %v1661 = vadd.f32 %v1604, %v1640
        %v1662 = vadd.f32 %v1605, %v1642
        %v1663 = vadd.f32 %v1606, %v1644
        %v1664 = vadd.f32 %v1607, %v1646
        %v1665 = vadd.f32 %v1608, %v1648
        %v1666 = vadd.f32 %v1609, %v1647
        %v1667 = vlaneseq
        %v1668 = vshrl.u32 %v1667, 7
        %v1669 = vsub.s32 4, %v1668
        %v1670 = vrot.slane %v1054, %v1669
        %v1671 = vmul.f32 %v1670, %v1010
        %v1672 = vmul.f32 %v1670, %v1015
        %v1673 = vmul.f32 %v1670, %v1020
        %v1674 = vmul.f32 %v1670, %v1025
        %v1675 = vmul.f32 %v1670, %v1030
        %v1676 = vmul.f32 %v1670, %v1035
        %v1677 = vmul.f32 %v1670, %v1040
        %v1678 = vmul.f32 %v1670, %v1045
        %v1679 = vmul.f32 %v1670, %v1050
        %v1689 = vrot.slane %v1671, 4
        %v1690 = vrot.slane %v1672, 4
        %v1691 = vsel %vm1264, %v1689, %v1690
        %v1692 = vrot.slane %v1673, 4
        %v1693 = vsel %vm1264, %v1690, %v1692
        %v1694 = vrot.slane %v1674, 4
        %v1695 = vsel %vm1264, %v1692, %v1694
        %v1696 = vrot.slane %v1675, 4
        %v1697 = vsel %vm1264, %v1694, %v1696
        %v1698 = vrot.slane %v1676, 4
        %v1699 = vsel %vm1264, %v1696, %v1698
        %v1700 = vrot.slane %v1677, 4
        %v1701 = vsel %vm1264, %v1698, %v1700
        %v1702 = vrot.slane %v1678, 4
        %v1703 = vsel %vm1264, %v1700, %v1702
        %v1704 = vrot.slane %v1679, 4
        %v1705 = vsel %vm1264, %v1702, %v1704
        %v1715 = vadd.f32 %v1658, %v1691
        %v1716 = vadd.f32 %v1659, %v1693
        %v1717 = vadd.f32 %v1660, %v1695
        %v1718 = vadd.f32 %v1661, %v1697
        %v1719 = vadd.f32 %v1662, %v1699
        %v1720 = vadd.f32 %v1663, %v1701
        %v1721 = vadd.f32 %v1664, %v1703
        %v1722 = vadd.f32 %v1665, %v1705
        %v1723 = vadd.f32 %v1666, %v1704
        %v1724 = vlaneseq
        %v1725 = vshrl.u32 %v1724, 7
        %v1726 = vsub.s32 5, %v1725
        %v1727 = vrot.slane %v1054, %v1726
        %v1728 = vmul.f32 %v1727, %v1010
        %v1729 = vmul.f32 %v1727, %v1015
        %v1730 = vmul.f32 %v1727, %v1020
        %v1731 = vmul.f32 %v1727, %v1025
        %v1732 = vmul.f32 %v1727, %v1030
        %v1733 = vmul.f32 %v1727, %v1035
        %v1734 = vmul.f32 %v1727, %v1040
        %v1735 = vmul.f32 %v1727, %v1045
        %v1736 = vmul.f32 %v1727, %v1050
        %v1746 = vrot.slane %v1728, 5
        %v1747 = vrot.slane %v1729, 5
        %v1748 = vsel %vm1322, %v1746, %v1747
        %v1749 = vrot.slane %v1730, 5
        %v1750 = vsel %vm1322, %v1747, %v1749
        %v1751 = vrot.slane %v1731, 5
        %v1752 = vsel %vm1322, %v1749, %v1751
        %v1753 = vrot.slane %v1732, 5
        %v1754 = vsel %vm1322, %v1751, %v1753
        %v1755 = vrot.slane %v1733, 5
        %v1756 = vsel %vm1322, %v1753, %v1755
        %v1757 = vrot.slane %v1734, 5
        %v1758 = vsel %vm1322, %v1755, %v1757
        %v1759 = vrot.slane %v1735, 5
        %v1760 = vsel %vm1322, %v1757, %v1759
        %v1761 = vrot.slane %v1736, 5
        %v1762 = vsel %vm1322, %v1759, %v1761
        %v1772 = vadd.f32 %v1715, %v1748
        %v1773 = vadd.f32 %v1716, %v1750
        %v1774 = vadd.f32 %v1717, %v1752
        %v1775 = vadd.f32 %v1718, %v1754
        %v1776 = vadd.f32 %v1719, %v1756
        %v1777 = vadd.f32 %v1720, %v1758
        %v1778 = vadd.f32 %v1721, %v1760
        %v1779 = vadd.f32 %v1722, %v1762
        %v1780 = vadd.f32 %v1723, %v1761
        %v1781 = vlaneseq
        %v1782 = vshrl.u32 %v1781, 7
        %v1783 = vsub.s32 6, %v1782
        %v1784 = vrot.slane %v1054, %v1783
        %v1785 = vmul.f32 %v1784, %v1010
        %v1786 = vmul.f32 %v1784, %v1015
        %v1787 = vmul.f32 %v1784, %v1020
        %v1788 = vmul.f32 %v1784, %v1025
        %v1789 = vmul.f32 %v1784, %v1030
        %v1790 = vmul.f32 %v1784, %v1035
        %v1791 = vmul.f32 %v1784, %v1040
        %v1792 = vmul.f32 %v1784, %v1045
        %v1793 = vmul.f32 %v1784, %v1050
        %v1803 = vrot.slane %v1785, 6
        %v1804 = vrot.slane %v1786, 6
        %v1805 = vsel %vm1380, %v1803, %v1804
        %v1806 = vrot.slane %v1787, 6
        %v1807 = vsel %vm1380, %v1804, %v1806
        %v1808 = vrot.slane %v1788, 6
        %v1809 = vsel %vm1380, %v1806, %v1808
        %v1810 = vrot.slane %v1789, 6
        %v1811 = vsel %vm1380, %v1808, %v1810
        %v1812 = vrot.slane %v1790, 6
        %v1813 = vsel %vm1380, %v1810, %v1812
        %v1814 = vrot.slane %v1791, 6
        %v1815 = vsel %vm1380, %v1812, %v1814
        %v1816 = vrot.slane %v1792, 6
        %v1817 = vsel %vm1380, %v1814, %v1816
        %v1818 = vrot.slane %v1793, 6
        %v1819 = vsel %vm1380, %v1816, %v1818
        %v1829 = vadd.f32 %v1772, %v1805
        %v1830 = vadd.f32 %v1773, %v1807
        %v1831 = vadd.f32 %v1774, %v1809
        %v1832 = vadd.f32 %v1775, %v1811
        %v1833 = vadd.f32 %v1776, %v1813
        %v1834 = vadd.f32 %v1777, %v1815
        %v1835 = vadd.f32 %v1778, %v1817
        %v1836 = vadd.f32 %v1779, %v1819
        %v1837 = vadd.f32 %v1780, %v1818
        %v1838 = vlaneseq
        %v1839 = vshrl.u32 %v1838, 7
        %v1840 = vsub.s32 7, %v1839
        %v1841 = vrot.slane %v1054, %v1840
        %v1842 = vmul.f32 %v1841, %v1010
        %v1843 = vmul.f32 %v1841, %v1015
        %v1844 = vmul.f32 %v1841, %v1020
        %v1845 = vmul.f32 %v1841, %v1025
        %v1846 = vmul.f32 %v1841, %v1030
        %v1847 = vmul.f32 %v1841, %v1035
        %v1848 = vmul.f32 %v1841, %v1040
        %v1849 = vmul.f32 %v1841, %v1045
        %v1850 = vmul.f32 %v1841, %v1050
        %v1860 = vrot.slane %v1842, 7
        %v1861 = vrot.slane %v1843, 7
        %v1862 = vsel %vm1438, %v1860, %v1861
        %v1863 = vrot.slane %v1844, 7
        %v1864 = vsel %vm1438, %v1861, %v1863
        %v1865 = vrot.slane %v1845, 7
        %v1866 = vsel %vm1438, %v1863, %v1865
        %v1867 = vrot.slane %v1846, 7
        %v1868 = vsel %vm1438, %v1865, %v1867
        %v1869 = vrot.slane %v1847, 7
        %v1870 = vsel %vm1438, %v1867, %v1869
        %v1871 = vrot.slane %v1848, 7
        %v1872 = vsel %vm1438, %v1869, %v1871
        %v1873 = vrot.slane %v1849, 7
        %v1874 = vsel %vm1438, %v1871, %v1873
        %v1875 = vrot.slane %v1850, 7
        %v1876 = vsel %vm1438, %v1873, %v1875
        %v1886 = vadd.f32 %v1829, %v1862
        %v1887 = vadd.f32 %v1830, %v1864
        %v1888 = vadd.f32 %v1831, %v1866
        %v1889 = vadd.f32 %v1832, %v1868
        %v1890 = vadd.f32 %v1833, %v1870
        %v1891 = vadd.f32 %v1834, %v1872
        %v1892 = vadd.f32 %v1835, %v1874
        %v1893 = vadd.f32 %v1836, %v1876
        %v1894 = vadd.f32 %v1837, %v1875
        %v1895 = vld [vmem:[#allocation5] sm:$0x1]
        %v1897 = vlaneseq
        %v1898 = vshrl.u32 %v1897, 7
        %v1899 = vsub.s32 0, %v1898
        %v1900 = vrot.slane %v1895, %v1899
        %v1902 = vmul.f32 %v1886, %v1900
        %v1903 = vmul.f32 %v1887, %v1900
        %v1904 = vmul.f32 %v1888, %v1900
        %v1905 = vmul.f32 %v1889, %v1900
        %v1906 = vmul.f32 %v1890, %v1900
        %v1907 = vmul.f32 %v1891, %v1900
        %v1908 = vmul.f32 %v1892, %v1900
        %v1909 = vmul.f32 %v1893, %v1900
        %v1910 = vmul.f32 %v1894, %v1900
        %v1911 = vld [vmem:[#allocation7] sm:$0x1]
        %v1913 = vlaneseq
        %v1914 = vshrl.u32 %v1913, 7
        %v1915 = vsub.s32 0, %v1914
        %v1916 = vrot.slane %v1911, %v1915
        %v1918 = vadd.f32 %v1902, %v1916
        %v1919 = vadd.f32 %v1903, %v1916
        %v1920 = vadd.f32 %v1904, %v1916
        %v1921 = vadd.f32 %v1905, %v1916
        %v1922 = vadd.f32 %v1906, %v1916
        %v1923 = vadd.f32 %v1907, %v1916
        %v1924 = vadd.f32 %v1908, %v1916
        %v1925 = vadd.f32 %v1909, %v1916
        %v1926 = vadd.f32 %v1910, %v1916
        %vm1927 = vcmp.gt.f32.partialorder %v1918, 0.0
        %vm1928 = vcmp.gt.f32.partialorder %v1919, 0.0
        %vm1929 = vcmp.gt.f32.partialorder %v1920, 0.0
        %vm1930 = vcmp.gt.f32.partialorder %v1921, 0.0
        %vm1931 = vcmp.gt.f32.partialorder %v1922, 0.0
        %vm1932 = vcmp.gt.f32.partialorder %v1923, 0.0
        %vm1933 = vcmp.gt.f32.partialorder %v1924, 0.0
        %vm1934 = vcmp.gt.f32.partialorder %v1925, 0.0
        %vm1935 = vcmp.gt.f32.partialorder %v1926, 0.0
        %v1936 = vmin.f32 %v1918, 0.0
        %v1937 = vmin.f32 %v1919, 0.0
        %v1938 = vmin.f32 %v1920, 0.0
        %v1939 = vmin.f32 %v1921, 0.0
        %v1940 = vmin.f32 %v1922, 0.0
        %v1941 = vmin.f32 %v1923, 0.0
        %v1942 = vmin.f32 %v1924, 0.0
        %v1943 = vmin.f32 %v1925, 0.0
        %v1944 = vmin.f32 %v1926, 0.0
        %v1945 = vmul.f32 %v1936, 1.442695
        %v1946 = vpow.pop %v1945
        %v1947 = vmul.f32 %v1937, 1.442695
        %v1948 = vpow.pop %v1947
        %v1949 = vmul.f32 %v1938, 1.442695
        %v1950 = vpow.pop %v1949
        %v1951 = vmul.f32 %v1939, 1.442695
        %v1952 = vpow.pop %v1951
        %v1953 = vmul.f32 %v1940, 1.442695
        %v1954 = vpow.pop %v1953
        %v1955 = vmul.f32 %v1941, 1.442695
        %v1956 = vpow.pop %v1955
        %v1957 = vmul.f32 %v1942, 1.442695
        %v1958 = vpow.pop %v1957
        %v1959 = vmul.f32 %v1943, 1.442695
        %v1960 = vpow.pop %v1959
        %v1961 = vmul.f32 %v1944, 1.442695
        %v1962 = vpow.pop %v1961
        %v1963 = vsub.f32 %v1946, 1.0
        %v1964 = vsub.f32 %v1948, 1.0
        %v1965 = vsub.f32 %v1950, 1.0
        %v1966 = vsub.f32 %v1952, 1.0
        %v1967 = vsub.f32 %v1954, 1.0
        %v1968 = vsub.f32 %v1956, 1.0
        %v1969 = vsub.f32 %v1958, 1.0
        %v1970 = vsub.f32 %v1960, 1.0
        %v1971 = vsub.f32 %v1962, 1.0
        %v1972 = vsel %vm1927, %v1918, %v1963
        %v1973 = vsel %vm1928, %v1919, %v1964
        %v1974 = vsel %vm1929, %v1920, %v1965
        %v1975 = vsel %vm1930, %v1921, %v1966
        %v1976 = vsel %vm1931, %v1922, %v1967
        %v1977 = vsel %vm1932, %v1923, %v1968
        %v1978 = vsel %vm1933, %v1924, %v1969
        %v1979 = vsel %vm1934, %v1925, %v1970
        %v1980 = vsel %vm1935, %v1926, %v1971
        %v1981 = vld [vmem:[#allocation8] sm:$0xff]
        %v1982 = vld [vmem:[#allocation8 + $0x8] sm:$0xff]
        %v1983 = vld [vmem:[#allocation8 + $0x10] sm:$0xff]
        %v1984 = vld [vmem:[#allocation8 + $0x18] sm:$0xff]
        %v1985 = vld [vmem:[#allocation8 + $0x20] sm:$0xff]
        %v1986 = vld [vmem:[#allocation8 + $0x28] sm:$0x7f]
        %vm1987 = vcmask 531456
        %v1989 = vsel %vm1987, %v1981, 0
        %v1992 = vsel %vm1987, %v1982, 0
        %v1995 = vsel %vm1987, %v1983, 0
        %v1998 = vsel %vm1987, %v1984, 0
        %v2001 = vsel %vm1987, %v1985, 0
        %v2004 = vsel %vm1987, %v1986, 0
        %v2007 = vsel %vm1438, %v1980, 0
        %2009 = vmatprep.subr.mxu0 0.0
        %2010 = vmatpush1.msra.mxu0 %v1972
        %2011 = vmatprep.subr.mxu0 0.0
        %2012 = vmatpush1.msra.mxu0 %v1973
        %2013 = vmatprep.subr.mxu0 0.0
        %2014 = vmatpush1.msra.mxu0 %v1974
        %2015 = vmatprep.subr.mxu0 0.0
        %2016 = vmatpush1.msra.mxu0 %v1975
        %2017 = vmatprep.subr.mxu0 0.0
        %2018 = vmatpush1.msra.mxu0 %v1976
        %2019 = vmatprep.subr.mxu0 0.0
        %2020 = vmatpush1.msra.mxu0 %v1977
        %2021 = vmatprep.subr.mxu0 0.0
        %2022 = vmatpush1.msra.mxu0 %v1978
        %2023 = vmatprep.subr.mxu0 0.0
        %2024 = vmatpush1.msra.mxu0 %v1979
        %2025 = vmatprep.subr.mxu0 0.0
        %2026 = vmatpush1.msra.mxu0 %v2007
        %2027 = vmatprep.subr.mxu0 0.0
        %2028 = vmatpush1.msra.mxu0 0.0
        %2029 = vmatprep.subr.mxu0 0.0
        %2030 = vmatpush1.msra.mxu0 0.0
        %2031 = vmatprep.subr.mxu0 0.0
        %2032 = vmatpush1.msra.mxu0 0.0
        %2033 = vmatprep.subr.mxu0 0.0
        %2034 = vmatpush1.msra.mxu0 0.0
        %2035 = vmatprep.subr.mxu0 0.0
        %2036 = vmatpush1.msra.mxu0 0.0
        %2037 = vmatprep.subr.mxu0 0.0
        %2038 = vmatpush1.msra.mxu0 0.0
        %2039 = vmatprep.subr.mxu0 0.0
        %2040 = vmatpush1.msra.mxu0 0.0
        %2041 = vmatprep.subr.mxu0 0.0
        %2042 = vmatpush1.msra.mxu0 0.0
        %2043 = vmatprep.subr.mxu0 0.0
        %2044 = vmatpush1.msra.mxu0 0.0
        %2045 = vmatprep.subr.mxu0 0.0
        %2046 = vmatpush1.msra.mxu0 0.0
        %2047 = vmatprep.subr.mxu0 0.0
        %2048 = vmatpush1.msra.mxu0 0.0
        %2049 = vmatprep.subr.mxu0 0.0
        %2050 = vmatpush1.msra.mxu0 0.0
        %2051 = vmatprep.subr.mxu0 0.0
        %2052 = vmatpush1.msra.mxu0 0.0
        %2053 = vmatprep.subr.mxu0 0.0
        %2054 = vmatpush1.msra.mxu0 0.0
        %2055 = vmatprep.subr.mxu0 0.0
        %2056 = vmatpush1.msra.mxu0 0.0
        %2057 = vmatprep.subr.mxu0 0.0
        %2058 = vmatpush1.msra.mxu0 0.0
        %2059 = vmatprep.subr.mxu0 0.0
        %2060 = vmatpush1.msra.mxu0 0.0
        %2061 = vmatprep.subr.mxu0 0.0
        %2062 = vmatpush1.msra.mxu0 0.0
        %2063 = vmatprep.subr.mxu0 0.0
        %2064 = vmatpush1.msra.mxu0 0.0
        %2065 = vmatprep.subr.mxu0 0.0
        %2066 = vmatpush1.msra.mxu0 0.0
        %2067 = vmatprep.subr.mxu0 0.0
        %2068 = vmatpush1.msra.mxu0 0.0
        %2069 = vmatprep.subr.mxu0 0.0
        %2070 = vmatpush1.msra.mxu0 0.0
        %2071 = vmatprep.subr.mxu0 0.0
        %2072 = vmatpush1.msra.mxu0 0.0
        %2073 = vmatprep.mubr.f32.mxu0 0.0
        %2074 = vmatmul.mubr.f32.gmra.mrb[0].mxu0 %v1989
        %v2075 = vpop.f32.mrb[0].mxu0
        %v2076 = vadd.f32 0.0, %v2075
        %v2077 = vpop.f32.mrb[0].mxu0
        %2078 = vmatprep.mubr.f32.mxu0 0.0
        %2079 = vmatmul.mubr.f32.gmra.mrb[0].mxu0 %v1992
        %v2080 = vpop.f32.mrb[0].mxu0
        %v2081 = vadd.f32 0.0, %v2080
        %v2082 = vpop.f32.mrb[0].mxu0
        %2083 = vmatprep.mubr.f32.mxu0 0.0
        %2084 = vmatmul.mubr.f32.gmra.mrb[0].mxu0 %v1995
        %v2085 = vpop.f32.mrb[0].mxu0
        %v2086 = vadd.f32 0.0, %v2085
        %v2087 = vpop.f32.mrb[0].mxu0
        %2088 = vmatprep.mubr.f32.mxu0 0.0
        %2089 = vmatmul.mubr.f32.gmra.mrb[0].mxu0 %v1998
        %v2090 = vpop.f32.mrb[0].mxu0
        %v2091 = vadd.f32 0.0, %v2090
        %v2092 = vpop.f32.mrb[0].mxu0
        %2093 = vmatprep.mubr.f32.mxu0 0.0
        %2094 = vmatmul.mubr.f32.gmra.mrb[0].mxu0 %v2001
        %v2095 = vpop.f32.mrb[0].mxu0
        %v2096 = vadd.f32 0.0, %v2095
        %v2097 = vpop.f32.mrb[0].mxu0
        %2098 = vmatprep.mubr.f32.mxu0 0.0
        %2099 = vmatmul.mubr.f32.gmra.mrb[0].mxu0 %v2004
        %v2100 = vpop.f32.mrb[0].mxu0
        %v2101 = vadd.f32 0.0, %v2100
        %v2102 = vpop.f32.mrb[0].mxu0
        %2103 = vdwg.mxu0
        %v2104 = vld [vmem:[%s6] sm:$0xff]
        %s2105 = scalar_lea.vmem %s6, 8
        %v2106 = vld [vmem:[%s2105] sm:$0xff]
        %v2112 = vrot.slane %v2076, 1
        %v2113 = vrot.slane %v2081, 1
        %v2114 = vsel %vm1090, %v2112, %v2113
        %v2115 = vrot.slane %v2086, 1
        %v2116 = vsel %vm1090, %v2113, %v2115
        %v2117 = vrot.slane %v2091, 1
        %v2118 = vsel %vm1090, %v2115, %v2117
        %v2119 = vrot.slane %v2096, 1
        %v2120 = vsel %vm1090, %v2117, %v2119
        %v2121 = vsel %vm907, %v2114, 0
        %v2123 = vsel %vm907, %v2116, 0
        %v2125 = vsel %vm907, %v2118, 0
        %v2127 = vsel %vm907, %v2120, 0
        %2129 = vmatprep.subr.mxu0 0.0
        %2130 = vmatpush1.msra.mxu0 %v2106
        %2131 = vmatprep.subr.mxu0 0.0
        %2132 = vmatpush1.msra.mxu0 0.0
        %2133 = vmatprep.subr.mxu0 0.0
        %2134 = vmatpush1.msra.mxu0 0.0
        %2135 = vmatprep.subr.mxu0 0.0
        %2136 = vmatpush1.msra.mxu0 0.0
        %2137 = vmatprep.subr.mxu0 0.0
        %2138 = vmatpush1.msra.mxu0 0.0
        %2139 = vmatprep.subr.mxu0 0.0
        %2140 = vmatpush1.msra.mxu0 0.0
        %2141 = vmatprep.subr.mxu0 0.0
        %2142 = vmatpush1.msra.mxu0 0.0
        %2143 = vmatprep.subr.mxu0 0.0
        %2144 = vmatpush1.msra.mxu0 0.0
        %2145 = vmatprep.subr.mxu0 0.0
        %2146 = vmatpush1.msra.mxu0 0.0
        %2147 = vmatprep.subr.mxu0 0.0
        %2148 = vmatpush1.msra.mxu0 0.0
        %2149 = vmatprep.subr.mxu0 0.0
        %2150 = vmatpush1.msra.mxu0 0.0
        %2151 = vmatprep.subr.mxu0 0.0
        %2152 = vmatpush1.msra.mxu0 0.0
        %2153 = vmatprep.subr.mxu0 0.0
        %2154 = vmatpush1.msra.mxu0 0.0
        %2155 = vmatprep.subr.mxu0 0.0
        %2156 = vmatpush1.msra.mxu0 0.0
        %2157 = vmatprep.subr.mxu0 0.0
        %2158 = vmatpush1.msra.mxu0 0.0
        %2159 = vmatprep.subr.mxu0 0.0
        %2160 = vmatpush1.msra.mxu0 0.0
        %2161 = vmatprep.subr.mxu0 0.0
        %2162 = vmatpush1.msra.mxu0 0.0
        %2163 = vmatprep.subr.mxu0 0.0
        %2164 = vmatpush1.msra.mxu0 0.0
        %2165 = vmatprep.subr.mxu0 0.0
        %2166 = vmatpush1.msra.mxu0 0.0
        %2167 = vmatprep.subr.mxu0 0.0
        %2168 = vmatpush1.msra.mxu0 0.0
        %2169 = vmatprep.subr.mxu0 0.0
        %2170 = vmatpush1.msra.mxu0 0.0
        %2171 = vmatprep.subr.mxu0 0.0
        %2172 = vmatpush1.msra.mxu0 0.0
        %2173 = vmatprep.subr.mxu0 0.0
        %2174 = vmatpush1.msra.mxu0 0.0
        %2175 = vmatprep.subr.mxu0 0.0
        %2176 = vmatpush1.msra.mxu0 0.0
        %2177 = vmatprep.subr.mxu0 0.0
        %2178 = vmatpush1.msra.mxu0 0.0
        %2179 = vmatprep.subr.mxu0 0.0
        %2180 = vmatpush1.msra.mxu0 0.0
        %2181 = vmatprep.subr.mxu0 0.0
        %2182 = vmatpush1.msra.mxu0 0.0
        %2183 = vmatprep.subr.mxu0 0.0
        %2184 = vmatpush1.msra.mxu0 0.0
        %2185 = vmatprep.subr.mxu0 0.0
        %2186 = vmatpush1.msra.mxu0 0.0
        %2187 = vmatprep.subr.mxu0 0.0
        %2188 = vmatpush1.msra.mxu0 0.0
        %2189 = vmatprep.subr.mxu0 0.0
        %2190 = vmatpush1.msra.mxu0 0.0
        %2191 = vmatprep.subr.mxu0 0.0
        %2192 = vmatpush1.msra.mxu0 0.0
        %2193 = vmatprep.mubr.f32.mxu0 0.0
        %2194 = vmatmul.mubr.f32.gmra.mrb[0].mxu0 %v2121
        %v2195 = vpop.f32.mrb[0].mxu0
        %v2196 = vadd.f32 0.0, %v2195
        %v2197 = vpop.f32.mrb[0].mxu0
        %2198 = vmatprep.mubr.f32.mxu0 0.0
        %2199 = vmatmul.mubr.f32.gmra.mrb[0].mxu0 %v2123
        %v2200 = vpop.f32.mrb[0].mxu0
        %v2201 = vadd.f32 0.0, %v2200
        %v2202 = vpop.f32.mrb[0].mxu0
        %2203 = vmatprep.mubr.f32.mxu0 0.0
        %2204 = vmatmul.mubr.f32.gmra.mrb[0].mxu0 %v2125
        %v2205 = vpop.f32.mrb[0].mxu0
        %v2206 = vadd.f32 0.0, %v2205
        %v2207 = vpop.f32.mrb[0].mxu0
        %2208 = vmatprep.mubr.f32.mxu0 0.0
        %2209 = vmatmul.mubr.f32.gmra.mrb[0].mxu0 %v2127
        %v2210 = vpop.f32.mrb[0].mxu0
        %v2211 = vadd.f32 0.0, %v2210
        %v2212 = vpop.f32.mrb[0].mxu0
        %2213 = vdwg.mxu0
        %v2214 = vsel %vm907, %v2076, 0
        %v2216 = vsel %vm907, %v2081, 0
        %v2218 = vsel %vm907, %v2086, 0
        %v2220 = vsel %vm907, %v2091, 0
        %2222 = vmatprep.subr.mxu0 0.0
        %2223 = vmatpush1.msra.mxu0 %v2104
        %2224 = vmatprep.subr.mxu0 0.0
        %2225 = vmatpush1.msra.mxu0 0.0
        %2226 = vmatprep.subr.mxu0 0.0
        %2227 = vmatpush1.msra.mxu0 0.0
        %2228 = vmatprep.subr.mxu0 0.0
        %2229 = vmatpush1.msra.mxu0 0.0
        %2230 = vmatprep.subr.mxu0 0.0
        %2231 = vmatpush1.msra.mxu0 0.0
        %2232 = vmatprep.subr.mxu0 0.0
        %2233 = vmatpush1.msra.mxu0 0.0
        %2234 = vmatprep.subr.mxu0 0.0
        %2235 = vmatpush1.msra.mxu0 0.0
        %2236 = vmatprep.subr.mxu0 0.0
        %2237 = vmatpush1.msra.mxu0 0.0
        %2238 = vmatprep.subr.mxu0 0.0
        %2239 = vmatpush1.msra.mxu0 0.0
        %2240 = vmatprep.subr.mxu0 0.0
        %2241 = vmatpush1.msra.mxu0 0.0
        %2242 = vmatprep.subr.mxu0 0.0
        %2243 = vmatpush1.msra.mxu0 0.0
        %2244 = vmatprep.subr.mxu0 0.0
        %2245 = vmatpush1.msra.mxu0 0.0
        %2246 = vmatprep.subr.mxu0 0.0
        %2247 = vmatpush1.msra.mxu0 0.0
        %2248 = vmatprep.subr.mxu0 0.0
        %2249 = vmatpush1.msra.mxu0 0.0
        %2250 = vmatprep.subr.mxu0 0.0
        %2251 = vmatpush1.msra.mxu0 0.0
        %2252 = vmatprep.subr.mxu0 0.0
        %2253 = vmatpush1.msra.mxu0 0.0
        %2254 = vmatprep.subr.mxu0 0.0
        %2255 = vmatpush1.msra.mxu0 0.0
        %2256 = vmatprep.subr.mxu0 0.0
        %2257 = vmatpush1.msra.mxu0 0.0
        %2258 = vmatprep.subr.mxu0 0.0
        %2259 = vmatpush1.msra.mxu0 0.0
        %2260 = vmatprep.subr.mxu0 0.0
        %2261 = vmatpush1.msra.mxu0 0.0
        %2262 = vmatprep.subr.mxu0 0.0
        %2263 = vmatpush1.msra.mxu0 0.0
        %2264 = vmatprep.subr.mxu0 0.0
        %2265 = vmatpush1.msra.mxu0 0.0
        %2266 = vmatprep.subr.mxu0 0.0
        %2267 = vmatpush1.msra.mxu0 0.0
        %2268 = vmatprep.subr.mxu0 0.0
        %2269 = vmatpush1.msra.mxu0 0.0
        %2270 = vmatprep.subr.mxu0 0.0
        %2271 = vmatpush1.msra.mxu0 0.0
        %2272 = vmatprep.subr.mxu0 0.0
        %2273 = vmatpush1.msra.mxu0 0.0
        %2274 = vmatprep.subr.mxu0 0.0
        %2275 = vmatpush1.msra.mxu0 0.0
        %2276 = vmatprep.subr.mxu0 0.0
        %2277 = vmatpush1.msra.mxu0 0.0
        %2278 = vmatprep.subr.mxu0 0.0
        %2279 = vmatpush1.msra.mxu0 0.0
        %2280 = vmatprep.subr.mxu0 0.0
        %2281 = vmatpush1.msra.mxu0 0.0
        %2282 = vmatprep.subr.mxu0 0.0
        %2283 = vmatpush1.msra.mxu0 0.0
        %2284 = vmatprep.subr.mxu0 0.0
        %2285 = vmatpush1.msra.mxu0 0.0
        %2286 = vmatprep.mubr.f32.mxu0 0.0
        %2287 = vmatmul.mubr.f32.gmra.mrb[0].mxu0 %v2214
        %v2288 = vpop.f32.mrb[0].mxu0
        %v2289 = vadd.f32 %v2196, %v2288
        %v2290 = vpop.f32.mrb[0].mxu0
        %2291 = vmatprep.mubr.f32.mxu0 0.0
        %2292 = vmatmul.mubr.f32.gmra.mrb[0].mxu0 %v2216
        %v2293 = vpop.f32.mrb[0].mxu0
        %v2294 = vadd.f32 %v2201, %v2293
        %v2295 = vpop.f32.mrb[0].mxu0
        %2296 = vmatprep.mubr.f32.mxu0 0.0
        %2297 = vmatmul.mubr.f32.gmra.mrb[0].mxu0 %v2218
        %v2298 = vpop.f32.mrb[0].mxu0
        %v2299 = vadd.f32 %v2206, %v2298
        %v2300 = vpop.f32.mrb[0].mxu0
        %2301 = vmatprep.mubr.f32.mxu0 0.0
        %2302 = vmatmul.mubr.f32.gmra.mrb[0].mxu0 %v2220
        %v2303 = vpop.f32.mrb[0].mxu0
        %v2304 = vadd.f32 %v2211, %v2303
        %v2305 = vpop.f32.mrb[0].mxu0
        %2306 = vdwg.mxu0
        %s2307 = scalar_lea.vmem %s6, 16
        %v2308 = vld [vmem:[%s2307] sm:$0xff]
        %v2309 = vrot.slane %v2076, 2
        %v2310 = vrot.slane %v2081, 2
        %v2311 = vsel %vm1148, %v2309, %v2310
        %v2312 = vrot.slane %v2086, 2
        %v2313 = vsel %vm1148, %v2310, %v2312
        %v2314 = vrot.slane %v2091, 2
        %v2315 = vsel %vm1148, %v2312, %v2314
        %v2316 = vrot.slane %v2096, 2
        %v2317 = vsel %vm1148, %v2314, %v2316
        %v2318 = vsel %vm907, %v2311, 0
        %v2320 = vsel %vm907, %v2313, 0
        %v2322 = vsel %vm907, %v2315, 0
        %v2324 = vsel %vm907, %v2317, 0
        %2326 = vmatprep.subr.mxu0 0.0
        %2327 = vmatpush1.msra.mxu0 %v2308
        %2328 = vmatprep.subr.mxu0 0.0
        %2329 = vmatpush1.msra.mxu0 0.0
        %2330 = vmatprep.subr.mxu0 0.0
        %2331 = vmatpush1.msra.mxu0 0.0
        %2332 = vmatprep.subr.mxu0 0.0
        %2333 = vmatpush1.msra.mxu0 0.0
        %2334 = vmatprep.subr.mxu0 0.0
        %2335 = vmatpush1.msra.mxu0 0.0
        %2336 = vmatprep.subr.mxu0 0.0
        %2337 = vmatpush1.msra.mxu0 0.0
        %2338 = vmatprep.subr.mxu0 0.0
        %2339 = vmatpush1.msra.mxu0 0.0
        %2340 = vmatprep.subr.mxu0 0.0
        %2341 = vmatpush1.msra.mxu0 0.0
        %2342 = vmatprep.subr.mxu0 0.0
        %2343 = vmatpush1.msra.mxu0 0.0
        %2344 = vmatprep.subr.mxu0 0.0
        %2345 = vmatpush1.msra.mxu0 0.0
        %2346 = vmatprep.subr.mxu0 0.0
        %2347 = vmatpush1.msra.mxu0 0.0
        %2348 = vmatprep.subr.mxu0 0.0
        %2349 = vmatpush1.msra.mxu0 0.0
        %2350 = vmatprep.subr.mxu0 0.0
        %2351 = vmatpush1.msra.mxu0 0.0
        %2352 = vmatprep.subr.mxu0 0.0
        %2353 = vmatpush1.msra.mxu0 0.0
        %2354 = vmatprep.subr.mxu0 0.0
        %2355 = vmatpush1.msra.mxu0 0.0
        %2356 = vmatprep.subr.mxu0 0.0
        %2357 = vmatpush1.msra.mxu0 0.0
        %2358 = vmatprep.subr.mxu0 0.0
        %2359 = vmatpush1.msra.mxu0 0.0
        %2360 = vmatprep.subr.mxu0 0.0
        %2361 = vmatpush1.msra.mxu0 0.0
        %2362 = vmatprep.subr.mxu0 0.0
        %2363 = vmatpush1.msra.mxu0 0.0
        %2364 = vmatprep.subr.mxu0 0.0
        %2365 = vmatpush1.msra.mxu0 0.0
        %2366 = vmatprep.subr.mxu0 0.0
        %2367 = vmatpush1.msra.mxu0 0.0
        %2368 = vmatprep.subr.mxu0 0.0
        %2369 = vmatpush1.msra.mxu0 0.0
        %2370 = vmatprep.subr.mxu0 0.0
        %2371 = vmatpush1.msra.mxu0 0.0
        %2372 = vmatprep.subr.mxu0 0.0
        %2373 = vmatpush1.msra.mxu0 0.0
        %2374 = vmatprep.subr.mxu0 0.0
        %2375 = vmatpush1.msra.mxu0 0.0
        %2376 = vmatprep.subr.mxu0 0.0
        %2377 = vmatpush1.msra.mxu0 0.0
        %2378 = vmatprep.subr.mxu0 0.0
        %2379 = vmatpush1.msra.mxu0 0.0
        %2380 = vmatprep.subr.mxu0 0.0
        %2381 = vmatpush1.msra.mxu0 0.0
        %2382 = vmatprep.subr.mxu0 0.0
        %2383 = vmatpush1.msra.mxu0 0.0
        %2384 = vmatprep.subr.mxu0 0.0
        %2385 = vmatpush1.msra.mxu0 0.0
        %2386 = vmatprep.subr.mxu0 0.0
        %2387 = vmatpush1.msra.mxu0 0.0
        %2388 = vmatprep.subr.mxu0 0.0
        %2389 = vmatpush1.msra.mxu0 0.0
        %2390 = vmatprep.mubr.f32.mxu0 0.0
        %2391 = vmatmul.mubr.f32.gmra.mrb[0].mxu0 %v2318
        %v2392 = vpop.f32.mrb[0].mxu0
        %v2393 = vadd.f32 0.0, %v2392
        %v2394 = vpop.f32.mrb[0].mxu0
        %2395 = vmatprep.mubr.f32.mxu0 0.0
        %2396 = vmatmul.mubr.f32.gmra.mrb[0].mxu0 %v2320
        %v2397 = vpop.f32.mrb[0].mxu0
        %v2398 = vadd.f32 0.0, %v2397
        %v2399 = vpop.f32.mrb[0].mxu0
        %2400 = vmatprep.mubr.f32.mxu0 0.0
        %2401 = vmatmul.mubr.f32.gmra.mrb[0].mxu0 %v2322
        %v2402 = vpop.f32.mrb[0].mxu0
        %v2403 = vadd.f32 0.0, %v2402
        %v2404 = vpop.f32.mrb[0].mxu0
        %2405 = vmatprep.mubr.f32.mxu0 0.0
        %2406 = vmatmul.mubr.f32.gmra.mrb[0].mxu0 %v2324
        %v2407 = vpop.f32.mrb[0].mxu0
        %v2408 = vadd.f32 0.0, %v2407
        %v2409 = vpop.f32.mrb[0].mxu0
        %2410 = vdwg.mxu0
        %v2411 = vadd.f32 %v2289, %v2393
        %v2412 = vadd.f32 %v2294, %v2398
        %v2413 = vadd.f32 %v2299, %v2403
        %v2414 = vadd.f32 %v2304, %v2408
        %s2415 = scalar_lea.vmem %s6, 24
        %v2416 = vld [vmem:[%s2415] sm:$0xff]
        %v2417 = vrot.slane %v2076, 3
        %v2418 = vrot.slane %v2081, 3
        %v2419 = vsel %vm1206, %v2417, %v2418
        %v2420 = vrot.slane %v2086, 3
        %v2421 = vsel %vm1206, %v2418, %v2420
        %v2422 = vrot.slane %v2091, 3
        %v2423 = vsel %vm1206, %v2420, %v2422
        %v2424 = vrot.slane %v2096, 3
        %v2425 = vsel %vm1206, %v2422, %v2424
        %v2426 = vsel %vm907, %v2419, 0
        %v2428 = vsel %vm907, %v2421, 0
        %v2430 = vsel %vm907, %v2423, 0
        %v2432 = vsel %vm907, %v2425, 0
        %2434 = vmatprep.subr.mxu0 0.0
        %2435 = vmatpush1.msra.mxu0 %v2416
        %2436 = vmatprep.subr.mxu0 0.0
        %2437 = vmatpush1.msra.mxu0 0.0
        %2438 = vmatprep.subr.mxu0 0.0
        %2439 = vmatpush1.msra.mxu0 0.0
        %2440 = vmatprep.subr.mxu0 0.0
        %2441 = vmatpush1.msra.mxu0 0.0
        %2442 = vmatprep.subr.mxu0 0.0
        %2443 = vmatpush1.msra.mxu0 0.0
        %2444 = vmatprep.subr.mxu0 0.0
        %2445 = vmatpush1.msra.mxu0 0.0
        %2446 = vmatprep.subr.mxu0 0.0
        %2447 = vmatpush1.msra.mxu0 0.0
        %2448 = vmatprep.subr.mxu0 0.0
        %2449 = vmatpush1.msra.mxu0 0.0
        %2450 = vmatprep.subr.mxu0 0.0
        %2451 = vmatpush1.msra.mxu0 0.0
        %2452 = vmatprep.subr.mxu0 0.0
        %2453 = vmatpush1.msra.mxu0 0.0
        %2454 = vmatprep.subr.mxu0 0.0
        %2455 = vmatpush1.msra.mxu0 0.0
        %2456 = vmatprep.subr.mxu0 0.0
        %2457 = vmatpush1.msra.mxu0 0.0
        %2458 = vmatprep.subr.mxu0 0.0
        %2459 = vmatpush1.msra.mxu0 0.0
        %2460 = vmatprep.subr.mxu0 0.0
        %2461 = vmatpush1.msra.mxu0 0.0
        %2462 = vmatprep.subr.mxu0 0.0
        %2463 = vmatpush1.msra.mxu0 0.0
        %2464 = vmatprep.subr.mxu0 0.0
        %2465 = vmatpush1.msra.mxu0 0.0
        %2466 = vmatprep.subr.mxu0 0.0
        %2467 = vmatpush1.msra.mxu0 0.0
        %2468 = vmatprep.subr.mxu0 0.0
        %2469 = vmatpush1.msra.mxu0 0.0
        %2470 = vmatprep.subr.mxu0 0.0
        %2471 = vmatpush1.msra.mxu0 0.0
        %2472 = vmatprep.subr.mxu0 0.0
        %2473 = vmatpush1.msra.mxu0 0.0
        %2474 = vmatprep.subr.mxu0 0.0
        %2475 = vmatpush1.msra.mxu0 0.0
        %2476 = vmatprep.subr.mxu0 0.0
        %2477 = vmatpush1.msra.mxu0 0.0
        %2478 = vmatprep.subr.mxu0 0.0
        %2479 = vmatpush1.msra.mxu0 0.0
        %2480 = vmatprep.subr.mxu0 0.0
        %2481 = vmatpush1.msra.mxu0 0.0
        %2482 = vmatprep.subr.mxu0 0.0
        %2483 = vmatpush1.msra.mxu0 0.0
        %2484 = vmatprep.subr.mxu0 0.0
        %2485 = vmatpush1.msra.mxu0 0.0
        %2486 = vmatprep.subr.mxu0 0.0
        %2487 = vmatpush1.msra.mxu0 0.0
        %2488 = vmatprep.subr.mxu0 0.0
        %2489 = vmatpush1.msra.mxu0 0.0
        %2490 = vmatprep.subr.mxu0 0.0
        %2491 = vmatpush1.msra.mxu0 0.0
        %2492 = vmatprep.subr.mxu0 0.0
        %2493 = vmatpush1.msra.mxu0 0.0
        %2494 = vmatprep.subr.mxu0 0.0
        %2495 = vmatpush1.msra.mxu0 0.0
        %2496 = vmatprep.subr.mxu0 0.0
        %2497 = vmatpush1.msra.mxu0 0.0
        %2498 = vmatprep.mubr.f32.mxu0 0.0
        %2499 = vmatmul.mubr.f32.gmra.mrb[0].mxu0 %v2426
        %v2500 = vpop.f32.mrb[0].mxu0
        %v2501 = vadd.f32 0.0, %v2500
        %v2502 = vpop.f32.mrb[0].mxu0
        %2503 = vmatprep.mubr.f32.mxu0 0.0
        %2504 = vmatmul.mubr.f32.gmra.mrb[0].mxu0 %v2428
        %v2505 = vpop.f32.mrb[0].mxu0
        %v2506 = vadd.f32 0.0, %v2505
        %v2507 = vpop.f32.mrb[0].mxu0
        %2508 = vmatprep.mubr.f32.mxu0 0.0
        %2509 = vmatmul.mubr.f32.gmra.mrb[0].mxu0 %v2430
        %v2510 = vpop.f32.mrb[0].mxu0
        %v2511 = vadd.f32 0.0, %v2510
        %v2512 = vpop.f32.mrb[0].mxu0
        %2513 = vmatprep.mubr.f32.mxu0 0.0
        %2514 = vmatmul.mubr.f32.gmra.mrb[0].mxu0 %v2432
        %v2515 = vpop.f32.mrb[0].mxu0
        %v2516 = vadd.f32 0.0, %v2515
        %v2517 = vpop.f32.mrb[0].mxu0
        %2518 = vdwg.mxu0
        %v2519 = vadd.f32 %v2411, %v2501
        %v2520 = vadd.f32 %v2412, %v2506
        %v2521 = vadd.f32 %v2413, %v2511
        %v2522 = vadd.f32 %v2414, %v2516
        %s2523 = scalar_lea.vmem %s6, 32
        %v2524 = vld [vmem:[%s2523] sm:$0xff]
        %v2525 = vrot.slane %v2076, 4
        %v2526 = vrot.slane %v2081, 4
        %v2527 = vsel %vm1264, %v2525, %v2526
        %v2528 = vrot.slane %v2086, 4
        %v2529 = vsel %vm1264, %v2526, %v2528
        %v2530 = vrot.slane %v2091, 4
        %v2531 = vsel %vm1264, %v2528, %v2530
        %v2532 = vrot.slane %v2096, 4
        %v2533 = vsel %vm1264, %v2530, %v2532
        %v2534 = vsel %vm907, %v2527, 0
        %v2536 = vsel %vm907, %v2529, 0
        %v2538 = vsel %vm907, %v2531, 0
        %v2540 = vsel %vm907, %v2533, 0
        %2542 = vmatprep.subr.mxu0 0.0
        %2543 = vmatpush1.msra.mxu0 %v2524
        %2544 = vmatprep.subr.mxu0 0.0
        %2545 = vmatpush1.msra.mxu0 0.0
        %2546 = vmatprep.subr.mxu0 0.0
        %2547 = vmatpush1.msra.mxu0 0.0
        %2548 = vmatprep.subr.mxu0 0.0
        %2549 = vmatpush1.msra.mxu0 0.0
        %2550 = vmatprep.subr.mxu0 0.0
        %2551 = vmatpush1.msra.mxu0 0.0
        %2552 = vmatprep.subr.mxu0 0.0
        %2553 = vmatpush1.msra.mxu0 0.0
        %2554 = vmatprep.subr.mxu0 0.0
        %2555 = vmatpush1.msra.mxu0 0.0
        %2556 = vmatprep.subr.mxu0 0.0
        %2557 = vmatpush1.msra.mxu0 0.0
        %2558 = vmatprep.subr.mxu0 0.0
        %2559 = vmatpush1.msra.mxu0 0.0
        %2560 = vmatprep.subr.mxu0 0.0
        %2561 = vmatpush1.msra.mxu0 0.0
        %2562 = vmatprep.subr.mxu0 0.0
        %2563 = vmatpush1.msra.mxu0 0.0
        %2564 = vmatprep.subr.mxu0 0.0
        %2565 = vmatpush1.msra.mxu0 0.0
        %2566 = vmatprep.subr.mxu0 0.0
        %2567 = vmatpush1.msra.mxu0 0.0
        %2568 = vmatprep.subr.mxu0 0.0
        %2569 = vmatpush1.msra.mxu0 0.0
        %2570 = vmatprep.subr.mxu0 0.0
        %2571 = vmatpush1.msra.mxu0 0.0
        %2572 = vmatprep.subr.mxu0 0.0
        %2573 = vmatpush1.msra.mxu0 0.0
        %2574 = vmatprep.subr.mxu0 0.0
        %2575 = vmatpush1.msra.mxu0 0.0
        %2576 = vmatprep.subr.mxu0 0.0
        %2577 = vmatpush1.msra.mxu0 0.0
        %2578 = vmatprep.subr.mxu0 0.0
        %2579 = vmatpush1.msra.mxu0 0.0
        %2580 = vmatprep.subr.mxu0 0.0
        %2581 = vmatpush1.msra.mxu0 0.0
        %2582 = vmatprep.subr.mxu0 0.0
        %2583 = vmatpush1.msra.mxu0 0.0
        %2584 = vmatprep.subr.mxu0 0.0
        %2585 = vmatpush1.msra.mxu0 0.0
        %2586 = vmatprep.subr.mxu0 0.0
        %2587 = vmatpush1.msra.mxu0 0.0
        %2588 = vmatprep.subr.mxu0 0.0
        %2589 = vmatpush1.msra.mxu0 0.0
        %2590 = vmatprep.subr.mxu0 0.0
        %2591 = vmatpush1.msra.mxu0 0.0
        %2592 = vmatprep.subr.mxu0 0.0
        %2593 = vmatpush1.msra.mxu0 0.0
        %2594 = vmatprep.subr.mxu0 0.0
        %2595 = vmatpush1.msra.mxu0 0.0
        %2596 = vmatprep.subr.mxu0 0.0
        %2597 = vmatpush1.msra.mxu0 0.0
        %2598 = vmatprep.subr.mxu0 0.0
        %2599 = vmatpush1.msra.mxu0 0.0
        %2600 = vmatprep.subr.mxu0 0.0
        %2601 = vmatpush1.msra.mxu0 0.0
        %2602 = vmatprep.subr.mxu0 0.0
        %2603 = vmatpush1.msra.mxu0 0.0
        %2604 = vmatprep.subr.mxu0 0.0
        %2605 = vmatpush1.msra.mxu0 0.0
        %2606 = vmatprep.mubr.f32.mxu0 0.0
        %2607 = vmatmul.mubr.f32.gmra.mrb[0].mxu0 %v2534
        %v2608 = vpop.f32.mrb[0].mxu0
        %v2609 = vadd.f32 0.0, %v2608
        %v2610 = vpop.f32.mrb[0].mxu0
        %2611 = vmatprep.mubr.f32.mxu0 0.0
        %2612 = vmatmul.mubr.f32.gmra.mrb[0].mxu0 %v2536
        %v2613 = vpop.f32.mrb[0].mxu0
        %v2614 = vadd.f32 0.0, %v2613
        %v2615 = vpop.f32.mrb[0].mxu0
        %2616 = vmatprep.mubr.f32.mxu0 0.0
        %2617 = vmatmul.mubr.f32.gmra.mrb[0].mxu0 %v2538
        %v2618 = vpop.f32.mrb[0].mxu0
        %v2619 = vadd.f32 0.0, %v2618
        %v2620 = vpop.f32.mrb[0].mxu0
        %2621 = vmatprep.mubr.f32.mxu0 0.0
        %2622 = vmatmul.mubr.f32.gmra.mrb[0].mxu0 %v2540
        %v2623 = vpop.f32.mrb[0].mxu0
        %v2624 = vadd.f32 0.0, %v2623
        %v2625 = vpop.f32.mrb[0].mxu0
        %2626 = vdwg.mxu0
        %v2627 = vadd.f32 %v2519, %v2609
        %v2628 = vadd.f32 %v2520, %v2614
        %v2629 = vadd.f32 %v2521, %v2619
        %v2630 = vadd.f32 %v2522, %v2624
        %s2631 = scalar_lea.vmem %s6, 40
        %v2632 = vld [vmem:[%s2631] sm:$0xff]
        %v2633 = vrot.slane %v2076, 5
        %v2634 = vrot.slane %v2081, 5
        %v2635 = vsel %vm1322, %v2633, %v2634
        %v2636 = vrot.slane %v2086, 5
        %v2637 = vsel %vm1322, %v2634, %v2636
        %v2638 = vrot.slane %v2091, 5
        %v2639 = vsel %vm1322, %v2636, %v2638
        %v2640 = vrot.slane %v2096, 5
        %v2641 = vsel %vm1322, %v2638, %v2640
        %v2642 = vsel %vm907, %v2635, 0
        %v2644 = vsel %vm907, %v2637, 0
        %v2646 = vsel %vm907, %v2639, 0
        %v2648 = vsel %vm907, %v2641, 0
        %2650 = vmatprep.subr.mxu0 0.0
        %2651 = vmatpush1.msra.mxu0 %v2632
        %2652 = vmatprep.subr.mxu0 0.0
        %2653 = vmatpush1.msra.mxu0 0.0
        %2654 = vmatprep.subr.mxu0 0.0
        %2655 = vmatpush1.msra.mxu0 0.0
        %2656 = vmatprep.subr.mxu0 0.0
        %2657 = vmatpush1.msra.mxu0 0.0
        %2658 = vmatprep.subr.mxu0 0.0
        %2659 = vmatpush1.msra.mxu0 0.0
        %2660 = vmatprep.subr.mxu0 0.0
        %2661 = vmatpush1.msra.mxu0 0.0
        %2662 = vmatprep.subr.mxu0 0.0
        %2663 = vmatpush1.msra.mxu0 0.0
        %2664 = vmatprep.subr.mxu0 0.0
        %2665 = vmatpush1.msra.mxu0 0.0
        %2666 = vmatprep.subr.mxu0 0.0
        %2667 = vmatpush1.msra.mxu0 0.0
        %2668 = vmatprep.subr.mxu0 0.0
        %2669 = vmatpush1.msra.mxu0 0.0
        %2670 = vmatprep.subr.mxu0 0.0
        %2671 = vmatpush1.msra.mxu0 0.0
        %2672 = vmatprep.subr.mxu0 0.0
        %2673 = vmatpush1.msra.mxu0 0.0
        %2674 = vmatprep.subr.mxu0 0.0
        %2675 = vmatpush1.msra.mxu0 0.0
        %2676 = vmatprep.subr.mxu0 0.0
        %2677 = vmatpush1.msra.mxu0 0.0
        %2678 = vmatprep.subr.mxu0 0.0
        %2679 = vmatpush1.msra.mxu0 0.0
        %2680 = vmatprep.subr.mxu0 0.0
        %2681 = vmatpush1.msra.mxu0 0.0
        %2682 = vmatprep.subr.mxu0 0.0
        %2683 = vmatpush1.msra.mxu0 0.0
        %2684 = vmatprep.subr.mxu0 0.0
        %2685 = vmatpush1.msra.mxu0 0.0
        %2686 = vmatprep.subr.mxu0 0.0
        %2687 = vmatpush1.msra.mxu0 0.0
        %2688 = vmatprep.subr.mxu0 0.0
        %2689 = vmatpush1.msra.mxu0 0.0
        %2690 = vmatprep.subr.mxu0 0.0
        %2691 = vmatpush1.msra.mxu0 0.0
        %2692 = vmatprep.subr.mxu0 0.0
        %2693 = vmatpush1.msra.mxu0 0.0
        %2694 = vmatprep.subr.mxu0 0.0
        %2695 = vmatpush1.msra.mxu0 0.0
        %2696 = vmatprep.subr.mxu0 0.0
        %2697 = vmatpush1.msra.mxu0 0.0
        %2698 = vmatprep.subr.mxu0 0.0
        %2699 = vmatpush1.msra.mxu0 0.0
        %2700 = vmatprep.subr.mxu0 0.0
        %2701 = vmatpush1.msra.mxu0 0.0
        %2702 = vmatprep.subr.mxu0 0.0
        %2703 = vmatpush1.msra.mxu0 0.0
        %2704 = vmatprep.subr.mxu0 0.0
        %2705 = vmatpush1.msra.mxu0 0.0
        %2706 = vmatprep.subr.mxu0 0.0
        %2707 = vmatpush1.msra.mxu0 0.0
        %2708 = vmatprep.subr.mxu0 0.0
        %2709 = vmatpush1.msra.mxu0 0.0
        %2710 = vmatprep.subr.mxu0 0.0
        %2711 = vmatpush1.msra.mxu0 0.0
        %2712 = vmatprep.subr.mxu0 0.0
        %2713 = vmatpush1.msra.mxu0 0.0
        %2714 = vmatprep.mubr.f32.mxu0 0.0
        %2715 = vmatmul.mubr.f32.gmra.mrb[0].mxu0 %v2642
        %v2716 = vpop.f32.mrb[0].mxu0
        %v2717 = vadd.f32 0.0, %v2716
        %v2718 = vpop.f32.mrb[0].mxu0
        %2719 = vmatprep.mubr.f32.mxu0 0.0
        %2720 = vmatmul.mubr.f32.gmra.mrb[0].mxu0 %v2644
        %v2721 = vpop.f32.mrb[0].mxu0
        %v2722 = vadd.f32 0.0, %v2721
        %v2723 = vpop.f32.mrb[0].mxu0
        %2724 = vmatprep.mubr.f32.mxu0 0.0
        %2725 = vmatmul.mubr.f32.gmra.mrb[0].mxu0 %v2646
        %v2726 = vpop.f32.mrb[0].mxu0
        %v2727 = vadd.f32 0.0, %v2726
        %v2728 = vpop.f32.mrb[0].mxu0
        %2729 = vmatprep.mubr.f32.mxu0 0.0
        %2730 = vmatmul.mubr.f32.gmra.mrb[0].mxu0 %v2648
        %v2731 = vpop.f32.mrb[0].mxu0
        %v2732 = vadd.f32 0.0, %v2731
        %v2733 = vpop.f32.mrb[0].mxu0
        %2734 = vdwg.mxu0
        %v2735 = vadd.f32 %v2627, %v2717
        %v2736 = vadd.f32 %v2628, %v2722
        %v2737 = vadd.f32 %v2629, %v2727
        %v2738 = vadd.f32 %v2630, %v2732
        %s2739 = scalar_lea.vmem %s6, 48
        %v2740 = vld [vmem:[%s2739] sm:$0xff]
        %v2741 = vrot.slane %v2076, 6
        %v2742 = vrot.slane %v2081, 6
        %v2743 = vsel %vm1380, %v2741, %v2742
        %v2744 = vrot.slane %v2086, 6
        %v2745 = vsel %vm1380, %v2742, %v2744
        %v2746 = vrot.slane %v2091, 6
        %v2747 = vsel %vm1380, %v2744, %v2746
        %v2748 = vrot.slane %v2096, 6
        %v2749 = vsel %vm1380, %v2746, %v2748
        %v2750 = vsel %vm907, %v2743, 0
        %v2752 = vsel %vm907, %v2745, 0
        %v2754 = vsel %vm907, %v2747, 0
        %v2756 = vsel %vm907, %v2749, 0
        %2758 = vmatprep.subr.mxu0 0.0
        %2759 = vmatpush1.msra.mxu0 %v2740
        %2760 = vmatprep.subr.mxu0 0.0
        %2761 = vmatpush1.msra.mxu0 0.0
        %2762 = vmatprep.subr.mxu0 0.0
        %2763 = vmatpush1.msra.mxu0 0.0
        %2764 = vmatprep.subr.mxu0 0.0
        %2765 = vmatpush1.msra.mxu0 0.0
        %2766 = vmatprep.subr.mxu0 0.0
        %2767 = vmatpush1.msra.mxu0 0.0
        %2768 = vmatprep.subr.mxu0 0.0
        %2769 = vmatpush1.msra.mxu0 0.0
        %2770 = vmatprep.subr.mxu0 0.0
        %2771 = vmatpush1.msra.mxu0 0.0
        %2772 = vmatprep.subr.mxu0 0.0
        %2773 = vmatpush1.msra.mxu0 0.0
        %2774 = vmatprep.subr.mxu0 0.0
        %2775 = vmatpush1.msra.mxu0 0.0
        %2776 = vmatprep.subr.mxu0 0.0
        %2777 = vmatpush1.msra.mxu0 0.0
        %2778 = vmatprep.subr.mxu0 0.0
        %2779 = vmatpush1.msra.mxu0 0.0
        %2780 = vmatprep.subr.mxu0 0.0
        %2781 = vmatpush1.msra.mxu0 0.0
        %2782 = vmatprep.subr.mxu0 0.0
        %2783 = vmatpush1.msra.mxu0 0.0
        %2784 = vmatprep.subr.mxu0 0.0
        %2785 = vmatpush1.msra.mxu0 0.0
        %2786 = vmatprep.subr.mxu0 0.0
        %2787 = vmatpush1.msra.mxu0 0.0
        %2788 = vmatprep.subr.mxu0 0.0
        %2789 = vmatpush1.msra.mxu0 0.0
        %2790 = vmatprep.subr.mxu0 0.0
        %2791 = vmatpush1.msra.mxu0 0.0
        %2792 = vmatprep.subr.mxu0 0.0
        %2793 = vmatpush1.msra.mxu0 0.0
        %2794 = vmatprep.subr.mxu0 0.0
        %2795 = vmatpush1.msra.mxu0 0.0
        %2796 = vmatprep.subr.mxu0 0.0
        %2797 = vmatpush1.msra.mxu0 0.0
        %2798 = vmatprep.subr.mxu0 0.0
        %2799 = vmatpush1.msra.mxu0 0.0
        %2800 = vmatprep.subr.mxu0 0.0
        %2801 = vmatpush1.msra.mxu0 0.0
        %2802 = vmatprep.subr.mxu0 0.0
        %2803 = vmatpush1.msra.mxu0 0.0
        %2804 = vmatprep.subr.mxu0 0.0
        %2805 = vmatpush1.msra.mxu0 0.0
        %2806 = vmatprep.subr.mxu0 0.0
        %2807 = vmatpush1.msra.mxu0 0.0
        %2808 = vmatprep.subr.mxu0 0.0
        %2809 = vmatpush1.msra.mxu0 0.0
        %2810 = vmatprep.subr.mxu0 0.0
        %2811 = vmatpush1.msra.mxu0 0.0
        %2812 = vmatprep.subr.mxu0 0.0
        %2813 = vmatpush1.msra.mxu0 0.0
        %2814 = vmatprep.subr.mxu0 0.0
        %2815 = vmatpush1.msra.mxu0 0.0
        %2816 = vmatprep.subr.mxu0 0.0
        %2817 = vmatpush1.msra.mxu0 0.0
        %2818 = vmatprep.subr.mxu0 0.0
        %2819 = vmatpush1.msra.mxu0 0.0
        %2820 = vmatprep.subr.mxu0 0.0
        %2821 = vmatpush1.msra.mxu0 0.0
        %2822 = vmatprep.mubr.f32.mxu0 0.0
        %2823 = vmatmul.mubr.f32.gmra.mrb[0].mxu0 %v2750
        %v2824 = vpop.f32.mrb[0].mxu0
        %v2825 = vadd.f32 0.0, %v2824
        %v2826 = vpop.f32.mrb[0].mxu0
        %2827 = vmatprep.mubr.f32.mxu0 0.0
        %2828 = vmatmul.mubr.f32.gmra.mrb[0].mxu0 %v2752
        %v2829 = vpop.f32.mrb[0].mxu0
        %v2830 = vadd.f32 0.0, %v2829
        %v2831 = vpop.f32.mrb[0].mxu0
        %2832 = vmatprep.mubr.f32.mxu0 0.0
        %2833 = vmatmul.mubr.f32.gmra.mrb[0].mxu0 %v2754
        %v2834 = vpop.f32.mrb[0].mxu0
        %v2835 = vadd.f32 0.0, %v2834
        %v2836 = vpop.f32.mrb[0].mxu0
        %2837 = vmatprep.mubr.f32.mxu0 0.0
        %2838 = vmatmul.mubr.f32.gmra.mrb[0].mxu0 %v2756
        %v2839 = vpop.f32.mrb[0].mxu0
        %v2840 = vadd.f32 0.0, %v2839
        %v2841 = vpop.f32.mrb[0].mxu0
        %2842 = vdwg.mxu0
        %v2843 = vadd.f32 %v2735, %v2825
        %v2844 = vadd.f32 %v2736, %v2830
        %v2845 = vadd.f32 %v2737, %v2835
        %v2846 = vadd.f32 %v2738, %v2840
        %s2847 = scalar_lea.vmem %s6, 56
        %v2848 = vld [vmem:[%s2847] sm:$0xff]
        %v2849 = vrot.slane %v2076, 7
        %v2850 = vrot.slane %v2081, 7
        %v2851 = vsel %vm1438, %v2849, %v2850
        %v2852 = vrot.slane %v2086, 7
        %v2853 = vsel %vm1438, %v2850, %v2852
        %v2854 = vrot.slane %v2091, 7
        %v2855 = vsel %vm1438, %v2852, %v2854
        %v2856 = vrot.slane %v2096, 7
        %v2857 = vsel %vm1438, %v2854, %v2856
        %v2858 = vsel %vm907, %v2851, 0
        %v2860 = vsel %vm907, %v2853, 0
        %v2862 = vsel %vm907, %v2855, 0
        %v2864 = vsel %vm907, %v2857, 0
        %2866 = vmatprep.subr.mxu0 0.0
        %2867 = vmatpush1.msra.mxu0 %v2848
        %2868 = vmatprep.subr.mxu0 0.0
        %2869 = vmatpush1.msra.mxu0 0.0
        %2870 = vmatprep.subr.mxu0 0.0
        %2871 = vmatpush1.msra.mxu0 0.0
        %2872 = vmatprep.subr.mxu0 0.0
        %2873 = vmatpush1.msra.mxu0 0.0
        %2874 = vmatprep.subr.mxu0 0.0
        %2875 = vmatpush1.msra.mxu0 0.0
        %2876 = vmatprep.subr.mxu0 0.0
        %2877 = vmatpush1.msra.mxu0 0.0
        %2878 = vmatprep.subr.mxu0 0.0
        %2879 = vmatpush1.msra.mxu0 0.0
        %2880 = vmatprep.subr.mxu0 0.0
        %2881 = vmatpush1.msra.mxu0 0.0
        %2882 = vmatprep.subr.mxu0 0.0
        %2883 = vmatpush1.msra.mxu0 0.0
        %2884 = vmatprep.subr.mxu0 0.0
        %2885 = vmatpush1.msra.mxu0 0.0
        %2886 = vmatprep.subr.mxu0 0.0
        %2887 = vmatpush1.msra.mxu0 0.0
        %2888 = vmatprep.subr.mxu0 0.0
        %2889 = vmatpush1.msra.mxu0 0.0
        %2890 = vmatprep.subr.mxu0 0.0
        %2891 = vmatpush1.msra.mxu0 0.0
        %2892 = vmatprep.subr.mxu0 0.0
        %2893 = vmatpush1.msra.mxu0 0.0
        %2894 = vmatprep.subr.mxu0 0.0
        %2895 = vmatpush1.msra.mxu0 0.0
        %2896 = vmatprep.subr.mxu0 0.0
        %2897 = vmatpush1.msra.mxu0 0.0
        %2898 = vmatprep.subr.mxu0 0.0
        %2899 = vmatpush1.msra.mxu0 0.0
        %2900 = vmatprep.subr.mxu0 0.0
        %2901 = vmatpush1.msra.mxu0 0.0
        %2902 = vmatprep.subr.mxu0 0.0
        %2903 = vmatpush1.msra.mxu0 0.0
        %2904 = vmatprep.subr.mxu0 0.0
        %2905 = vmatpush1.msra.mxu0 0.0
        %2906 = vmatprep.subr.mxu0 0.0
        %2907 = vmatpush1.msra.mxu0 0.0
        %2908 = vmatprep.subr.mxu0 0.0
        %2909 = vmatpush1.msra.mxu0 0.0
        %2910 = vmatprep.subr.mxu0 0.0
        %2911 = vmatpush1.msra.mxu0 0.0
        %2912 = vmatprep.subr.mxu0 0.0
        %2913 = vmatpush1.msra.mxu0 0.0
        %2914 = vmatprep.subr.mxu0 0.0
        %2915 = vmatpush1.msra.mxu0 0.0
        %2916 = vmatprep.subr.mxu0 0.0
        %2917 = vmatpush1.msra.mxu0 0.0
        %2918 = vmatprep.subr.mxu0 0.0
        %2919 = vmatpush1.msra.mxu0 0.0
        %2920 = vmatprep.subr.mxu0 0.0
        %2921 = vmatpush1.msra.mxu0 0.0
        %2922 = vmatprep.subr.mxu0 0.0
        %2923 = vmatpush1.msra.mxu0 0.0
        %2924 = vmatprep.subr.mxu0 0.0
        %2925 = vmatpush1.msra.mxu0 0.0
        %2926 = vmatprep.subr.mxu0 0.0
        %2927 = vmatpush1.msra.mxu0 0.0
        %2928 = vmatprep.subr.mxu0 0.0
        %2929 = vmatpush1.msra.mxu0 0.0
        %2930 = vmatprep.mubr.f32.mxu0 0.0
        %2931 = vmatmul.mubr.f32.gmra.mrb[0].mxu0 %v2858
        %v2932 = vpop.f32.mrb[0].mxu0
        %v2933 = vadd.f32 0.0, %v2932
        %v2934 = vpop.f32.mrb[0].mxu0
        %2935 = vmatprep.mubr.f32.mxu0 0.0
        %2936 = vmatmul.mubr.f32.gmra.mrb[0].mxu0 %v2860
        %v2937 = vpop.f32.mrb[0].mxu0
        %v2938 = vadd.f32 0.0, %v2937
        %v2939 = vpop.f32.mrb[0].mxu0
        %2940 = vmatprep.mubr.f32.mxu0 0.0
        %2941 = vmatmul.mubr.f32.gmra.mrb[0].mxu0 %v2862
        %v2942 = vpop.f32.mrb[0].mxu0
        %v2943 = vadd.f32 0.0, %v2942
        %v2944 = vpop.f32.mrb[0].mxu0
        %2945 = vmatprep.mubr.f32.mxu0 0.0
        %2946 = vmatmul.mubr.f32.gmra.mrb[0].mxu0 %v2864
        %v2947 = vpop.f32.mrb[0].mxu0
        %v2948 = vadd.f32 0.0, %v2947
        %v2949 = vpop.f32.mrb[0].mxu0
        %2950 = vdwg.mxu0
        %v2951 = vadd.f32 %v2843, %v2933
        %v2952 = vadd.f32 %v2844, %v2938
        %v2953 = vadd.f32 %v2845, %v2943
        %v2954 = vadd.f32 %v2846, %v2948
        %s2955 = scalar_lea.vmem %s6, 64
        %v2956 = vld [vmem:[%s2955] sm:$0xff]
        %v2957 = vsel %vm907, %v2096, 0
        %2959 = vmatprep.subr.mxu0 0.0
        %2960 = vmatpush1.msra.mxu0 %v2956
        %2961 = vmatprep.subr.mxu0 0.0
        %2962 = vmatpush1.msra.mxu0 0.0
        %2963 = vmatprep.subr.mxu0 0.0
        %2964 = vmatpush1.msra.mxu0 0.0
        %2965 = vmatprep.subr.mxu0 0.0
        %2966 = vmatpush1.msra.mxu0 0.0
        %2967 = vmatprep.subr.mxu0 0.0
        %2968 = vmatpush1.msra.mxu0 0.0
        %2969 = vmatprep.subr.mxu0 0.0
        %2970 = vmatpush1.msra.mxu0 0.0
        %2971 = vmatprep.subr.mxu0 0.0
        %2972 = vmatpush1.msra.mxu0 0.0
        %2973 = vmatprep.subr.mxu0 0.0
        %2974 = vmatpush1.msra.mxu0 0.0
        %2975 = vmatprep.subr.mxu0 0.0
        %2976 = vmatpush1.msra.mxu0 0.0
        %2977 = vmatprep.subr.mxu0 0.0
        %2978 = vmatpush1.msra.mxu0 0.0
        %2979 = vmatprep.subr.mxu0 0.0
        %2980 = vmatpush1.msra.mxu0 0.0
        %2981 = vmatprep.subr.mxu0 0.0
        %2982 = vmatpush1.msra.mxu0 0.0
        %2983 = vmatprep.subr.mxu0 0.0
        %2984 = vmatpush1.msra.mxu0 0.0
        %2985 = vmatprep.subr.mxu0 0.0
        %2986 = vmatpush1.msra.mxu0 0.0
        %2987 = vmatprep.subr.mxu0 0.0
        %2988 = vmatpush1.msra.mxu0 0.0
        %2989 = vmatprep.subr.mxu0 0.0
        %2990 = vmatpush1.msra.mxu0 0.0
        %2991 = vmatprep.subr.mxu0 0.0
        %2992 = vmatpush1.msra.mxu0 0.0
        %2993 = vmatprep.subr.mxu0 0.0
        %2994 = vmatpush1.msra.mxu0 0.0
        %2995 = vmatprep.subr.mxu0 0.0
        %2996 = vmatpush1.msra.mxu0 0.0
        %2997 = vmatprep.subr.mxu0 0.0
        %2998 = vmatpush1.msra.mxu0 0.0
        %2999 = vmatprep.subr.mxu0 0.0
        %3000 = vmatpush1.msra.mxu0 0.0
        %3001 = vmatprep.subr.mxu0 0.0
        %3002 = vmatpush1.msra.mxu0 0.0
        %3003 = vmatprep.subr.mxu0 0.0
        %3004 = vmatpush1.msra.mxu0 0.0
        %3005 = vmatprep.subr.mxu0 0.0
        %3006 = vmatpush1.msra.mxu0 0.0
        %3007 = vmatprep.subr.mxu0 0.0
        %3008 = vmatpush1.msra.mxu0 0.0
        %3009 = vmatprep.subr.mxu0 0.0
        %3010 = vmatpush1.msra.mxu0 0.0
        %3011 = vmatprep.subr.mxu0 0.0
        %3012 = vmatpush1.msra.mxu0 0.0
        %3013 = vmatprep.subr.mxu0 0.0
        %3014 = vmatpush1.msra.mxu0 0.0
        %3015 = vmatprep.subr.mxu0 0.0
        %3016 = vmatpush1.msra.mxu0 0.0
        %3017 = vmatprep.subr.mxu0 0.0
        %3018 = vmatpush1.msra.mxu0 0.0
        %3019 = vmatprep.subr.mxu0 0.0
        %3020 = vmatpush1.msra.mxu0 0.0
        %3021 = vmatprep.subr.mxu0 0.0
        %3022 = vmatpush1.msra.mxu0 0.0
        %3023 = vmatprep.mubr.f32.mxu0 0.0
        %3024 = vmatmul.mubr.f32.gmra.mrb[0].mxu0 %v2216
        %v3025 = vpop.f32.mrb[0].mxu0
        %v3026 = vadd.f32 0.0, %v3025
        %v3027 = vpop.f32.mrb[0].mxu0
        %3028 = vmatprep.mubr.f32.mxu0 0.0
        %3029 = vmatmul.mubr.f32.gmra.mrb[0].mxu0 %v2218
        %v3030 = vpop.f32.mrb[0].mxu0
        %v3031 = vadd.f32 0.0, %v3030
        %v3032 = vpop.f32.mrb[0].mxu0
        %3033 = vmatprep.mubr.f32.mxu0 0.0
        %3034 = vmatmul.mubr.f32.gmra.mrb[0].mxu0 %v2220
        %v3035 = vpop.f32.mrb[0].mxu0
        %v3036 = vadd.f32 0.0, %v3035
        %v3037 = vpop.f32.mrb[0].mxu0
        %3038 = vmatprep.mubr.f32.mxu0 0.0
        %3039 = vmatmul.mubr.f32.gmra.mrb[0].mxu0 %v2957
        %v3040 = vpop.f32.mrb[0].mxu0
        %v3041 = vadd.f32 0.0, %v3040
        %v3042 = vpop.f32.mrb[0].mxu0
        %3043 = vdwg.mxu0
        %v3044 = vadd.f32 %v2951, %v3026
        %v3045 = vadd.f32 %v2952, %v3031
        %v3046 = vadd.f32 %v2953, %v3036
        %v3047 = vadd.f32 %v2954, %v3041
        %s3048 = scalar_lea.vmem %s6, 72
        %v3049 = vld [vmem:[%s3048] sm:$0xff]
        %v3051 = vrot.slane %v2101, 1
        %v3052 = vsel %vm1090, %v2119, %v3051
        %v3053 = vsel %vm907, %v3052, 0
        %3055 = vmatprep.subr.mxu0 0.0
        %3056 = vmatpush1.msra.mxu0 %v3049
        %3057 = vmatprep.subr.mxu0 0.0
        %3058 = vmatpush1.msra.mxu0 0.0
        %3059 = vmatprep.subr.mxu0 0.0
        %3060 = vmatpush1.msra.mxu0 0.0
        %3061 = vmatprep.subr.mxu0 0.0
        %3062 = vmatpush1.msra.mxu0 0.0
        %3063 = vmatprep.subr.mxu0 0.0
        %3064 = vmatpush1.msra.mxu0 0.0
        %3065 = vmatprep.subr.mxu0 0.0
        %3066 = vmatpush1.msra.mxu0 0.0
        %3067 = vmatprep.subr.mxu0 0.0
        %3068 = vmatpush1.msra.mxu0 0.0
        %3069 = vmatprep.subr.mxu0 0.0
        %3070 = vmatpush1.msra.mxu0 0.0
        %3071 = vmatprep.subr.mxu0 0.0
        %3072 = vmatpush1.msra.mxu0 0.0
        %3073 = vmatprep.subr.mxu0 0.0
        %3074 = vmatpush1.msra.mxu0 0.0
        %3075 = vmatprep.subr.mxu0 0.0
        %3076 = vmatpush1.msra.mxu0 0.0
        %3077 = vmatprep.subr.mxu0 0.0
        %3078 = vmatpush1.msra.mxu0 0.0
        %3079 = vmatprep.subr.mxu0 0.0
        %3080 = vmatpush1.msra.mxu0 0.0
        %3081 = vmatprep.subr.mxu0 0.0
        %3082 = vmatpush1.msra.mxu0 0.0
        %3083 = vmatprep.subr.mxu0 0.0
        %3084 = vmatpush1.msra.mxu0 0.0
        %3085 = vmatprep.subr.mxu0 0.0
        %3086 = vmatpush1.msra.mxu0 0.0
        %3087 = vmatprep.subr.mxu0 0.0
        %3088 = vmatpush1.msra.mxu0 0.0
        %3089 = vmatprep.subr.mxu0 0.0
        %3090 = vmatpush1.msra.mxu0 0.0
        %3091 = vmatprep.subr.mxu0 0.0
        %3092 = vmatpush1.msra.mxu0 0.0
        %3093 = vmatprep.subr.mxu0 0.0
        %3094 = vmatpush1.msra.mxu0 0.0
        %3095 = vmatprep.subr.mxu0 0.0
        %3096 = vmatpush1.msra.mxu0 0.0
        %3097 = vmatprep.subr.mxu0 0.0
        %3098 = vmatpush1.msra.mxu0 0.0
        %3099 = vmatprep.subr.mxu0 0.0
        %3100 = vmatpush1.msra.mxu0 0.0
        %3101 = vmatprep.subr.mxu0 0.0
        %3102 = vmatpush1.msra.mxu0 0.0
        %3103 = vmatprep.subr.mxu0 0.0
        %3104 = vmatpush1.msra.mxu0 0.0
        %3105 = vmatprep.subr.mxu0 0.0
        %3106 = vmatpush1.msra.mxu0 0.0
        %3107 = vmatprep.subr.mxu0 0.0
        %3108 = vmatpush1.msra.mxu0 0.0
        %3109 = vmatprep.subr.mxu0 0.0
        %3110 = vmatpush1.msra.mxu0 0.0
        %3111 = vmatprep.subr.mxu0 0.0
        %3112 = vmatpush1.msra.mxu0 0.0
        %3113 = vmatprep.subr.mxu0 0.0
        %3114 = vmatpush1.msra.mxu0 0.0
        %3115 = vmatprep.subr.mxu0 0.0
        %3116 = vmatpush1.msra.mxu0 0.0
        %3117 = vmatprep.subr.mxu0 0.0
        %3118 = vmatpush1.msra.mxu0 0.0
        %3119 = vmatprep.mubr.f32.mxu0 0.0
        %3120 = vmatmul.mubr.f32.gmra.mrb[0].mxu0 %v2123
        %v3121 = vpop.f32.mrb[0].mxu0
        %v3122 = vadd.f32 0.0, %v3121
        %v3123 = vpop.f32.mrb[0].mxu0
        %3124 = vmatprep.mubr.f32.mxu0 0.0
        %3125 = vmatmul.mubr.f32.gmra.mrb[0].mxu0 %v2125
        %v3126 = vpop.f32.mrb[0].mxu0
        %v3127 = vadd.f32 0.0, %v3126
        %v3128 = vpop.f32.mrb[0].mxu0
        %3129 = vmatprep.mubr.f32.mxu0 0.0
        %3130 = vmatmul.mubr.f32.gmra.mrb[0].mxu0 %v2127
        %v3131 = vpop.f32.mrb[0].mxu0
        %v3132 = vadd.f32 0.0, %v3131
        %v3133 = vpop.f32.mrb[0].mxu0
        %3134 = vmatprep.mubr.f32.mxu0 0.0
        %3135 = vmatmul.mubr.f32.gmra.mrb[0].mxu0 %v3053
        %v3136 = vpop.f32.mrb[0].mxu0
        %v3137 = vadd.f32 0.0, %v3136
        %v3138 = vpop.f32.mrb[0].mxu0
        %3139 = vdwg.mxu0
        %v3140 = vadd.f32 %v3044, %v3122
        %v3141 = vadd.f32 %v3045, %v3127
        %v3142 = vadd.f32 %v3046, %v3132
        %v3143 = vadd.f32 %v3047, %v3137
        %s3144 = scalar_lea.vmem %s6, 80
        %v3145 = vld [vmem:[%s3144] sm:$0xff]
        %v3146 = vrot.slane %v2101, 2
        %v3147 = vsel %vm1148, %v2316, %v3146
        %v3148 = vsel %vm907, %v3147, 0
        %3150 = vmatprep.subr.mxu0 0.0
        %3151 = vmatpush1.msra.mxu0 %v3145
        %3152 = vmatprep.subr.mxu0 0.0
        %3153 = vmatpush1.msra.mxu0 0.0
        %3154 = vmatprep.subr.mxu0 0.0
        %3155 = vmatpush1.msra.mxu0 0.0
        %3156 = vmatprep.subr.mxu0 0.0
        %3157 = vmatpush1.msra.mxu0 0.0
        %3158 = vmatprep.subr.mxu0 0.0
        %3159 = vmatpush1.msra.mxu0 0.0
        %3160 = vmatprep.subr.mxu0 0.0
        %3161 = vmatpush1.msra.mxu0 0.0
        %3162 = vmatprep.subr.mxu0 0.0
        %3163 = vmatpush1.msra.mxu0 0.0
        %3164 = vmatprep.subr.mxu0 0.0
        %3165 = vmatpush1.msra.mxu0 0.0
        %3166 = vmatprep.subr.mxu0 0.0
        %3167 = vmatpush1.msra.mxu0 0.0
        %3168 = vmatprep.subr.mxu0 0.0
        %3169 = vmatpush1.msra.mxu0 0.0
        %3170 = vmatprep.subr.mxu0 0.0
        %3171 = vmatpush1.msra.mxu0 0.0
        %3172 = vmatprep.subr.mxu0 0.0
        %3173 = vmatpush1.msra.mxu0 0.0
        %3174 = vmatprep.subr.mxu0 0.0
        %3175 = vmatpush1.msra.mxu0 0.0
        %3176 = vmatprep.subr.mxu0 0.0
        %3177 = vmatpush1.msra.mxu0 0.0
        %3178 = vmatprep.subr.mxu0 0.0
        %3179 = vmatpush1.msra.mxu0 0.0
        %3180 = vmatprep.subr.mxu0 0.0
        %3181 = vmatpush1.msra.mxu0 0.0
        %3182 = vmatprep.subr.mxu0 0.0
        %3183 = vmatpush1.msra.mxu0 0.0
        %3184 = vmatprep.subr.mxu0 0.0
        %3185 = vmatpush1.msra.mxu0 0.0
        %3186 = vmatprep.subr.mxu0 0.0
        %3187 = vmatpush1.msra.mxu0 0.0
        %3188 = vmatprep.subr.mxu0 0.0
        %3189 = vmatpush1.msra.mxu0 0.0
        %3190 = vmatprep.subr.mxu0 0.0
        %3191 = vmatpush1.msra.mxu0 0.0
        %3192 = vmatprep.subr.mxu0 0.0
        %3193 = vmatpush1.msra.mxu0 0.0
        %3194 = vmatprep.subr.mxu0 0.0
        %3195 = vmatpush1.msra.mxu0 0.0
        %3196 = vmatprep.subr.mxu0 0.0
        %3197 = vmatpush1.msra.mxu0 0.0
        %3198 = vmatprep.subr.mxu0 0.0
        %3199 = vmatpush1.msra.mxu0 0.0
        %3200 = vmatprep.subr.mxu0 0.0
        %3201 = vmatpush1.msra.mxu0 0.0
        %3202 = vmatprep.subr.mxu0 0.0
        %3203 = vmatpush1.msra.mxu0 0.0
        %3204 = vmatprep.subr.mxu0 0.0
        %3205 = vmatpush1.msra.mxu0 0.0
        %3206 = vmatprep.subr.mxu0 0.0
        %3207 = vmatpush1.msra.mxu0 0.0
        %3208 = vmatprep.subr.mxu0 0.0
        %3209 = vmatpush1.msra.mxu0 0.0
        %3210 = vmatprep.subr.mxu0 0.0
        %3211 = vmatpush1.msra.mxu0 0.0
        %3212 = vmatprep.subr.mxu0 0.0
        %3213 = vmatpush1.msra.mxu0 0.0
        %3214 = vmatprep.mubr.f32.mxu0 0.0
        %3215 = vmatmul.mubr.f32.gmra.mrb[0].mxu0 %v2320
        %v3216 = vpop.f32.mrb[0].mxu0
        %v3217 = vadd.f32 0.0, %v3216
        %v3218 = vpop.f32.mrb[0].mxu0
        %3219 = vmatprep.mubr.f32.mxu0 0.0
        %3220 = vmatmul.mubr.f32.gmra.mrb[0].mxu0 %v2322
        %v3221 = vpop.f32.mrb[0].mxu0
        %v3222 = vadd.f32 0.0, %v3221
        %v3223 = vpop.f32.mrb[0].mxu0
        %3224 = vmatprep.mubr.f32.mxu0 0.0
        %3225 = vmatmul.mubr.f32.gmra.mrb[0].mxu0 %v2324
        %v3226 = vpop.f32.mrb[0].mxu0
        %v3227 = vadd.f32 0.0, %v3226
        %v3228 = vpop.f32.mrb[0].mxu0
        %3229 = vmatprep.mubr.f32.mxu0 0.0
        %3230 = vmatmul.mubr.f32.gmra.mrb[0].mxu0 %v3148
        %v3231 = vpop.f32.mrb[0].mxu0
        %v3232 = vadd.f32 0.0, %v3231
        %v3233 = vpop.f32.mrb[0].mxu0
        %3234 = vdwg.mxu0
        %v3235 = vadd.f32 %v3140, %v3217
        %v3236 = vadd.f32 %v3141, %v3222
        %v3237 = vadd.f32 %v3142, %v3227
        %v3238 = vadd.f32 %v3143, %v3232
        %s3239 = scalar_lea.vmem %s6, 88
        %v3240 = vld [vmem:[%s3239] sm:$0xff]
        %v3241 = vrot.slane %v2101, 3
        %v3242 = vsel %vm1206, %v2424, %v3241
        %v3243 = vsel %vm907, %v3242, 0
        %3245 = vmatprep.subr.mxu0 0.0
        %3246 = vmatpush1.msra.mxu0 %v3240
        %3247 = vmatprep.subr.mxu0 0.0
        %3248 = vmatpush1.msra.mxu0 0.0
        %3249 = vmatprep.subr.mxu0 0.0
        %3250 = vmatpush1.msra.mxu0 0.0
        %3251 = vmatprep.subr.mxu0 0.0
        %3252 = vmatpush1.msra.mxu0 0.0
        %3253 = vmatprep.subr.mxu0 0.0
        %3254 = vmatpush1.msra.mxu0 0.0
        %3255 = vmatprep.subr.mxu0 0.0
        %3256 = vmatpush1.msra.mxu0 0.0
        %3257 = vmatprep.subr.mxu0 0.0
        %3258 = vmatpush1.msra.mxu0 0.0
        %3259 = vmatprep.subr.mxu0 0.0
        %3260 = vmatpush1.msra.mxu0 0.0
        %3261 = vmatprep.subr.mxu0 0.0
        %3262 = vmatpush1.msra.mxu0 0.0
        %3263 = vmatprep.subr.mxu0 0.0
        %3264 = vmatpush1.msra.mxu0 0.0
        %3265 = vmatprep.subr.mxu0 0.0
        %3266 = vmatpush1.msra.mxu0 0.0
        %3267 = vmatprep.subr.mxu0 0.0
        %3268 = vmatpush1.msra.mxu0 0.0
        %3269 = vmatprep.subr.mxu0 0.0
        %3270 = vmatpush1.msra.mxu0 0.0
        %3271 = vmatprep.subr.mxu0 0.0
        %3272 = vmatpush1.msra.mxu0 0.0
        %3273 = vmatprep.subr.mxu0 0.0
        %3274 = vmatpush1.msra.mxu0 0.0
        %3275 = vmatprep.subr.mxu0 0.0
        %3276 = vmatpush1.msra.mxu0 0.0
        %3277 = vmatprep.subr.mxu0 0.0
        %3278 = vmatpush1.msra.mxu0 0.0
        %3279 = vmatprep.subr.mxu0 0.0
        %3280 = vmatpush1.msra.mxu0 0.0
        %3281 = vmatprep.subr.mxu0 0.0
        %3282 = vmatpush1.msra.mxu0 0.0
        %3283 = vmatprep.subr.mxu0 0.0
        %3284 = vmatpush1.msra.mxu0 0.0
        %3285 = vmatprep.subr.mxu0 0.0
        %3286 = vmatpush1.msra.mxu0 0.0
        %3287 = vmatprep.subr.mxu0 0.0
        %3288 = vmatpush1.msra.mxu0 0.0
        %3289 = vmatprep.subr.mxu0 0.0
        %3290 = vmatpush1.msra.mxu0 0.0
        %3291 = vmatprep.subr.mxu0 0.0
        %3292 = vmatpush1.msra.mxu0 0.0
        %3293 = vmatprep.subr.mxu0 0.0
        %3294 = vmatpush1.msra.mxu0 0.0
        %3295 = vmatprep.subr.mxu0 0.0
        %3296 = vmatpush1.msra.mxu0 0.0
        %3297 = vmatprep.subr.mxu0 0.0
        %3298 = vmatpush1.msra.mxu0 0.0
        %3299 = vmatprep.subr.mxu0 0.0
        %3300 = vmatpush1.msra.mxu0 0.0
        %3301 = vmatprep.subr.mxu0 0.0
        %3302 = vmatpush1.msra.mxu0 0.0
        %3303 = vmatprep.subr.mxu0 0.0
        %3304 = vmatpush1.msra.mxu0 0.0
        %3305 = vmatprep.subr.mxu0 0.0
        %3306 = vmatpush1.msra.mxu0 0.0
        %3307 = vmatprep.subr.mxu0 0.0
        %3308 = vmatpush1.msra.mxu0 0.0
        %3309 = vmatprep.mubr.f32.mxu0 0.0
        %3310 = vmatmul.mubr.f32.gmra.mrb[0].mxu0 %v2428
        %v3311 = vpop.f32.mrb[0].mxu0
        %v3312 = vadd.f32 0.0, %v3311
        %v3313 = vpop.f32.mrb[0].mxu0
        %3314 = vmatprep.mubr.f32.mxu0 0.0
        %3315 = vmatmul.mubr.f32.gmra.mrb[0].mxu0 %v2430
        %v3316 = vpop.f32.mrb[0].mxu0
        %v3317 = vadd.f32 0.0, %v3316
        %v3318 = vpop.f32.mrb[0].mxu0
        %3319 = vmatprep.mubr.f32.mxu0 0.0
        %3320 = vmatmul.mubr.f32.gmra.mrb[0].mxu0 %v2432
        %v3321 = vpop.f32.mrb[0].mxu0
        %v3322 = vadd.f32 0.0, %v3321
        %v3323 = vpop.f32.mrb[0].mxu0
        %3324 = vmatprep.mubr.f32.mxu0 0.0
        %3325 = vmatmul.mubr.f32.gmra.mrb[0].mxu0 %v3243
        %v3326 = vpop.f32.mrb[0].mxu0
        %v3327 = vadd.f32 0.0, %v3326
        %v3328 = vpop.f32.mrb[0].mxu0
        %3329 = vdwg.mxu0
        %v3330 = vadd.f32 %v3235, %v3312
        %v3331 = vadd.f32 %v3236, %v3317
        %v3332 = vadd.f32 %v3237, %v3322
        %v3333 = vadd.f32 %v3238, %v3327
        %s3334 = scalar_lea.vmem %s6, 96
        %v3335 = vld [vmem:[%s3334] sm:$0xff]
        %v3336 = vrot.slane %v2101, 4
        %v3337 = vsel %vm1264, %v2532, %v3336
        %v3338 = vsel %vm907, %v3337, 0
        %3340 = vmatprep.subr.mxu0 0.0
        %3341 = vmatpush1.msra.mxu0 %v3335
        %3342 = vmatprep.subr.mxu0 0.0
        %3343 = vmatpush1.msra.mxu0 0.0
        %3344 = vmatprep.subr.mxu0 0.0
        %3345 = vmatpush1.msra.mxu0 0.0
        %3346 = vmatprep.subr.mxu0 0.0
        %3347 = vmatpush1.msra.mxu0 0.0
        %3348 = vmatprep.subr.mxu0 0.0
        %3349 = vmatpush1.msra.mxu0 0.0
        %3350 = vmatprep.subr.mxu0 0.0
        %3351 = vmatpush1.msra.mxu0 0.0
        %3352 = vmatprep.subr.mxu0 0.0
        %3353 = vmatpush1.msra.mxu0 0.0
        %3354 = vmatprep.subr.mxu0 0.0
        %3355 = vmatpush1.msra.mxu0 0.0
        %3356 = vmatprep.subr.mxu0 0.0
        %3357 = vmatpush1.msra.mxu0 0.0
        %3358 = vmatprep.subr.mxu0 0.0
        %3359 = vmatpush1.msra.mxu0 0.0
        %3360 = vmatprep.subr.mxu0 0.0
        %3361 = vmatpush1.msra.mxu0 0.0
        %3362 = vmatprep.subr.mxu0 0.0
        %3363 = vmatpush1.msra.mxu0 0.0
        %3364 = vmatprep.subr.mxu0 0.0
        %3365 = vmatpush1.msra.mxu0 0.0
        %3366 = vmatprep.subr.mxu0 0.0
        %3367 = vmatpush1.msra.mxu0 0.0
        %3368 = vmatprep.subr.mxu0 0.0
        %3369 = vmatpush1.msra.mxu0 0.0
        %3370 = vmatprep.subr.mxu0 0.0
        %3371 = vmatpush1.msra.mxu0 0.0
        %3372 = vmatprep.subr.mxu0 0.0
        %3373 = vmatpush1.msra.mxu0 0.0
        %3374 = vmatprep.subr.mxu0 0.0
        %3375 = vmatpush1.msra.mxu0 0.0
        %3376 = vmatprep.subr.mxu0 0.0
        %3377 = vmatpush1.msra.mxu0 0.0
        %3378 = vmatprep.subr.mxu0 0.0
        %3379 = vmatpush1.msra.mxu0 0.0
        %3380 = vmatprep.subr.mxu0 0.0
        %3381 = vmatpush1.msra.mxu0 0.0
        %3382 = vmatprep.subr.mxu0 0.0
        %3383 = vmatpush1.msra.mxu0 0.0
        %3384 = vmatprep.subr.mxu0 0.0
        %3385 = vmatpush1.msra.mxu0 0.0
        %3386 = vmatprep.subr.mxu0 0.0
        %3387 = vmatpush1.msra.mxu0 0.0
        %3388 = vmatprep.subr.mxu0 0.0
        %3389 = vmatpush1.msra.mxu0 0.0
        %3390 = vmatprep.subr.mxu0 0.0
        %3391 = vmatpush1.msra.mxu0 0.0
        %3392 = vmatprep.subr.mxu0 0.0
        %3393 = vmatpush1.msra.mxu0 0.0
        %3394 = vmatprep.subr.mxu0 0.0
        %3395 = vmatpush1.msra.mxu0 0.0
        %3396 = vmatprep.subr.mxu0 0.0
        %3397 = vmatpush1.msra.mxu0 0.0
        %3398 = vmatprep.subr.mxu0 0.0
        %3399 = vmatpush1.msra.mxu0 0.0
        %3400 = vmatprep.subr.mxu0 0.0
        %3401 = vmatpush1.msra.mxu0 0.0
        %3402 = vmatprep.subr.mxu0 0.0
        %3403 = vmatpush1.msra.mxu0 0.0
        %3404 = vmatprep.mubr.f32.mxu0 0.0
        %3405 = vmatmul.mubr.f32.gmra.mrb[0].mxu0 %v2536
        %v3406 = vpop.f32.mrb[0].mxu0
        %v3407 = vadd.f32 0.0, %v3406
        %v3408 = vpop.f32.mrb[0].mxu0
        %3409 = vmatprep.mubr.f32.mxu0 0.0
        %3410 = vmatmul.mubr.f32.gmra.mrb[0].mxu0 %v2538
        %v3411 = vpop.f32.mrb[0].mxu0
        %v3412 = vadd.f32 0.0, %v3411
        %v3413 = vpop.f32.mrb[0].mxu0
        %3414 = vmatprep.mubr.f32.mxu0 0.0
        %3415 = vmatmul.mubr.f32.gmra.mrb[0].mxu0 %v2540
        %v3416 = vpop.f32.mrb[0].mxu0
        %v3417 = vadd.f32 0.0, %v3416
        %v3418 = vpop.f32.mrb[0].mxu0
        %3419 = vmatprep.mubr.f32.mxu0 0.0
        %3420 = vmatmul.mubr.f32.gmra.mrb[0].mxu0 %v3338
        %v3421 = vpop.f32.mrb[0].mxu0
        %v3422 = vadd.f32 0.0, %v3421
        %v3423 = vpop.f32.mrb[0].mxu0
        %3424 = vdwg.mxu0
        %v3425 = vadd.f32 %v3330, %v3407
        %v3426 = vadd.f32 %v3331, %v3412
        %v3427 = vadd.f32 %v3332, %v3417
        %v3428 = vadd.f32 %v3333, %v3422
        %s3429 = scalar_lea.vmem %s6, 104
        %v3430 = vld [vmem:[%s3429] sm:$0xff]
        %v3431 = vrot.slane %v2101, 5
        %v3432 = vsel %vm1322, %v2640, %v3431
        %v3433 = vsel %vm907, %v3432, 0
        %3435 = vmatprep.subr.mxu0 0.0
        %3436 = vmatpush1.msra.mxu0 %v3430
        %3437 = vmatprep.subr.mxu0 0.0
        %3438 = vmatpush1.msra.mxu0 0.0
        %3439 = vmatprep.subr.mxu0 0.0
        %3440 = vmatpush1.msra.mxu0 0.0
        %3441 = vmatprep.subr.mxu0 0.0
        %3442 = vmatpush1.msra.mxu0 0.0
        %3443 = vmatprep.subr.mxu0 0.0
        %3444 = vmatpush1.msra.mxu0 0.0
        %3445 = vmatprep.subr.mxu0 0.0
        %3446 = vmatpush1.msra.mxu0 0.0
        %3447 = vmatprep.subr.mxu0 0.0
        %3448 = vmatpush1.msra.mxu0 0.0
        %3449 = vmatprep.subr.mxu0 0.0
        %3450 = vmatpush1.msra.mxu0 0.0
        %3451 = vmatprep.subr.mxu0 0.0
        %3452 = vmatpush1.msra.mxu0 0.0
        %3453 = vmatprep.subr.mxu0 0.0
        %3454 = vmatpush1.msra.mxu0 0.0
        %3455 = vmatprep.subr.mxu0 0.0
        %3456 = vmatpush1.msra.mxu0 0.0
        %3457 = vmatprep.subr.mxu0 0.0
        %3458 = vmatpush1.msra.mxu0 0.0
        %3459 = vmatprep.subr.mxu0 0.0
        %3460 = vmatpush1.msra.mxu0 0.0
        %3461 = vmatprep.subr.mxu0 0.0
        %3462 = vmatpush1.msra.mxu0 0.0
        %3463 = vmatprep.subr.mxu0 0.0
        %3464 = vmatpush1.msra.mxu0 0.0
        %3465 = vmatprep.subr.mxu0 0.0
        %3466 = vmatpush1.msra.mxu0 0.0
        %3467 = vmatprep.subr.mxu0 0.0
        %3468 = vmatpush1.msra.mxu0 0.0
        %3469 = vmatprep.subr.mxu0 0.0
        %3470 = vmatpush1.msra.mxu0 0.0
        %3471 = vmatprep.subr.mxu0 0.0
        %3472 = vmatpush1.msra.mxu0 0.0
        %3473 = vmatprep.subr.mxu0 0.0
        %3474 = vmatpush1.msra.mxu0 0.0
        %3475 = vmatprep.subr.mxu0 0.0
        %3476 = vmatpush1.msra.mxu0 0.0
        %3477 = vmatprep.subr.mxu0 0.0
        %3478 = vmatpush1.msra.mxu0 0.0
        %3479 = vmatprep.subr.mxu0 0.0
        %3480 = vmatpush1.msra.mxu0 0.0
        %3481 = vmatprep.subr.mxu0 0.0
        %3482 = vmatpush1.msra.mxu0 0.0
        %3483 = vmatprep.subr.mxu0 0.0
        %3484 = vmatpush1.msra.mxu0 0.0
        %3485 = vmatprep.subr.mxu0 0.0
        %3486 = vmatpush1.msra.mxu0 0.0
        %3487 = vmatprep.subr.mxu0 0.0
        %3488 = vmatpush1.msra.mxu0 0.0
        %3489 = vmatprep.subr.mxu0 0.0
        %3490 = vmatpush1.msra.mxu0 0.0
        %3491 = vmatprep.subr.mxu0 0.0
        %3492 = vmatpush1.msra.mxu0 0.0
        %3493 = vmatprep.subr.mxu0 0.0
        %3494 = vmatpush1.msra.mxu0 0.0
        %3495 = vmatprep.subr.mxu0 0.0
        %3496 = vmatpush1.msra.mxu0 0.0
        %3497 = vmatprep.subr.mxu0 0.0
        %3498 = vmatpush1.msra.mxu0 0.0
        %3499 = vmatprep.mubr.f32.mxu0 0.0
        %3500 = vmatmul.mubr.f32.gmra.mrb[0].mxu0 %v2644
        %v3501 = vpop.f32.mrb[0].mxu0
        %v3502 = vadd.f32 0.0, %v3501
        %v3503 = vpop.f32.mrb[0].mxu0
        %3504 = vmatprep.mubr.f32.mxu0 0.0
        %3505 = vmatmul.mubr.f32.gmra.mrb[0].mxu0 %v2646
        %v3506 = vpop.f32.mrb[0].mxu0
        %v3507 = vadd.f32 0.0, %v3506
        %v3508 = vpop.f32.mrb[0].mxu0
        %3509 = vmatprep.mubr.f32.mxu0 0.0
        %3510 = vmatmul.mubr.f32.gmra.mrb[0].mxu0 %v2648
        %v3511 = vpop.f32.mrb[0].mxu0
        %v3512 = vadd.f32 0.0, %v3511
        %v3513 = vpop.f32.mrb[0].mxu0
        %3514 = vmatprep.mubr.f32.mxu0 0.0
        %3515 = vmatmul.mubr.f32.gmra.mrb[0].mxu0 %v3433
        %v3516 = vpop.f32.mrb[0].mxu0
        %v3517 = vadd.f32 0.0, %v3516
        %v3518 = vpop.f32.mrb[0].mxu0
        %3519 = vdwg.mxu0
        %v3520 = vadd.f32 %v3425, %v3502
        %v3521 = vadd.f32 %v3426, %v3507
        %v3522 = vadd.f32 %v3427, %v3512
        %v3523 = vadd.f32 %v3428, %v3517
        %s3524 = scalar_lea.vmem %s6, 112
        %v3525 = vld [vmem:[%s3524] sm:$0xff]
        %v3526 = vrot.slane %v2101, 6
        %v3527 = vsel %vm1380, %v2748, %v3526
        %v3528 = vsel %vm907, %v3527, 0
        %3530 = vmatprep.subr.mxu0 0.0
        %3531 = vmatpush1.msra.mxu0 %v3525
        %3532 = vmatprep.subr.mxu0 0.0
        %3533 = vmatpush1.msra.mxu0 0.0
        %3534 = vmatprep.subr.mxu0 0.0
        %3535 = vmatpush1.msra.mxu0 0.0
        %3536 = vmatprep.subr.mxu0 0.0
        %3537 = vmatpush1.msra.mxu0 0.0
        %3538 = vmatprep.subr.mxu0 0.0
        %3539 = vmatpush1.msra.mxu0 0.0
        %3540 = vmatprep.subr.mxu0 0.0
        %3541 = vmatpush1.msra.mxu0 0.0
        %3542 = vmatprep.subr.mxu0 0.0
        %3543 = vmatpush1.msra.mxu0 0.0
        %3544 = vmatprep.subr.mxu0 0.0
        %3545 = vmatpush1.msra.mxu0 0.0
        %3546 = vmatprep.subr.mxu0 0.0
        %3547 = vmatpush1.msra.mxu0 0.0
        %3548 = vmatprep.subr.mxu0 0.0
        %3549 = vmatpush1.msra.mxu0 0.0
        %3550 = vmatprep.subr.mxu0 0.0
        %3551 = vmatpush1.msra.mxu0 0.0
        %3552 = vmatprep.subr.mxu0 0.0
        %3553 = vmatpush1.msra.mxu0 0.0
        %3554 = vmatprep.subr.mxu0 0.0
        %3555 = vmatpush1.msra.mxu0 0.0
        %3556 = vmatprep.subr.mxu0 0.0
        %3557 = vmatpush1.msra.mxu0 0.0
        %3558 = vmatprep.subr.mxu0 0.0
        %3559 = vmatpush1.msra.mxu0 0.0
        %3560 = vmatprep.subr.mxu0 0.0
        %3561 = vmatpush1.msra.mxu0 0.0
        %3562 = vmatprep.subr.mxu0 0.0
        %3563 = vmatpush1.msra.mxu0 0.0
        %3564 = vmatprep.subr.mxu0 0.0
        %3565 = vmatpush1.msra.mxu0 0.0
        %3566 = vmatprep.subr.mxu0 0.0
        %3567 = vmatpush1.msra.mxu0 0.0
        %3568 = vmatprep.subr.mxu0 0.0
        %3569 = vmatpush1.msra.mxu0 0.0
        %3570 = vmatprep.subr.mxu0 0.0
        %3571 = vmatpush1.msra.mxu0 0.0
        %3572 = vmatprep.subr.mxu0 0.0
        %3573 = vmatpush1.msra.mxu0 0.0
        %3574 = vmatprep.subr.mxu0 0.0
        %3575 = vmatpush1.msra.mxu0 0.0
        %3576 = vmatprep.subr.mxu0 0.0
        %3577 = vmatpush1.msra.mxu0 0.0
        %3578 = vmatprep.subr.mxu0 0.0
        %3579 = vmatpush1.msra.mxu0 0.0
        %3580 = vmatprep.subr.mxu0 0.0
        %3581 = vmatpush1.msra.mxu0 0.0
        %3582 = vmatprep.subr.mxu0 0.0
        %3583 = vmatpush1.msra.mxu0 0.0
        %3584 = vmatprep.subr.mxu0 0.0
        %3585 = vmatpush1.msra.mxu0 0.0
        %3586 = vmatprep.subr.mxu0 0.0
        %3587 = vmatpush1.msra.mxu0 0.0
        %3588 = vmatprep.subr.mxu0 0.0
        %3589 = vmatpush1.msra.mxu0 0.0
        %3590 = vmatprep.subr.mxu0 0.0
        %3591 = vmatpush1.msra.mxu0 0.0
        %3592 = vmatprep.subr.mxu0 0.0
        %3593 = vmatpush1.msra.mxu0 0.0
        %3594 = vmatprep.mubr.f32.mxu0 0.0
        %3595 = vmatmul.mubr.f32.gmra.mrb[0].mxu0 %v2752
        %v3596 = vpop.f32.mrb[0].mxu0
        %v3597 = vadd.f32 0.0, %v3596
        %v3598 = vpop.f32.mrb[0].mxu0
        %3599 = vmatprep.mubr.f32.mxu0 0.0
        %3600 = vmatmul.mubr.f32.gmra.mrb[0].mxu0 %v2754
        %v3601 = vpop.f32.mrb[0].mxu0
        %v3602 = vadd.f32 0.0, %v3601
        %v3603 = vpop.f32.mrb[0].mxu0
        %3604 = vmatprep.mubr.f32.mxu0 0.0
        %3605 = vmatmul.mubr.f32.gmra.mrb[0].mxu0 %v2756
        %v3606 = vpop.f32.mrb[0].mxu0
        %v3607 = vadd.f32 0.0, %v3606
        %v3608 = vpop.f32.mrb[0].mxu0
        %3609 = vmatprep.mubr.f32.mxu0 0.0
        %3610 = vmatmul.mubr.f32.gmra.mrb[0].mxu0 %v3528
        %v3611 = vpop.f32.mrb[0].mxu0
        %v3612 = vadd.f32 0.0, %v3611
        %v3613 = vpop.f32.mrb[0].mxu0
        %3614 = vdwg.mxu0
        %v3615 = vadd.f32 %v3520, %v3597
        %v3616 = vadd.f32 %v3521, %v3602
        %v3617 = vadd.f32 %v3522, %v3607
        %v3618 = vadd.f32 %v3523, %v3612
        %s3619 = scalar_lea.vmem %s6, 120
        %v3620 = vld [vmem:[%s3619] sm:$0xff]
        %v3621 = vrot.slane %v2101, 7
        %v3622 = vsel %vm1438, %v2856, %v3621
        %v3623 = vsel %vm907, %v3622, 0
        %3625 = vmatprep.subr.mxu0 0.0
        %3626 = vmatpush1.msra.mxu0 %v3620
        %3627 = vmatprep.subr.mxu0 0.0
        %3628 = vmatpush1.msra.mxu0 0.0
        %3629 = vmatprep.subr.mxu0 0.0
        %3630 = vmatpush1.msra.mxu0 0.0
        %3631 = vmatprep.subr.mxu0 0.0
        %3632 = vmatpush1.msra.mxu0 0.0
        %3633 = vmatprep.subr.mxu0 0.0
        %3634 = vmatpush1.msra.mxu0 0.0
        %3635 = vmatprep.subr.mxu0 0.0
        %3636 = vmatpush1.msra.mxu0 0.0
        %3637 = vmatprep.subr.mxu0 0.0
        %3638 = vmatpush1.msra.mxu0 0.0
        %3639 = vmatprep.subr.mxu0 0.0
        %3640 = vmatpush1.msra.mxu0 0.0
        %3641 = vmatprep.subr.mxu0 0.0
        %3642 = vmatpush1.msra.mxu0 0.0
        %3643 = vmatprep.subr.mxu0 0.0
        %3644 = vmatpush1.msra.mxu0 0.0
        %3645 = vmatprep.subr.mxu0 0.0
        %3646 = vmatpush1.msra.mxu0 0.0
        %3647 = vmatprep.subr.mxu0 0.0
        %3648 = vmatpush1.msra.mxu0 0.0
        %3649 = vmatprep.subr.mxu0 0.0
        %3650 = vmatpush1.msra.mxu0 0.0
        %3651 = vmatprep.subr.mxu0 0.0
        %3652 = vmatpush1.msra.mxu0 0.0
        %3653 = vmatprep.subr.mxu0 0.0
        %3654 = vmatpush1.msra.mxu0 0.0
        %3655 = vmatprep.subr.mxu0 0.0
        %3656 = vmatpush1.msra.mxu0 0.0
        %3657 = vmatprep.subr.mxu0 0.0
        %3658 = vmatpush1.msra.mxu0 0.0
        %3659 = vmatprep.subr.mxu0 0.0
        %3660 = vmatpush1.msra.mxu0 0.0
        %3661 = vmatprep.subr.mxu0 0.0
        %3662 = vmatpush1.msra.mxu0 0.0
        %3663 = vmatprep.subr.mxu0 0.0
        %3664 = vmatpush1.msra.mxu0 0.0
        %3665 = vmatprep.subr.mxu0 0.0
        %3666 = vmatpush1.msra.mxu0 0.0
        %3667 = vmatprep.subr.mxu0 0.0
        %3668 = vmatpush1.msra.mxu0 0.0
        %3669 = vmatprep.subr.mxu0 0.0
        %3670 = vmatpush1.msra.mxu0 0.0
        %3671 = vmatprep.subr.mxu0 0.0
        %3672 = vmatpush1.msra.mxu0 0.0
        %3673 = vmatprep.subr.mxu0 0.0
        %3674 = vmatpush1.msra.mxu0 0.0
        %3675 = vmatprep.subr.mxu0 0.0
        %3676 = vmatpush1.msra.mxu0 0.0
        %3677 = vmatprep.subr.mxu0 0.0
        %3678 = vmatpush1.msra.mxu0 0.0
        %3679 = vmatprep.subr.mxu0 0.0
        %3680 = vmatpush1.msra.mxu0 0.0
        %3681 = vmatprep.subr.mxu0 0.0
        %3682 = vmatpush1.msra.mxu0 0.0
        %3683 = vmatprep.subr.mxu0 0.0
        %3684 = vmatpush1.msra.mxu0 0.0
        %3685 = vmatprep.subr.mxu0 0.0
        %3686 = vmatpush1.msra.mxu0 0.0
        %3687 = vmatprep.subr.mxu0 0.0
        %3688 = vmatpush1.msra.mxu0 0.0
        %3689 = vmatprep.mubr.f32.mxu0 0.0
        %3690 = vmatmul.mubr.f32.gmra.mrb[0].mxu0 %v2860
        %v3691 = vpop.f32.mrb[0].mxu0
        %v3692 = vadd.f32 0.0, %v3691
        %v3693 = vpop.f32.mrb[0].mxu0
        %3694 = vmatprep.mubr.f32.mxu0 0.0
        %3695 = vmatmul.mubr.f32.gmra.mrb[0].mxu0 %v2862
        %v3696 = vpop.f32.mrb[0].mxu0
        %v3697 = vadd.f32 0.0, %v3696
        %v3698 = vpop.f32.mrb[0].mxu0
        %3699 = vmatprep.mubr.f32.mxu0 0.0
        %3700 = vmatmul.mubr.f32.gmra.mrb[0].mxu0 %v2864
        %v3701 = vpop.f32.mrb[0].mxu0
        %v3702 = vadd.f32 0.0, %v3701
        %v3703 = vpop.f32.mrb[0].mxu0
        %3704 = vmatprep.mubr.f32.mxu0 0.0
        %3705 = vmatmul.mubr.f32.gmra.mrb[0].mxu0 %v3623
        %v3706 = vpop.f32.mrb[0].mxu0
        %v3707 = vadd.f32 0.0, %v3706
        %v3708 = vpop.f32.mrb[0].mxu0
        %3709 = vdwg.mxu0
        %v3710 = vadd.f32 %v3615, %v3692
        %v3711 = vadd.f32 %v3616, %v3697
        %v3712 = vadd.f32 %v3617, %v3702
        %v3713 = vadd.f32 %v3618, %v3707
        %v3714 = vld [vmem:[#allocation10] sm:$0x1]
        %v3716 = vlaneseq
        %v3717 = vshrl.u32 %v3716, 7
        %v3718 = vsub.s32 0, %v3717
        %v3719 = vrot.slane %v3714, %v3718
        %v3721 = vmul.f32 %v3710, %v3719
        %v3722 = vmul.f32 %v3711, %v3719
        %v3723 = vmul.f32 %v3712, %v3719
        %v3724 = vmul.f32 %v3713, %v3719
        %v3725 = vld [vmem:[#allocation11] sm:$0x1]
        %v3727 = vlaneseq
        %v3728 = vshrl.u32 %v3727, 7
        %v3729 = vsub.s32 0, %v3728
        %v3730 = vrot.slane %v3725, %v3729
        %v3732 = vadd.f32 %v3721, %v3730
        %v3733 = vadd.f32 %v3722, %v3730
        %v3734 = vadd.f32 %v3723, %v3730
        %v3735 = vadd.f32 %v3724, %v3730
        %vm3736 = vcmp.gt.f32.partialorder %v3732, 0.0
        %vm3737 = vcmp.gt.f32.partialorder %v3733, 0.0
        %vm3738 = vcmp.gt.f32.partialorder %v3734, 0.0
        %vm3739 = vcmp.gt.f32.partialorder %v3735, 0.0
        %v3740 = vmin.f32 %v3732, 0.0
        %v3741 = vmin.f32 %v3733, 0.0
        %v3742 = vmin.f32 %v3734, 0.0
        %v3743 = vmin.f32 %v3735, 0.0
        %v3744 = vmul.f32 %v3740, 1.442695
        %v3745 = vpow.pop %v3744
        %v3746 = vmul.f32 %v3741, 1.442695
        %v3747 = vpow.pop %v3746
        %v3748 = vmul.f32 %v3742, 1.442695
        %v3749 = vpow.pop %v3748
        %v3750 = vmul.f32 %v3743, 1.442695
        %v3751 = vpow.pop %v3750
        %v3752 = vsub.f32 %v3745, 1.0
        %v3753 = vsub.f32 %v3747, 1.0
        %v3754 = vsub.f32 %v3749, 1.0
        %v3755 = vsub.f32 %v3751, 1.0
        %v3756 = vsel %vm3736, %v3732, %v3752
        %v3757 = vsel %vm3737, %v3733, %v3753
        %v3758 = vsel %vm3738, %v3734, %v3754
        %v3759 = vsel %vm3739, %v3735, %v3755
        %v3760 = vld [vmem:[#allocation13] sm:$0xff]
        %v3761 = vld [vmem:[#allocation13 + $0x8] sm:$0xff]
        %v3762 = vld [vmem:[#allocation13 + $0x10] sm:$0x3]
        %vm3763 = vcmask 261120
        %v3765 = vsel %vm3763, %v3760, 0
        %v3768 = vsel %vm3763, %v3761, 0
        %v3771 = vsel %vm3763, %v3762, 0
        %3773 = vmatprep.subr.mxu0 0.0
        %3774 = vmatpush1.msra.mxu0 %v3756
        %3775 = vmatprep.subr.mxu0 0.0
        %3776 = vmatpush1.msra.mxu0 %v3757
        %3777 = vmatprep.subr.mxu0 0.0
        %3778 = vmatpush1.msra.mxu0 %v3758
        %3779 = vmatprep.subr.mxu0 0.0
        %3780 = vmatpush1.msra.mxu0 %v3759
        %3781 = vmatprep.subr.mxu0 0.0
        %3782 = vmatpush1.msra.mxu0 0.0
        %3783 = vmatprep.subr.mxu0 0.0
        %3784 = vmatpush1.msra.mxu0 0.0
        %3785 = vmatprep.subr.mxu0 0.0
        %3786 = vmatpush1.msra.mxu0 0.0
        %3787 = vmatprep.subr.mxu0 0.0
        %3788 = vmatpush1.msra.mxu0 0.0
        %3789 = vmatprep.subr.mxu0 0.0
        %3790 = vmatpush1.msra.mxu0 0.0
        %3791 = vmatprep.subr.mxu0 0.0
        %3792 = vmatpush1.msra.mxu0 0.0
        %3793 = vmatprep.subr.mxu0 0.0
        %3794 = vmatpush1.msra.mxu0 0.0
        %3795 = vmatprep.subr.mxu0 0.0
        %3796 = vmatpush1.msra.mxu0 0.0
        %3797 = vmatprep.subr.mxu0 0.0
        %3798 = vmatpush1.msra.mxu0 0.0
        %3799 = vmatprep.subr.mxu0 0.0
        %3800 = vmatpush1.msra.mxu0 0.0
        %3801 = vmatprep.subr.mxu0 0.0
        %3802 = vmatpush1.msra.mxu0 0.0
        %3803 = vmatprep.subr.mxu0 0.0
        %3804 = vmatpush1.msra.mxu0 0.0
        %3805 = vmatprep.subr.mxu0 0.0
        %3806 = vmatpush1.msra.mxu0 0.0
        %3807 = vmatprep.subr.mxu0 0.0
        %3808 = vmatpush1.msra.mxu0 0.0
        %3809 = vmatprep.subr.mxu0 0.0
        %3810 = vmatpush1.msra.mxu0 0.0
        %3811 = vmatprep.subr.mxu0 0.0
        %3812 = vmatpush1.msra.mxu0 0.0
        %3813 = vmatprep.subr.mxu0 0.0
        %3814 = vmatpush1.msra.mxu0 0.0
        %3815 = vmatprep.subr.mxu0 0.0
        %3816 = vmatpush1.msra.mxu0 0.0
        %3817 = vmatprep.subr.mxu0 0.0
        %3818 = vmatpush1.msra.mxu0 0.0
        %3819 = vmatprep.subr.mxu0 0.0
        %3820 = vmatpush1.msra.mxu0 0.0
        %3821 = vmatprep.subr.mxu0 0.0
        %3822 = vmatpush1.msra.mxu0 0.0
        %3823 = vmatprep.subr.mxu0 0.0
        %3824 = vmatpush1.msra.mxu0 0.0
        %3825 = vmatprep.subr.mxu0 0.0
        %3826 = vmatpush1.msra.mxu0 0.0
        %3827 = vmatprep.subr.mxu0 0.0
        %3828 = vmatpush1.msra.mxu0 0.0
        %3829 = vmatprep.subr.mxu0 0.0
        %3830 = vmatpush1.msra.mxu0 0.0
        %3831 = vmatprep.subr.mxu0 0.0
        %3832 = vmatpush1.msra.mxu0 0.0
        %3833 = vmatprep.subr.mxu0 0.0
        %3834 = vmatpush1.msra.mxu0 0.0
        %3835 = vmatprep.subr.mxu0 0.0
        %3836 = vmatpush1.msra.mxu0 0.0
        %3837 = vmatprep.mubr.f32.mxu0 0.0
        %3838 = vmatmul.mubr.f32.gmra.mrb[0].mxu0 %v3765
        %v3839 = vpop.f32.mrb[0].mxu0
        %v3840 = vadd.f32 0.0, %v3839
        %v3841 = vpop.f32.mrb[0].mxu0
        %3842 = vmatprep.mubr.f32.mxu0 0.0
        %3843 = vmatmul.mubr.f32.gmra.mrb[0].mxu0 %v3768
        %v3844 = vpop.f32.mrb[0].mxu0
        %v3845 = vadd.f32 0.0, %v3844
        %v3846 = vpop.f32.mrb[0].mxu0
        %3847 = vmatprep.mubr.f32.mxu0 0.0
        %3848 = vmatmul.mubr.f32.gmra.mrb[0].mxu0 %v3771
        %v3849 = vpop.f32.mrb[0].mxu0
        %v3850 = vadd.f32 0.0, %v3849
        %v3851 = vpop.f32.mrb[0].mxu0
        %3852 = vdwg.mxu0
        %v3853 = vld [vmem:[#allocation14] sm:$0xff]
        %v3854 = vld [vmem:[#allocation14 + $0x8] sm:$0xff]
        %s3855 = scalar_lea.vmem [#allocation14], 16
        %v3856 = vld [vmem:[%s3855] sm:$0xff]
        %v3857 = vld [vmem:[%s3855 + $0x8] sm:$0xff]
        %v3861 = vrot.slane %v3840, 1
        %v3862 = vrot.slane %v3845, 1
        %v3863 = vsel %vm1090, %v3861, %v3862
        %v3864 = vrot.slane %v3850, 1
        %v3865 = vsel %vm1090, %v3862, %v3864
        %vm3866 = vcmask 130048
        %v3867 = vsel %vm3866, %v3863, 0
        %v3869 = vsel %vm3866, %v3865, 0
        %3871 = vmatprep.subr.mxu0 0.0
        %3872 = vmatpush1.msra.mxu0 %v3856
        %3873 = vmatprep.subr.mxu0 0.0
        %3874 = vmatpush1.msra.mxu0 %v3857
        %3875 = vmatprep.subr.mxu0 0.0
        %3876 = vmatpush1.msra.mxu0 0.0
        %3877 = vmatprep.subr.mxu0 0.0
        %3878 = vmatpush1.msra.mxu0 0.0
        %3879 = vmatprep.subr.mxu0 0.0
        %3880 = vmatpush1.msra.mxu0 0.0
        %3881 = vmatprep.subr.mxu0 0.0
        %3882 = vmatpush1.msra.mxu0 0.0
        %3883 = vmatprep.subr.mxu0 0.0
        %3884 = vmatpush1.msra.mxu0 0.0
        %3885 = vmatprep.subr.mxu0 0.0
        %3886 = vmatpush1.msra.mxu0 0.0
        %3887 = vmatprep.subr.mxu0 0.0
        %3888 = vmatpush1.msra.mxu0 0.0
        %3889 = vmatprep.subr.mxu0 0.0
        %3890 = vmatpush1.msra.mxu0 0.0
        %3891 = vmatprep.subr.mxu0 0.0
        %3892 = vmatpush1.msra.mxu0 0.0
        %3893 = vmatprep.subr.mxu0 0.0
        %3894 = vmatpush1.msra.mxu0 0.0
        %3895 = vmatprep.subr.mxu0 0.0
        %3896 = vmatpush1.msra.mxu0 0.0
        %3897 = vmatprep.subr.mxu0 0.0
        %3898 = vmatpush1.msra.mxu0 0.0
        %3899 = vmatprep.subr.mxu0 0.0
        %3900 = vmatpush1.msra.mxu0 0.0
        %3901 = vmatprep.subr.mxu0 0.0
        %3902 = vmatpush1.msra.mxu0 0.0
        %3903 = vmatprep.subr.mxu0 0.0
        %3904 = vmatpush1.msra.mxu0 0.0
        %3905 = vmatprep.subr.mxu0 0.0
        %3906 = vmatpush1.msra.mxu0 0.0
        %3907 = vmatprep.subr.mxu0 0.0
        %3908 = vmatpush1.msra.mxu0 0.0
        %3909 = vmatprep.subr.mxu0 0.0
        %3910 = vmatpush1.msra.mxu0 0.0
        %3911 = vmatprep.subr.mxu0 0.0
        %3912 = vmatpush1.msra.mxu0 0.0
        %3913 = vmatprep.subr.mxu0 0.0
        %3914 = vmatpush1.msra.mxu0 0.0
        %3915 = vmatprep.subr.mxu0 0.0
        %3916 = vmatpush1.msra.mxu0 0.0
        %3917 = vmatprep.subr.mxu0 0.0
        %3918 = vmatpush1.msra.mxu0 0.0
        %3919 = vmatprep.subr.mxu0 0.0
        %3920 = vmatpush1.msra.mxu0 0.0
        %3921 = vmatprep.subr.mxu0 0.0
        %3922 = vmatpush1.msra.mxu0 0.0
        %3923 = vmatprep.subr.mxu0 0.0
        %3924 = vmatpush1.msra.mxu0 0.0
        %3925 = vmatprep.subr.mxu0 0.0
        %3926 = vmatpush1.msra.mxu0 0.0
        %3927 = vmatprep.subr.mxu0 0.0
        %3928 = vmatpush1.msra.mxu0 0.0
        %3929 = vmatprep.subr.mxu0 0.0
        %3930 = vmatpush1.msra.mxu0 0.0
        %3931 = vmatprep.subr.mxu0 0.0
        %3932 = vmatpush1.msra.mxu0 0.0
        %3933 = vmatprep.subr.mxu0 0.0
        %3934 = vmatpush1.msra.mxu0 0.0
        %3935 = vmatprep.mubr.f32.mxu0 0.0
        %3936 = vmatmul.mubr.f32.gmra.mrb[0].mxu0 %v3867
        %v3937 = vpop.f32.mrb[0].mxu0
        %v3938 = vadd.f32 0.0, %v3937
        %v3939 = vpop.f32.mrb[0].mxu0
        %3940 = vmatprep.mubr.f32.mxu0 0.0
        %3941 = vmatmul.mubr.f32.gmra.mrb[0].mxu0 %v3869
        %v3942 = vpop.f32.mrb[0].mxu0
        %v3943 = vadd.f32 0.0, %v3942
        %v3944 = vpop.f32.mrb[0].mxu0
        %3945 = vdwg.mxu0
        %v3946 = vsel %vm3866, %v3840, 0
        %v3948 = vsel %vm3866, %v3845, 0
        %3950 = vmatprep.subr.mxu0 0.0
        %3951 = vmatpush1.msra.mxu0 %v3853
        %3952 = vmatprep.subr.mxu0 0.0
        %3953 = vmatpush1.msra.mxu0 %v3854
        %3954 = vmatprep.subr.mxu0 0.0
        %3955 = vmatpush1.msra.mxu0 0.0
        %3956 = vmatprep.subr.mxu0 0.0
        %3957 = vmatpush1.msra.mxu0 0.0
        %3958 = vmatprep.subr.mxu0 0.0
        %3959 = vmatpush1.msra.mxu0 0.0
        %3960 = vmatprep.subr.mxu0 0.0
        %3961 = vmatpush1.msra.mxu0 0.0
        %3962 = vmatprep.subr.mxu0 0.0
        %3963 = vmatpush1.msra.mxu0 0.0
        %3964 = vmatprep.subr.mxu0 0.0
        %3965 = vmatpush1.msra.mxu0 0.0
        %3966 = vmatprep.subr.mxu0 0.0
        %3967 = vmatpush1.msra.mxu0 0.0
        %3968 = vmatprep.subr.mxu0 0.0
        %3969 = vmatpush1.msra.mxu0 0.0
        %3970 = vmatprep.subr.mxu0 0.0
        %3971 = vmatpush1.msra.mxu0 0.0
        %3972 = vmatprep.subr.mxu0 0.0
        %3973 = vmatpush1.msra.mxu0 0.0
        %3974 = vmatprep.subr.mxu0 0.0
        %3975 = vmatpush1.msra.mxu0 0.0
        %3976 = vmatprep.subr.mxu0 0.0
        %3977 = vmatpush1.msra.mxu0 0.0
        %3978 = vmatprep.subr.mxu0 0.0
        %3979 = vmatpush1.msra.mxu0 0.0
        %3980 = vmatprep.subr.mxu0 0.0
        %3981 = vmatpush1.msra.mxu0 0.0
        %3982 = vmatprep.subr.mxu0 0.0
        %3983 = vmatpush1.msra.mxu0 0.0
        %3984 = vmatprep.subr.mxu0 0.0
        %3985 = vmatpush1.msra.mxu0 0.0
        %3986 = vmatprep.subr.mxu0 0.0
        %3987 = vmatpush1.msra.mxu0 0.0
        %3988 = vmatprep.subr.mxu0 0.0
        %3989 = vmatpush1.msra.mxu0 0.0
        %3990 = vmatprep.subr.mxu0 0.0
        %3991 = vmatpush1.msra.mxu0 0.0
        %3992 = vmatprep.subr.mxu0 0.0
        %3993 = vmatpush1.msra.mxu0 0.0
        %3994 = vmatprep.subr.mxu0 0.0
        %3995 = vmatpush1.msra.mxu0 0.0
        %3996 = vmatprep.subr.mxu0 0.0
        %3997 = vmatpush1.msra.mxu0 0.0
        %3998 = vmatprep.subr.mxu0 0.0
        %3999 = vmatpush1.msra.mxu0 0.0
        %4000 = vmatprep.subr.mxu0 0.0
        %4001 = vmatpush1.msra.mxu0 0.0
        %4002 = vmatprep.subr.mxu0 0.0
        %4003 = vmatpush1.msra.mxu0 0.0
        %4004 = vmatprep.subr.mxu0 0.0
        %4005 = vmatpush1.msra.mxu0 0.0
        %4006 = vmatprep.subr.mxu0 0.0
        %4007 = vmatpush1.msra.mxu0 0.0
        %4008 = vmatprep.subr.mxu0 0.0
        %4009 = vmatpush1.msra.mxu0 0.0
        %4010 = vmatprep.subr.mxu0 0.0
        %4011 = vmatpush1.msra.mxu0 0.0
        %4012 = vmatprep.subr.mxu0 0.0
        %4013 = vmatpush1.msra.mxu0 0.0
        %4014 = vmatprep.mubr.f32.mxu0 0.0
        %4015 = vmatmul.mubr.f32.gmra.mrb[0].mxu0 %v3946
        %v4016 = vpop.f32.mrb[0].mxu0
        %v4017 = vadd.f32 %v3938, %v4016
        %v4018 = vpop.f32.mrb[0].mxu0
        %4019 = vmatprep.mubr.f32.mxu0 0.0
        %4020 = vmatmul.mubr.f32.gmra.mrb[0].mxu0 %v3948
        %v4021 = vpop.f32.mrb[0].mxu0
        %v4022 = vadd.f32 %v3943, %v4021
        %v4023 = vpop.f32.mrb[0].mxu0
        %4024 = vdwg.mxu0
        %s4025 = scalar_lea.vmem [#allocation14], 32
        %v4026 = vld [vmem:[%s4025] sm:$0xff]
        %v4027 = vld [vmem:[%s4025 + $0x8] sm:$0xff]
        %v4028 = vrot.slane %v3840, 2
        %v4029 = vrot.slane %v3845, 2
        %v4030 = vsel %vm1148, %v4028, %v4029
        %v4031 = vrot.slane %v3850, 2
        %v4032 = vsel %vm1148, %v4029, %v4031
        %v4033 = vsel %vm3866, %v4030, 0
        %v4035 = vsel %vm3866, %v4032, 0
        %4037 = vmatprep.subr.mxu0 0.0
        %4038 = vmatpush1.msra.mxu0 %v4026
        %4039 = vmatprep.subr.mxu0 0.0
        %4040 = vmatpush1.msra.mxu0 %v4027
        %4041 = vmatprep.subr.mxu0 0.0
        %4042 = vmatpush1.msra.mxu0 0.0
        %4043 = vmatprep.subr.mxu0 0.0
        %4044 = vmatpush1.msra.mxu0 0.0
        %4045 = vmatprep.subr.mxu0 0.0
        %4046 = vmatpush1.msra.mxu0 0.0
        %4047 = vmatprep.subr.mxu0 0.0
        %4048 = vmatpush1.msra.mxu0 0.0
        %4049 = vmatprep.subr.mxu0 0.0
        %4050 = vmatpush1.msra.mxu0 0.0
        %4051 = vmatprep.subr.mxu0 0.0
        %4052 = vmatpush1.msra.mxu0 0.0
        %4053 = vmatprep.subr.mxu0 0.0
        %4054 = vmatpush1.msra.mxu0 0.0
        %4055 = vmatprep.subr.mxu0 0.0
        %4056 = vmatpush1.msra.mxu0 0.0
        %4057 = vmatprep.subr.mxu0 0.0
        %4058 = vmatpush1.msra.mxu0 0.0
        %4059 = vmatprep.subr.mxu0 0.0
        %4060 = vmatpush1.msra.mxu0 0.0
        %4061 = vmatprep.subr.mxu0 0.0
        %4062 = vmatpush1.msra.mxu0 0.0
        %4063 = vmatprep.subr.mxu0 0.0
        %4064 = vmatpush1.msra.mxu0 0.0
        %4065 = vmatprep.subr.mxu0 0.0
        %4066 = vmatpush1.msra.mxu0 0.0
        %4067 = vmatprep.subr.mxu0 0.0
        %4068 = vmatpush1.msra.mxu0 0.0
        %4069 = vmatprep.subr.mxu0 0.0
        %4070 = vmatpush1.msra.mxu0 0.0
        %4071 = vmatprep.subr.mxu0 0.0
        %4072 = vmatpush1.msra.mxu0 0.0
        %4073 = vmatprep.subr.mxu0 0.0
        %4074 = vmatpush1.msra.mxu0 0.0
        %4075 = vmatprep.subr.mxu0 0.0
        %4076 = vmatpush1.msra.mxu0 0.0
        %4077 = vmatprep.subr.mxu0 0.0
        %4078 = vmatpush1.msra.mxu0 0.0
        %4079 = vmatprep.subr.mxu0 0.0
        %4080 = vmatpush1.msra.mxu0 0.0
        %4081 = vmatprep.subr.mxu0 0.0
        %4082 = vmatpush1.msra.mxu0 0.0
        %4083 = vmatprep.subr.mxu0 0.0
        %4084 = vmatpush1.msra.mxu0 0.0
        %4085 = vmatprep.subr.mxu0 0.0
        %4086 = vmatpush1.msra.mxu0 0.0
        %4087 = vmatprep.subr.mxu0 0.0
        %4088 = vmatpush1.msra.mxu0 0.0
        %4089 = vmatprep.subr.mxu0 0.0
        %4090 = vmatpush1.msra.mxu0 0.0
        %4091 = vmatprep.subr.mxu0 0.0
        %4092 = vmatpush1.msra.mxu0 0.0
        %4093 = vmatprep.subr.mxu0 0.0
        %4094 = vmatpush1.msra.mxu0 0.0
        %4095 = vmatprep.subr.mxu0 0.0
        %4096 = vmatpush1.msra.mxu0 0.0
        %4097 = vmatprep.subr.mxu0 0.0
        %4098 = vmatpush1.msra.mxu0 0.0
        %4099 = vmatprep.subr.mxu0 0.0
        %4100 = vmatpush1.msra.mxu0 0.0
        %4101 = vmatprep.mubr.f32.mxu0 0.0
        %4102 = vmatmul.mubr.f32.gmra.mrb[0].mxu0 %v4033
        %v4103 = vpop.f32.mrb[0].mxu0
        %v4104 = vadd.f32 0.0, %v4103
        %v4105 = vpop.f32.mrb[0].mxu0
        %4106 = vmatprep.mubr.f32.mxu0 0.0
        %4107 = vmatmul.mubr.f32.gmra.mrb[0].mxu0 %v4035
        %v4108 = vpop.f32.mrb[0].mxu0
        %v4109 = vadd.f32 0.0, %v4108
        %v4110 = vpop.f32.mrb[0].mxu0
        %4111 = vdwg.mxu0
        %v4112 = vadd.f32 %v4017, %v4104
        %v4113 = vadd.f32 %v4022, %v4109
        %v4114 = vld [vmem:[#allocation16] sm:$0x1]
        %v4116 = vlaneseq
        %v4117 = vshrl.u32 %v4116, 7
        %v4118 = vsub.s32 0, %v4117
        %v4119 = vrot.slane %v4114, %v4118
        %v4121 = vmul.f32 %v4112, %v4119
        %v4122 = vmul.f32 %v4113, %v4119
        %v4123 = vld [vmem:[#allocation17] sm:$0x1]
        %v4125 = vlaneseq
        %v4126 = vshrl.u32 %v4125, 7
        %v4127 = vsub.s32 0, %v4126
        %v4128 = vrot.slane %v4123, %v4127
        %v4130 = vadd.f32 %v4121, %v4128
        %v4131 = vadd.f32 %v4122, %v4128
        %vm4132 = vcmp.gt.f32.partialorder %v4130, 0.0
        %vm4133 = vcmp.gt.f32.partialorder %v4131, 0.0
        %v4134 = vmin.f32 %v4130, 0.0
        %v4135 = vmin.f32 %v4131, 0.0
        %v4136 = vmul.f32 %v4134, 1.442695
        %v4137 = vpow.pop %v4136
        %v4138 = vmul.f32 %v4135, 1.442695
        %v4139 = vpow.pop %v4138
        %v4140 = vsub.f32 %v4137, 1.0
        %v4141 = vsub.f32 %v4139, 1.0
        %v4142 = vsel %vm4132, %v4130, %v4140
        %v4143 = vsel %vm4133, %v4131, %v4141
        %v4144 = vld [vmem:[%s13] sm:$0xff]
        %v4146 = vsel %vm3866, %v4144, 0
        %4148 = vmatprep.subr.mxu0 0.0
        %4149 = vmatpush1.msra.mxu0 %v4142
        %4150 = vmatprep.subr.mxu0 0.0
        %4151 = vmatpush1.msra.mxu0 %v4143
        %4152 = vmatprep.subr.mxu0 0.0
        %4153 = vmatpush1.msra.mxu0 0.0
        %4154 = vmatprep.subr.mxu0 0.0
        %4155 = vmatpush1.msra.mxu0 0.0
        %4156 = vmatprep.subr.mxu0 0.0
        %4157 = vmatpush1.msra.mxu0 0.0
        %4158 = vmatprep.subr.mxu0 0.0
        %4159 = vmatpush1.msra.mxu0 0.0
        %4160 = vmatprep.subr.mxu0 0.0
        %4161 = vmatpush1.msra.mxu0 0.0
        %4162 = vmatprep.subr.mxu0 0.0
        %4163 = vmatpush1.msra.mxu0 0.0
        %4164 = vmatprep.subr.mxu0 0.0
        %4165 = vmatpush1.msra.mxu0 0.0
        %4166 = vmatprep.subr.mxu0 0.0
        %4167 = vmatpush1.msra.mxu0 0.0
        %4168 = vmatprep.subr.mxu0 0.0
        %4169 = vmatpush1.msra.mxu0 0.0
        %4170 = vmatprep.subr.mxu0 0.0
        %4171 = vmatpush1.msra.mxu0 0.0
        %4172 = vmatprep.subr.mxu0 0.0
        %4173 = vmatpush1.msra.mxu0 0.0
        %4174 = vmatprep.subr.mxu0 0.0
        %4175 = vmatpush1.msra.mxu0 0.0
        %4176 = vmatprep.subr.mxu0 0.0
        %4177 = vmatpush1.msra.mxu0 0.0
        %4178 = vmatprep.subr.mxu0 0.0
        %4179 = vmatpush1.msra.mxu0 0.0
        %4180 = vmatprep.subr.mxu0 0.0
        %4181 = vmatpush1.msra.mxu0 0.0
        %4182 = vmatprep.subr.mxu0 0.0
        %4183 = vmatpush1.msra.mxu0 0.0
        %4184 = vmatprep.subr.mxu0 0.0
        %4185 = vmatpush1.msra.mxu0 0.0
        %4186 = vmatprep.subr.mxu0 0.0
        %4187 = vmatpush1.msra.mxu0 0.0
        %4188 = vmatprep.subr.mxu0 0.0
        %4189 = vmatpush1.msra.mxu0 0.0
        %4190 = vmatprep.subr.mxu0 0.0
        %4191 = vmatpush1.msra.mxu0 0.0
        %4192 = vmatprep.subr.mxu0 0.0
        %4193 = vmatpush1.msra.mxu0 0.0
        %4194 = vmatprep.subr.mxu0 0.0
        %4195 = vmatpush1.msra.mxu0 0.0
        %4196 = vmatprep.subr.mxu0 0.0
        %4197 = vmatpush1.msra.mxu0 0.0
        %4198 = vmatprep.subr.mxu0 0.0
        %4199 = vmatpush1.msra.mxu0 0.0
        %4200 = vmatprep.subr.mxu0 0.0
        %4201 = vmatpush1.msra.mxu0 0.0
        %4202 = vmatprep.subr.mxu0 0.0
        %4203 = vmatpush1.msra.mxu0 0.0
        %4204 = vmatprep.subr.mxu0 0.0
        %4205 = vmatpush1.msra.mxu0 0.0
        %4206 = vmatprep.subr.mxu0 0.0
        %4207 = vmatpush1.msra.mxu0 0.0
        %4208 = vmatprep.subr.mxu0 0.0
        %4209 = vmatpush1.msra.mxu0 0.0
        %4210 = vmatprep.subr.mxu0 0.0
        %4211 = vmatpush1.msra.mxu0 0.0
        %4212 = vmatprep.mubr.f32.mxu0 0.0
        %4213 = vmatmul.mubr.f32.gmra.mrb[0].mxu0 %v4146
        %v4214 = vpop.f32.mrb[0].mxu0
        %v4215 = vadd.f32 0.0, %v4214
        %v4216 = vpop.f32.mrb[0].mxu0
        %4217 = vdwg.mxu0
        %v4218 = vld [vmem:[%s14] sm:$0xff]
        %v4219 = vld [vmem:[%s14 + $0x8] sm:$0xff]
        %v4220 = vld [vmem:[%s15] sm:$0x3]
        %v4222 = vlaneseq
        %v4223 = vshrl.u32 %v4222, 7
        %v4224 = vsub.s32 0, %v4223
        %v4225 = vrot.slane %v4220, %v4224
        %v4226 = vlaneseq
        %v4227 = vshrl.u32 %v4226, 7
        %v4228 = vsub.s32 1, %v4227
        %v4229 = vrot.slane %v4220, %v4228
        %4232 = vmatprep.subr.mxu0 %v4219
        %4233 = vmatpush1.msra.mxu0 %v4218
        %4234 = vmatprep.subr.mxu0 0.0
        %4235 = vmatpush1.msra.mxu0 0.0
        %4236 = vmatprep.subr.mxu0 0.0
        %4237 = vmatpush1.msra.mxu0 0.0
        %4238 = vmatprep.subr.mxu0 0.0
        %4239 = vmatpush1.msra.mxu0 0.0
        %4240 = vmatprep.subr.mxu0 0.0
        %4241 = vmatpush1.msra.mxu0 0.0
        %4242 = vmatprep.subr.mxu0 0.0
        %4243 = vmatpush1.msra.mxu0 0.0
        %4244 = vmatprep.subr.mxu0 0.0
        %4245 = vmatpush1.msra.mxu0 0.0
        %4246 = vmatprep.subr.mxu0 0.0
        %4247 = vmatpush1.msra.mxu0 0.0
        %4248 = vmatprep.subr.mxu0 0.0
        %4249 = vmatpush1.msra.mxu0 0.0
        %4250 = vmatprep.subr.mxu0 0.0
        %4251 = vmatpush1.msra.mxu0 0.0
        %4252 = vmatprep.subr.mxu0 0.0
        %4253 = vmatpush1.msra.mxu0 0.0
        %4254 = vmatprep.subr.mxu0 0.0
        %4255 = vmatpush1.msra.mxu0 0.0
        %4256 = vmatprep.subr.mxu0 0.0
        %4257 = vmatpush1.msra.mxu0 0.0
        %4258 = vmatprep.subr.mxu0 0.0
        %4259 = vmatpush1.msra.mxu0 0.0
        %4260 = vmatprep.subr.mxu0 0.0
        %4261 = vmatpush1.msra.mxu0 0.0
        %4262 = vmatprep.subr.mxu0 0.0
        %4263 = vmatpush1.msra.mxu0 0.0
        %4264 = vmatprep.subr.mxu0 0.0
        %4265 = vmatpush1.msra.mxu0 0.0
        %4266 = vmatprep.subr.mxu0 0.0
        %4267 = vmatpush1.msra.mxu0 0.0
        %4268 = vmatprep.subr.mxu0 0.0
        %4269 = vmatpush1.msra.mxu0 0.0
        %4270 = vmatprep.subr.mxu0 0.0
        %4271 = vmatpush1.msra.mxu0 0.0
        %4272 = vmatprep.subr.mxu0 0.0
        %4273 = vmatpush1.msra.mxu0 0.0
        %4274 = vmatprep.subr.mxu0 0.0
        %4275 = vmatpush1.msra.mxu0 0.0
        %4276 = vmatprep.subr.mxu0 0.0
        %4277 = vmatpush1.msra.mxu0 0.0
        %4278 = vmatprep.subr.mxu0 0.0
        %4279 = vmatpush1.msra.mxu0 0.0
        %4280 = vmatprep.subr.mxu0 0.0
        %4281 = vmatpush1.msra.mxu0 0.0
        %4282 = vmatprep.subr.mxu0 0.0
        %4283 = vmatpush1.msra.mxu0 0.0
        %4284 = vmatprep.subr.mxu0 0.0
        %4285 = vmatpush1.msra.mxu0 0.0
        %4286 = vmatprep.subr.mxu0 0.0
        %4287 = vmatpush1.msra.mxu0 0.0
        %4288 = vmatprep.subr.mxu0 0.0
        %4289 = vmatpush1.msra.mxu0 0.0
        %4290 = vmatprep.subr.mxu0 0.0
        %4291 = vmatpush1.msra.mxu0 0.0
        %4292 = vmatprep.subr.mxu0 0.0
        %4293 = vmatpush1.msra.mxu0 0.0
        %4294 = vmatprep.subr.mxu0 0.0
        %4295 = vmatpush1.msra.mxu0 0.0
        %4296 = vmatprep.mubr.f32.mxu0 0.0
        %4297 = vmatmul.mubr.f32.gmra.mrb[0].mxu0 %v2858
        %v4298 = vpop.f32.mrb[0].mxu0
        %v4299 = vadd.f32 %v4225, %v4298
        %v4300 = vpop.f32.mrb[0].mxu0
        %v4301 = vadd.f32 %v4229, %v4300
        %4302 = vmatprep.mubr.f32.mxu0 0.0
        %4303 = vmatmul.mubr.f32.gmra.mrb[0].mxu0 %v2860
        %v4304 = vpop.f32.mrb[0].mxu0
        %v4305 = vadd.f32 %v4225, %v4304
        %v4306 = vpop.f32.mrb[0].mxu0
        %v4307 = vadd.f32 %v4229, %v4306
        %4308 = vmatprep.mubr.f32.mxu0 0.0
        %4309 = vmatmul.mubr.f32.gmra.mrb[0].mxu0 %v2862
        %v4310 = vpop.f32.mrb[0].mxu0
        %v4311 = vadd.f32 %v4225, %v4310
        %v4312 = vpop.f32.mrb[0].mxu0
        %v4313 = vadd.f32 %v4229, %v4312
        %4314 = vmatprep.mubr.f32.mxu0 0.0
        %4315 = vmatmul.mubr.f32.gmra.mrb[0].mxu0 %v2864
        %v4316 = vpop.f32.mrb[0].mxu0
        %v4317 = vadd.f32 %v4225, %v4316
        %v4318 = vpop.f32.mrb[0].mxu0
        %v4319 = vadd.f32 %v4229, %v4318
        %4320 = vdwg.mxu0
        %v4321 = vld [vmem:[%s16] sm:$0xff]
        %v4322 = vld [vmem:[%s16 + $0x8] sm:$0xff]
        %v4323 = vld [vmem:[%s16 + $0x10] sm:$0xff]
        %v4324 = vld [vmem:[%s16 + $0x18] sm:$0xff]
        %v4325 = vld [vmem:[%s17] sm:$0x3]
        %v4327 = vlaneseq
        %v4328 = vshrl.u32 %v4327, 7
        %v4329 = vsub.s32 0, %v4328
        %v4330 = vrot.slane %v4325, %v4329
        %v4331 = vlaneseq
        %v4332 = vshrl.u32 %v4331, 7
        %v4333 = vsub.s32 1, %v4332
        %v4334 = vrot.slane %v4325, %v4333
        %4337 = vmatprep.subr.mxu0 %v4322
        %4338 = vmatpush1.msra.mxu0 %v4321
        %4339 = vmatprep.subr.mxu0 %v4324
        %4340 = vmatpush1.msra.mxu0 %v4323
        %4341 = vmatprep.subr.mxu0 0.0
        %4342 = vmatpush1.msra.mxu0 0.0
        %4343 = vmatprep.subr.mxu0 0.0
        %4344 = vmatpush1.msra.mxu0 0.0
        %4345 = vmatprep.subr.mxu0 0.0
        %4346 = vmatpush1.msra.mxu0 0.0
        %4347 = vmatprep.subr.mxu0 0.0
        %4348 = vmatpush1.msra.mxu0 0.0
        %4349 = vmatprep.subr.mxu0 0.0
        %4350 = vmatpush1.msra.mxu0 0.0
        %4351 = vmatprep.subr.mxu0 0.0
        %4352 = vmatpush1.msra.mxu0 0.0
        %4353 = vmatprep.subr.mxu0 0.0
        %4354 = vmatpush1.msra.mxu0 0.0
        %4355 = vmatprep.subr.mxu0 0.0
        %4356 = vmatpush1.msra.mxu0 0.0
        %4357 = vmatprep.subr.mxu0 0.0
        %4358 = vmatpush1.msra.mxu0 0.0
        %4359 = vmatprep.subr.mxu0 0.0
        %4360 = vmatpush1.msra.mxu0 0.0
        %4361 = vmatprep.subr.mxu0 0.0
        %4362 = vmatpush1.msra.mxu0 0.0
        %4363 = vmatprep.subr.mxu0 0.0
        %4364 = vmatpush1.msra.mxu0 0.0
        %4365 = vmatprep.subr.mxu0 0.0
        %4366 = vmatpush1.msra.mxu0 0.0
        %4367 = vmatprep.subr.mxu0 0.0
        %4368 = vmatpush1.msra.mxu0 0.0
        %4369 = vmatprep.subr.mxu0 0.0
        %4370 = vmatpush1.msra.mxu0 0.0
        %4371 = vmatprep.subr.mxu0 0.0
        %4372 = vmatpush1.msra.mxu0 0.0
        %4373 = vmatprep.subr.mxu0 0.0
        %4374 = vmatpush1.msra.mxu0 0.0
        %4375 = vmatprep.subr.mxu0 0.0
        %4376 = vmatpush1.msra.mxu0 0.0
        %4377 = vmatprep.subr.mxu0 0.0
        %4378 = vmatpush1.msra.mxu0 0.0
        %4379 = vmatprep.subr.mxu0 0.0
        %4380 = vmatpush1.msra.mxu0 0.0
        %4381 = vmatprep.subr.mxu0 0.0
        %4382 = vmatpush1.msra.mxu0 0.0
        %4383 = vmatprep.subr.mxu0 0.0
        %4384 = vmatpush1.msra.mxu0 0.0
        %4385 = vmatprep.subr.mxu0 0.0
        %4386 = vmatpush1.msra.mxu0 0.0
        %4387 = vmatprep.subr.mxu0 0.0
        %4388 = vmatpush1.msra.mxu0 0.0
        %4389 = vmatprep.subr.mxu0 0.0
        %4390 = vmatpush1.msra.mxu0 0.0
        %4391 = vmatprep.subr.mxu0 0.0
        %4392 = vmatpush1.msra.mxu0 0.0
        %4393 = vmatprep.subr.mxu0 0.0
        %4394 = vmatpush1.msra.mxu0 0.0
        %4395 = vmatprep.subr.mxu0 0.0
        %4396 = vmatpush1.msra.mxu0 0.0
        %4397 = vmatprep.subr.mxu0 0.0
        %4398 = vmatpush1.msra.mxu0 0.0
        %4399 = vmatprep.subr.mxu0 0.0
        %4400 = vmatpush1.msra.mxu0 0.0
        %4401 = vmatprep.mubr.f32.mxu0 0.0
        %4402 = vmatmul.mubr.f32.gmra.mrb[0].mxu0 %v3867
        %v4403 = vpop.f32.mrb[0].mxu0
        %v4404 = vadd.f32 %v4330, %v4403
        %v4405 = vpop.f32.mrb[0].mxu0
        %v4406 = vadd.f32 %v4334, %v4405
        %4407 = vmatprep.mubr.f32.mxu0 0.0
        %4408 = vmatmul.mubr.f32.gmra.mrb[0].mxu0 %v3869
        %v4409 = vpop.f32.mrb[0].mxu0
        %v4410 = vadd.f32 %v4330, %v4409
        %v4411 = vpop.f32.mrb[0].mxu0
        %v4412 = vadd.f32 %v4334, %v4411
        %4413 = vdwg.mxu0
        %v4414 = vld [vmem:[%s18] sm:$0xff]
        %v4415 = vld [vmem:[%s18 + $0x8] sm:$0xff]
        %v4416 = vld [vmem:[%s18 + $0x10] sm:$0xff]
        %v4417 = vld [vmem:[%s18 + $0x18] sm:$0xff]
        %v4418 = vld [vmem:[%s18 + $0x20] sm:$0xff]
        %v4419 = vld [vmem:[%s18 + $0x28] sm:$0xff]
        %v4420 = vld [vmem:[%s18 + $0x30] sm:$0xff]
        %v4421 = vld [vmem:[%s18 + $0x38] sm:$0xff]
        %v4422 = vld [vmem:[%s19] sm:$0x3]
        %v4424 = vlaneseq
        %v4425 = vshrl.u32 %v4424, 7
        %v4426 = vsub.s32 0, %v4425
        %v4427 = vrot.slane %v4422, %v4426
        %v4428 = vlaneseq
        %v4429 = vshrl.u32 %v4428, 7
        %v4430 = vsub.s32 1, %v4429
        %v4431 = vrot.slane %v4422, %v4430
        %v4435 = vsel %vm3763, %v4215, 0
        %4437 = vmatprep.subr.mxu0 %v4415
        %4438 = vmatpush1.msra.mxu0 %v4414
        %4439 = vmatprep.subr.mxu0 %v4417
        %4440 = vmatpush1.msra.mxu0 %v4416
        %4441 = vmatprep.subr.mxu0 %v4419
        %4442 = vmatpush1.msra.mxu0 %v4418
        %4443 = vmatprep.subr.mxu0 %v4421
        %4444 = vmatpush1.msra.mxu0 %v4420
        %4445 = vmatprep.subr.mxu0 0.0
        %4446 = vmatpush1.msra.mxu0 0.0
        %4447 = vmatprep.subr.mxu0 0.0
        %4448 = vmatpush1.msra.mxu0 0.0
        %4449 = vmatprep.subr.mxu0 0.0
        %4450 = vmatpush1.msra.mxu0 0.0
        %4451 = vmatprep.subr.mxu0 0.0
        %4452 = vmatpush1.msra.mxu0 0.0
        %4453 = vmatprep.subr.mxu0 0.0
        %4454 = vmatpush1.msra.mxu0 0.0
        %4455 = vmatprep.subr.mxu0 0.0
        %4456 = vmatpush1.msra.mxu0 0.0
        %4457 = vmatprep.subr.mxu0 0.0
        %4458 = vmatpush1.msra.mxu0 0.0
        %4459 = vmatprep.subr.mxu0 0.0
        %4460 = vmatpush1.msra.mxu0 0.0
        %4461 = vmatprep.subr.mxu0 0.0
        %4462 = vmatpush1.msra.mxu0 0.0
        %4463 = vmatprep.subr.mxu0 0.0
        %4464 = vmatpush1.msra.mxu0 0.0
        %4465 = vmatprep.subr.mxu0 0.0
        %4466 = vmatpush1.msra.mxu0 0.0
        %4467 = vmatprep.subr.mxu0 0.0
        %4468 = vmatpush1.msra.mxu0 0.0
        %4469 = vmatprep.subr.mxu0 0.0
        %4470 = vmatpush1.msra.mxu0 0.0
        %4471 = vmatprep.subr.mxu0 0.0
        %4472 = vmatpush1.msra.mxu0 0.0
        %4473 = vmatprep.subr.mxu0 0.0
        %4474 = vmatpush1.msra.mxu0 0.0
        %4475 = vmatprep.subr.mxu0 0.0
        %4476 = vmatpush1.msra.mxu0 0.0
        %4477 = vmatprep.subr.mxu0 0.0
        %4478 = vmatpush1.msra.mxu0 0.0
        %4479 = vmatprep.subr.mxu0 0.0
        %4480 = vmatpush1.msra.mxu0 0.0
        %4481 = vmatprep.subr.mxu0 0.0
        %4482 = vmatpush1.msra.mxu0 0.0
        %4483 = vmatprep.subr.mxu0 0.0
        %4484 = vmatpush1.msra.mxu0 0.0
        %4485 = vmatprep.subr.mxu0 0.0
        %4486 = vmatpush1.msra.mxu0 0.0
        %4487 = vmatprep.subr.mxu0 0.0
        %4488 = vmatpush1.msra.mxu0 0.0
        %4489 = vmatprep.subr.mxu0 0.0
        %4490 = vmatpush1.msra.mxu0 0.0
        %4491 = vmatprep.subr.mxu0 0.0
        %4492 = vmatpush1.msra.mxu0 0.0
        %4493 = vmatprep.subr.mxu0 0.0
        %4494 = vmatpush1.msra.mxu0 0.0
        %4495 = vmatprep.subr.mxu0 0.0
        %4496 = vmatpush1.msra.mxu0 0.0
        %4497 = vmatprep.subr.mxu0 0.0
        %4498 = vmatpush1.msra.mxu0 0.0
        %4499 = vmatprep.subr.mxu0 0.0
        %4500 = vmatpush1.msra.mxu0 0.0
        %4501 = vmatprep.mubr.f32.mxu0 0.0
        %4502 = vmatmul.mubr.f32.gmra.mrb[0].mxu0 %v4435
        %v4503 = vpop.f32.mrb[0].mxu0
        %v4504 = vadd.f32 %v4427, %v4503
        %v4505 = vpop.f32.mrb[0].mxu0
        %v4506 = vadd.f32 %v4431, %v4505
        %4507 = vdwg.mxu0
        %4508 = vst [vmem:[%s869] sm:$0xff] %v4299
        %4509 = vst [vmem:[%s869 + $0x8] sm:$0xff] %v4301
        %4510 = vst [vmem:[%s869 + $0x10] sm:$0xff] %v4305
        %4511 = vst [vmem:[%s869 + $0x18] sm:$0xff] %v4307
        %4512 = vst [vmem:[%s869 + $0x20] sm:$0xff] %v4311
        %4513 = vst [vmem:[%s869 + $0x28] sm:$0xff] %v4313
        %4514 = vst [vmem:[%s869 + $0x30] sm:$0xff] %v4317
        %4515 = vst [vmem:[%s869 + $0x38] sm:$0xff] %v4319
        %4516 = vst [vmem:[%s876] sm:$0xff] %v4404
        %4517 = vst [vmem:[%s876 + $0x8] sm:$0xff] %v4406
        %4518 = vst [vmem:[%s876 + $0x10] sm:$0xff] %v4410
        %4519 = vst [vmem:[%s876 + $0x18] sm:$0xff] %v4412
        %4520 = vst [vmem:[%s883] sm:$0xff] %v4504
        %4521 = vst [vmem:[%s883 + $0x8] sm:$0xff] %v4506
        %v4522 = vld [vmem:[%s20] sm:$0x3]
        %v4524 = vlaneseq
        %v4525 = vshrl.u32 %v4524, 7
        %v4526 = vsub.s32 0, %v4525
        %v4527 = vrot.slane %v4522, %v4526
        %v4528 = vlaneseq
        %v4529 = vshrl.u32 %v4528, 7
        %v4530 = vsub.s32 1, %v4529
        %v4531 = vrot.slane %v4522, %v4530
        %v4534 = vmul.f32 %v4504, %v4527
        %v4535 = vmul.f32 %v4506, %v4531
        %v4536 = vadd.f32 %v4534, %v4535
        %4537 = vadd.xlane.f32.xlu0 %v4536
        %v4538 = vpop.xlane.xlu0 %4537
        %v4539 = vrot.slane %v4538, 4
        %v4540 = vmax.f32 %v4538, %v4539
        %v4541 = vrot.slane %v4540, 2
        %v4542 = vmax.f32 %v4540, %v4541
        %v4543 = vrot.slane %v4542, 1
        %v4544 = vmax.f32 %v4542, %v4543
        %v4545 = vsub.f32 %v4538, %v4544
        %v4546 = vmul.f32 %v4545, 1.442695
        %v4547 = vpow.pop %v4546
        %v4548 = vrot.slane %v4547, 4
        %v4549 = vadd.f32 %v4547, %v4548
        %v4550 = vrot.slane %v4549, 2
        %v4551 = vadd.f32 %v4549, %v4550
        %v4552 = vrot.slane %v4551, 1
        %v4553 = vadd.f32 %v4551, %v4552
        %v4554 = vrcp.pop %v4553
        %v4555 = vmul.f32 %v4547, %v4554
        %v4556 = vmul.f32 %v4504, %v4555
        %v4557 = vmul.f32 %v4506, %v4555
        %v4558 = vrot.slane %v4556, 4
        %v4559 = vadd.f32 %v4556, %v4558
        %v4560 = vrot.slane %v4559, 2
        %v4561 = vadd.f32 %v4559, %v4560
        %v4562 = vrot.slane %v4561, 1
        %v4563 = vadd.f32 %v4561, %v4562
        %v4564 = vrot.slane %v4557, 4
        %v4565 = vadd.f32 %v4557, %v4564
        %v4566 = vrot.slane %v4565, 2
        %v4567 = vadd.f32 %v4565, %v4566
        %v4568 = vrot.slane %v4567, 1
        %v4569 = vadd.f32 %v4567, %v4568
        %v4572 = vcombine.low %v4563, %v4569
        %v4574 = vunpack.c.l.s4 1966171168
        %v4575 = vunpack.c.0.s8 %v4574
        %v4576 = vlaneseq
        %v4577 = vshrl.u32 %v4576, 7
        %v4578 = vsub.s32 %v4575, %v4577
        %v4579 = vrot.slane %v4572, %v4578
        %v4581 = vunpack.c.l.s4 1966171168
        %v4582 = vunpack.c.0.s8 %v4581
        %v4583 = vlaneseq
        %v4584 = vshrl.u32 %v4583, 7
        %v4585 = vsub.s32 %v4582, %v4584
        %v4586 = vrot.slane %v4579, %v4585
        %v4588 = vlaneseq
        %vm4589 = vcmp.ge.s32.totalorder %v4588, 0
        %vm4590 = vcmp.lt.s32.totalorder %v4588, 256
        %vm4591 = vmand %vm4589, %vm4590
        %4592 = vst.msk [vmem:[%s890] sm:$0x3] %vm4591, %v4586
        %s4593 = sand.u32 %s505, 1
        %s4594 = scalar_lea.sflag [#allocation4], %s4593
        %s4595 = sand.u32 %s505, 1
        %s4596 = smul.addr %s4595, 64
        %s4597 = scalar_lea.vmem [#allocation19], %s4596
        %s4598 = sand.u32 %s51, 1
        %s4599 = scalar_lea.sflag [#allocation21], %s4598
        %s4600 = sand.u32 %s531, 1
        %s4601 = smul.addr %s4600, 32
        %s4602 = scalar_lea.vmem [#allocation20], %s4601
        %s4603 = sand.u32 %s51, 1
        %s4604 = scalar_lea.sflag [#allocation21], %s4603
        %s4605 = sand.u32 %s557, 1
        %s4606 = smul.addr %s4605, 16
        %s4607 = scalar_lea.vmem [#allocation22], %s4606
        %s4608 = sand.u32 %s583, 1
        %s4609 = scalar_lea.sflag [#allocation24], %s4608
        %s4610 = sand.u32 %s583, 1
        %s4611 = smul.addr %s4610, 2
        %s4612 = scalar_lea.vmem [#allocation23], %s4611
        // Predicated region
        $region145: #{tpu_custom_call.1} parent=103 // pred_check
          %p4613 = pneg %p515
        $region146: #{tpu_custom_call.1} parent=103 // pred_check_branch
          %4615 = sbr.rel (%p4613) target = $region148
        $region147: #{tpu_custom_call.1} parent=103 // pred_region
          %s4617 = ssub.s32 1024, 1024
          %4618 = vsyncadd %s4594, %s4617
          %s4619 = smul.addr %s51, 8
          %s4620 = smul.addr %s4619, 128
          %s4621 = scalar_lea.hbm %s21, %s4620
          %s4622 = sshll.u32 %s4597, 4
          %s4623 = int_to_ptr.vmem [resolvable:$true] %s4622
          %4628 = dma.vmem_to_hbm [thread:$0]  %s4623, 1024, %s4621, %s4594, 256, 256, 16
        $region148: #{tpu_custom_call.1} parent=103 // pred_fallthru
          _
        // Predicated region
        $region149: #{tpu_custom_call.1} parent=103 // pred_check
          %p4629 = pneg %p541
        $region150: #{tpu_custom_call.1} parent=103 // pred_check_branch
          %4631 = sbr.rel (%p4629) target = $region152
        $region151: #{tpu_custom_call.1} parent=103 // pred_region
          %s4633 = ssub.s32 512, 512
          %4634 = vsyncadd %s4599, %s4633
          %s4635 = smul.addr %s51, 4
          %s4636 = smul.addr %s4635, 128
          %s4637 = scalar_lea.hbm %s22, %s4636
          %s4638 = sshll.u32 %s4602, 4
          %s4639 = int_to_ptr.vmem [resolvable:$true] %s4638
          %4644 = dma.vmem_to_hbm [thread:$0]  %s4639, 512, %s4637, %s4599, 256, 256, 16
        $region152: #{tpu_custom_call.1} parent=103 // pred_fallthru
          _
        // Predicated region
        $region153: #{tpu_custom_call.1} parent=103 // pred_check
          %p4645 = pneg %p567
        $region154: #{tpu_custom_call.1} parent=103 // pred_check_branch
          %4647 = sbr.rel (%p4645) target = $region156
        $region155: #{tpu_custom_call.1} parent=103 // pred_region
          %s4649 = ssub.s32 256, 256
          %4650 = vsyncadd %s4604, %s4649
          %s4651 = smul.addr %s51, 2
          %s4652 = smul.addr %s4651, 128
          %s4653 = scalar_lea.hbm %s23, %s4652
          %s4655 = sshll.u32 %s4607, 4
          %s4656 = int_to_ptr.vmem [resolvable:$true] %s4655
          %4658 = dma.vmem_to_hbm [thread:$0]  %s4656, 256, %s4653, %s4604
        $region156: #{tpu_custom_call.1} parent=103 // pred_fallthru
          _
        // Predicated region
        $region157: #{tpu_custom_call.1} parent=103 // pred_check
          %p4659 = pneg %p593
        $region158: #{tpu_custom_call.1} parent=103 // pred_check_branch
          %4661 = sbr.rel (%p4659) target = $region160
        $region159: #{tpu_custom_call.1} parent=103 // pred_region
          %s4663 = ssub.s32 32, 32
          %4664 = vsyncadd %s4609, %s4663
          %s4665 = smul.addr %s51, 2
          %s4666 = smul.addr %s4665, 16
          %s4667 = scalar_lea.hbm %s24, %s4666
          %s4669 = sshll.u32 %s4612, 4
          %s4670 = int_to_ptr.vmem [resolvable:$true] %s4669
          %4672 = dma.vmem_to_hbm [thread:$0]  %s4670, 32, %s4667, %s4609
        $region160: #{tpu_custom_call.1} parent=103 // pred_fallthru
          _
      $region104: #{tpu_custom_call.1} parent=5 // pred_fallthru
        _
      %p4673 = scmp.le.s32.totalorder 2, %s46
      // Predicated region
      $region161: #{tpu_custom_call.1} parent=5 // pred_check
        %p4674 = pneg %p4673
      $region162: #{tpu_custom_call.1} parent=5 // pred_check_branch
        %4676 = sbr.rel (%p4674) target = $region164
      $region163: #{tpu_custom_call.1} parent=5 // pred_region
        %s4677 = ssub.s32 %s46, 2
        // Predicated region
        $region165: #{tpu_custom_call.1} parent=163 // pred_check
          %p4678 = pneg %p521
        $region166: #{tpu_custom_call.1} parent=163 // pred_check_branch
          %4680 = sbr.rel (%p4678) target = $region168
        $region167: #{tpu_custom_call.1} parent=163 // pred_region
          %s4681 = sand.u32 %s506, 1
          %s4682 = scalar_lea.sflag [#allocation4], %s4681
          %s4683 = sand.u32 %s506, 1
          %s4684 = smul.addr %s4683, 64
          %s4685 = scalar_lea.vmem [#allocation19], %s4684
          %4686 = dma.done %s4682, 1024
        $region168: #{tpu_custom_call.1} parent=163 // pred_fallthru
          _
        // Predicated region
        $region169: #{tpu_custom_call.1} parent=163 // pred_check
          %p4687 = pneg %p547
        $region170: #{tpu_custom_call.1} parent=163 // pred_check_branch
          %4689 = sbr.rel (%p4687) target = $region172
        $region171: #{tpu_custom_call.1} parent=163 // pred_region
          %s4690 = sand.u32 %s52, 1
          %s4691 = scalar_lea.sflag [#allocation21], %s4690
          %s4692 = sand.u32 %s532, 1
          %s4693 = smul.addr %s4692, 32
          %s4694 = scalar_lea.vmem [#allocation20], %s4693
          %4695 = dma.done %s4691, 512
        $region172: #{tpu_custom_call.1} parent=163 // pred_fallthru
          _
        // Predicated region
        $region173: #{tpu_custom_call.1} parent=163 // pred_check
          %p4696 = pneg %p573
        $region174: #{tpu_custom_call.1} parent=163 // pred_check_branch
          %4698 = sbr.rel (%p4696) target = $region176
        $region175: #{tpu_custom_call.1} parent=163 // pred_region
          %s4699 = sand.u32 %s52, 1
          %s4700 = scalar_lea.sflag [#allocation21], %s4699
          %s4701 = sand.u32 %s558, 1
          %s4702 = smul.addr %s4701, 16
          %s4703 = scalar_lea.vmem [#allocation22], %s4702
          %4704 = dma.done %s4700, 256
        $region176: #{tpu_custom_call.1} parent=163 // pred_fallthru
          _
        // Predicated region
        $region177: #{tpu_custom_call.1} parent=163 // pred_check
          %p4705 = pneg %p599
        $region178: #{tpu_custom_call.1} parent=163 // pred_check_branch
          %4707 = sbr.rel (%p4705) target = $region180
        $region179: #{tpu_custom_call.1} parent=163 // pred_region
          %s4708 = sand.u32 %s584, 1
          %s4709 = scalar_lea.sflag [#allocation24], %s4708
          %s4710 = sand.u32 %s584, 1
          %s4711 = smul.addr %s4710, 2
          %s4712 = scalar_lea.vmem [#allocation23], %s4711
          %4713 = dma.done %s4709, 32
        $region180: #{tpu_custom_call.1} parent=163 // pred_fallthru
          _
      $region164: #{tpu_custom_call.1} parent=5 // pred_fallthru
        _
    $region6: #{tpu_custom_call.1} parent=1 // loop_footer
      %s50 = sadd.s32 1, %s46
    $region7: #{tpu_custom_call.1} parent=1 // loop_footer_branch
      %45 = sbr.rel target = $region3
    $region8: #{tpu_custom_call.1} parent=1 // loop_exit
      _
    %4714 = vsyncpa [#allocation3], 1
    %s4715 = scalar_lea.sflag [#allocation3], 1
    %4716 = vsyncpa %s4715, 1
    %4717 = vsyncpa [#allocation6], 1
    %4718 = vsyncpa [#allocation9], 1
    %4719 = vsyncpa [#allocation12], 1
    %4720 = vsyncpa [#allocation15], 1
    %4721 = vsyncpa [#allocation18], 1
    %4722 = vsyncpa [#allocation4], 1
    %s4723 = scalar_lea.sflag [#allocation4], 1
    %4724 = vsyncpa %s4723, 1
    %4725 = vsyncpa [#allocation21], 1
    %s4726 = scalar_lea.sflag [#allocation21], 1
    %4727 = vsyncpa %s4726, 1
    %4728 = vsyncpa [#allocation24], 1
    %s4729 = scalar_lea.sflag [#allocation24], 1
    %4730 = vsyncpa %s4729, 1

</llo_original>
